<compile_context>
chip_gen: v7x
topology: tpu7x:2x2x1
jax: 0.10.0
libtpu: 0.0.40
codegen_flags: <defaults>
</compile_context>

<pallas_src>
import functools

import jax
import jax.numpy as jnp
from jax.experimental import pallas as pl
from jax.experimental.pallas import tpu as pltpu

# ---------------- problem sizes (small, consistent with the module) -------------
BATCH = 2
STATE_DIM = 4        # e.g. [x, y, yaw, v]
REF_DIM = 4          # reference signal dim
CONTROL_DIM = 2      # e.g. [steer, accel]
HIDDEN = 32
HORIZON = 8
DT = 0.1
DTYPE = jnp.float32
_LANES = 128         # lane width of the packed parameter slab


# ---------------------------------------------------------------------------
# Parameter initialization and one-time packing / algebraic prep
# ---------------------------------------------------------------------------
def init_params(key):
    """Deterministic synthetic weights (biases stored as [1, dim] for lane layout)."""
    ks = jax.random.split(key, 5)
    feat_dim = STATE_DIM + REF_DIM
    dyn_in = STATE_DIM + CONTROL_DIM

    def w(k, shape, scale):
        return (scale * jax.random.normal(k, shape)).astype(DTYPE)

    return {
        # controller
        "w1": w(ks[0], (feat_dim, HIDDEN), 0.3),
        "b1": jnp.zeros((1, HIDDEN), DTYPE),
        "w2": w(ks[1], (HIDDEN, HIDDEN), 0.3),
        "b2": jnp.zeros((1, HIDDEN), DTYPE),
        "w3": w(ks[2], (HIDDEN, CONTROL_DIM), 0.3),
        "b3": jnp.zeros((1, CONTROL_DIM), DTYPE),
        # dynamics
        "wd1": w(ks[3], (dyn_in, HIDDEN), 0.3),
        "bd1": jnp.zeros((1, HIDDEN), DTYPE),
        "wd2": w(ks[4], (HIDDEN, STATE_DIM), 0.3),
        "bd2": jnp.zeros((1, STATE_DIM), DTYPE),
    }


def pack_params(params, dt):
    """One-time prep: concat-splitting, state-matmul fusion, dt folding, and packing
    of all weights/biases into a single (rows, 128) f32 slab (each tensor starts on an
    8-row boundary, lanes 0:cols).  Returns (slab, offsets) with offsets = {name: (row, r, c)}.
    """
    S, H, R = STATE_DIM, HIDDEN, REF_DIM
    w1 = jnp.asarray(params["w1"], DTYPE)
    wd1 = jnp.asarray(params["wd1"], DTYPE)

    # Fused weight for the single per-step matmul that consumes `state`:
    #   lanes [0:H]  -> controller layer-1 state part   (w1[:S])
    #   lanes [H:2H] -> dynamics   layer-1 state part   (wd1[:S])
    w_state_fused = jnp.concatenate([w1[:S], wd1[:S]], axis=1)            # (S, 2H)
    # Reference weight zero-padded to 2H lanes so the loop-invariant constant
    # [ref@w1[S:]+b1 | bd1] is produced by one matmul + one broadcast add (no concat).
    w1r_pad = jnp.zeros((R, 2 * H), DTYPE).at[:, :H].set(w1[S:])          # (R, 2H)
    b1_bd1 = jnp.concatenate([jnp.asarray(params["b1"], DTYPE),
                              jnp.asarray(params["bd1"], DTYPE)], axis=1)  # (1, 2H)

    entries = {
        "w_sf":  w_state_fused,                              # (S, 2H)
        "w1r":   w1r_pad,                                    # (R, 2H)
        "b1bd1": b1_bd1,                                     # (1, 2H)
        "w2":    jnp.asarray(params["w2"], DTYPE),           # (H, H)
        "b2":    jnp.asarray(params["b2"], DTYPE),           # (1, H)
        "w3":    jnp.asarray(params["w3"], DTYPE),           # (H, C)
        "b3":    jnp.asarray(params["b3"], DTYPE),           # (1, C)
        "wd1c":  wd1[S:],                                    # (C, H)
        "wd2dt": jnp.asarray(params["wd2"], DTYPE) * dt,     # (H, S)   dt folded
        "bd2dt": jnp.asarray(params["bd2"], DTYPE) * dt,     # (1, S)   dt folded
    }

    offsets = {}
    blocks = []
    row_off = 0
    for name, arr in entries.items():
        r, c = arr.shape
        rp = -(-r // 8) * 8                               # pad rows to multiple of 8
        blk = jnp.zeros((rp, _LANES), DTYPE).at[:r, :c].set(arr)
        offsets[name] = (row_off, r, c)
        blocks.append(blk)
        row_off += rp
    slab = jnp.concatenate(blocks, axis=0)                # (total_rows, 128) ~ 76 KiB
    return slab, offsets


# ---------------------------------------------------------------------------
# Pallas kernel: full rollout in one grid-less call
# ---------------------------------------------------------------------------
def _rollout_kernel(init_ref, refsig_ref, slab_ref,
                    states_ref,    # (B, (horizon+1)*S)  lane-packed
                    controls_ref,  # (B, horizon*C)      lane-packed
                    *, horizon, offsets, state_dim, hidden, control_dim):
    S, H, C = state_dim, hidden, control_dim
    init = init_ref[...]        # (B, S)
    refsig = refsig_ref[...]    # (B, R)
    B = init.shape[0]

    def load(name):
        off, r, c = offsets[name]
        return slab_ref[off:off + r, :c]

    # ---- one-time weight/bias loads (off the recurrence critical path) ----------
    w_sf = load("w_sf")        # (S, 2H)
    w1r = load("w1r")          # (R, 2H)   zeros in lanes [H:2H]
    b1bd1 = load("b1bd1")      # (1, 2H)
    w2 = load("w2")            # (H, H)
    w3 = load("w3")            # (H, C)
    wd1c = load("wd1c")        # (C, H)
    wd2dt = load("wd2dt")      # (H, S)    dt already folded in
    # pre-broadcast biases once (avoid per-iteration broadcast re-materialization)
    b2 = jnp.broadcast_to(load("b2"), (B, H))
    b3 = jnp.broadcast_to(load("b3"), (B, C))
    bd2dt = jnp.broadcast_to(load("bd2dt"), (B, S))

    # ---- loop-invariant additive constant for the fused state matmul ------------
    #   lanes [0:H]  = reference @ w1[S:] + b1   (controller layer-1 reference part)
    #   lanes [H:2H] = bd1                       (dynamics layer-1 bias)
    state_const = (
        jnp.dot(refsig, w1r, preferred_element_type=jnp.float32) + b1bd1
    )                                                               # (B, 2H)

    # states[:, 0, :] = initial_state (lane-packed slot 0)
    states_ref[:, 0:S] = init

    state = init
    # Fully unrolled: horizon is a static compile-time constant (8); all store
    # indices are static, so stores hide under the MXU/EUP latency of later steps.
    for t in range(horizon):
        # single matmul feeding BOTH the controller and the dynamics first layer
        z = jnp.dot(state, w_sf, preferred_element_type=jnp.float32) + state_const
        # controller: tanh MLP (concat with reference eliminated via state_const)
        h1 = jnp.tanh(z[:, :H])
        h2 = jnp.tanh(jnp.dot(h1, w2, preferred_element_type=jnp.float32) + b2)
        u = jnp.tanh(jnp.dot(h2, w3, preferred_element_type=jnp.float32) + b3)
        controls_ref[:, t * C:(t + 1) * C] = u

        # dynamics: Euler step (dt folded into wd2dt / bd2dt); state part of the
        # first layer (z[:, H:]) was already produced by the fused matmul above.
        h = jnp.tanh(z[:, H:] + jnp.dot(u, wd1c, preferred_element_type=jnp.float32))
        state = state + jnp.dot(h, wd2dt, preferred_element_type=jnp.float32) + bd2dt
        states_ref[:, (t + 1) * S:(t + 2) * S] = state


# ---------------------------------------------------------------------------
# Wrapper
# ---------------------------------------------------------------------------
def integrated_network_forward(initial_state, reference, slab, offsets,
                               *, horizon=HORIZON):
    """Returns (states [B, horizon+1, S], controls [B, horizon, C])."""
    B, S = initial_state.shape
    H = offsets["w2"][2]
    C = offsets["w3"][2]

    kernel = functools.partial(
        _rollout_kernel, horizon=horizon, offsets=offsets,
        state_dim=S, hidden=H, control_dim=C)

    vmem = pl.BlockSpec(memory_space=pltpu.MemorySpace.VMEM)

    states_flat, controls_flat = pl.pallas_call(
        kernel,
        out_shape=(
            jax.ShapeDtypeStruct((B, (horizon + 1) * S), DTYPE),
            jax.ShapeDtypeStruct((B, horizon * C), DTYPE),
        ),
        in_specs=[vmem, vmem, vmem],
        out_specs=(vmem, vmem),
    )(initial_state, reference, slab)

    # lane-packed -> [B, T, F]; contiguous reshape (no transpose needed)
    states = states_flat.reshape(B, horizon + 1, S)
    controls = controls_flat.reshape(B, horizon, C)
    return states, controls


# ---------------------------------------------------------------------------
# Pure-JAX reference (mirrors the PyTorch forward) for validation
# ---------------------------------------------------------------------------
def _reference_forward(initial_state, reference, params, *, horizon=HORIZON, dt=DT):
    def controller(feat):
        h1 = jnp.tanh(feat @ params["w1"] + params["b1"])
        h2 = jnp.tanh(h1 @ params["w2"] + params["b2"])
        return jnp.tanh(h2 @ params["w3"] + params["b3"])

    def dynamics(state, u):
        z = jnp.concatenate([state, u], axis=-1)
        h = jnp.tanh(z @ params["wd1"] + params["bd1"])
        return state + dt * (h @ params["wd2"] + params["bd2"])

    states = [initial_state]
    controls = []
    cur = initial_state
    for _ in range(horizon):
        u = controller(jnp.concatenate([cur, reference], axis=-1))
        controls.append(u)
        cur = dynamics(cur, u)
        states.append(cur)
    return jnp.stack(states, axis=1), jnp.stack(controls, axis=1)


if __name__ == "__main__":
    key = jax.random.PRNGKey(0)
    k_p, k_s, k_r = jax.random.split(key, 3)

    params = init_params(k_p)
    slab, offsets = pack_params(params, DT)   # one-time prep (not per call)

    initial_state = jax.random.normal(k_s, (BATCH, STATE_DIM), dtype=DTYPE)
    reference = jax.random.normal(k_r, (BATCH, REF_DIM), dtype=DTYPE)

    fwd = jax.jit(lambda s, r, w: integrated_network_forward(s, r, w, offsets))
    states, controls = fwd(initial_state, reference, slab)
    jax.block_until_ready((states, controls))

    # sanity-check against pure-JAX reference
    ref_states, ref_controls = _reference_forward(initial_state, reference, params)
    assert states.shape == (BATCH, HORIZON + 1, STATE_DIM)
    assert controls.shape == (BATCH, HORIZON, CONTROL_DIM)
    assert jnp.allclose(states, ref_states, atol=1e-4, rtol=1e-4)
    assert jnp.allclose(controls, ref_controls, atol=1e-4, rtol=1e-4)

    print("KERNEL_OK")
</pallas_src>

<mosaic_0001>
module attributes {stable_mosaic.version = 11 : i64} {
  func.func @_rollout_kernel(%arg0: memref<2x4xf32, #tpu.memory_space<vmem>>, %arg1: memref<2x4xf32, #tpu.memory_space<vmem>>, %arg2: memref<152x128xf32, #tpu.memory_space<vmem>>, %arg3: memref<2x36xf32, #tpu.memory_space<vmem>>, %arg4: memref<2x16xf32, #tpu.memory_space<vmem>>) attributes {dimension_semantics = [], scalar_prefetch = 0 : i64, scratch_operands = 0 : i64, tpu.core_type = #tpu.core_type<tc>} {
    %c0 = arith.constant 0 : index
    %c0_0 = arith.constant 0 : index
    %0 = vector.load %arg0[%c0, %c0_0] : memref<2x4xf32, #tpu.memory_space<vmem>>, vector<2x4xf32>
    %c0_1 = arith.constant 0 : index
    %c0_2 = arith.constant 0 : index
    %1 = vector.load %arg1[%c0_1, %c0_2] : memref<2x4xf32, #tpu.memory_space<vmem>>, vector<2x4xf32>
    %c0_3 = arith.constant 0 : index
    %c0_4 = arith.constant 0 : index
    %2 = vector.load %arg2[%c0_3, %c0_4] : memref<152x128xf32, #tpu.memory_space<vmem>>, vector<4x64xf32>
    %c8 = arith.constant 8 : index
    %c0_5 = arith.constant 0 : index
    %3 = vector.load %arg2[%c8, %c0_5] : memref<152x128xf32, #tpu.memory_space<vmem>>, vector<4x64xf32>
    %c16 = arith.constant 16 : index
    %c0_6 = arith.constant 0 : index
    %4 = vector.load %arg2[%c16, %c0_6] : memref<152x128xf32, #tpu.memory_space<vmem>>, vector<1x64xf32>
    %c24 = arith.constant 24 : index
    %c0_7 = arith.constant 0 : index
    %5 = vector.load %arg2[%c24, %c0_7] : memref<152x128xf32, #tpu.memory_space<vmem>>, vector<32x32xf32>
    %c64 = arith.constant 64 : index
    %c0_8 = arith.constant 0 : index
    %6 = vector.load %arg2[%c64, %c0_8] : memref<152x128xf32, #tpu.memory_space<vmem>>, vector<32x2xf32>
    %c104 = arith.constant 104 : index
    %c0_9 = arith.constant 0 : index
    %7 = vector.load %arg2[%c104, %c0_9] : memref<152x128xf32, #tpu.memory_space<vmem>>, vector<2x32xf32>
    %c112 = arith.constant 112 : index
    %c0_10 = arith.constant 0 : index
    %8 = vector.load %arg2[%c112, %c0_10] : memref<152x128xf32, #tpu.memory_space<vmem>>, vector<32x4xf32>
    %c56 = arith.constant 56 : index
    %c0_11 = arith.constant 0 : index
    %9 = vector.load %arg2[%c56, %c0_11] : memref<152x128xf32, #tpu.memory_space<vmem>>, vector<1x32xf32>
    %10 = vector.shape_cast %9 : vector<1x32xf32> to vector<1x32xf32>
    %11 = vector.broadcast %10 : vector<1x32xf32> to vector<2x32xf32>
    %c96 = arith.constant 96 : index
    %c0_12 = arith.constant 0 : index
    %12 = vector.load %arg2[%c96, %c0_12] : memref<152x128xf32, #tpu.memory_space<vmem>>, vector<1x2xf32>
    %13 = vector.shape_cast %12 : vector<1x2xf32> to vector<1x2xf32>
    %14 = vector.broadcast %13 : vector<1x2xf32> to vector<2x2xf32>
    %c144 = arith.constant 144 : index
    %c0_13 = arith.constant 0 : index
    %15 = vector.load %arg2[%c144, %c0_13] : memref<152x128xf32, #tpu.memory_space<vmem>>, vector<1x4xf32>
    %16 = vector.shape_cast %15 : vector<1x4xf32> to vector<1x4xf32>
    %17 = vector.broadcast %16 : vector<1x4xf32> to vector<2x4xf32>
    %cst = arith.constant dense<0.000000e+00> : vector<2x64xf32>
    %18 = tpu.matmul %1, %3, %cst {dimension_numbers = #tpu.dot_dimension_numbers<[1], [0], [0], [1], [0, 0, 1, 1], [], []>} : vector<2x4xf32>, vector<4x64xf32>, vector<2x64xf32> -> vector<2x64xf32>
    %19 = vector.broadcast %4 : vector<1x64xf32> to vector<2x64xf32>
    %20 = arith.addf %18, %19 : vector<2x64xf32>
    %c0_14 = arith.constant 0 : index
    %c0_15 = arith.constant 0 : index
    %21 = vector.load %arg3[%c0_14, %c0_15] : memref<2x36xf32, #tpu.memory_space<vmem>>, vector<2x4xf32>
    tpu.vector_store %arg3[%c0_14, %c0_15], %0 {strides = array<i32>} : memref<2x36xf32, #tpu.memory_space<vmem>>, vector<2x4xf32>,
    %cst_16 = arith.constant dense<0.000000e+00> : vector<2x64xf32>
    %22 = tpu.matmul %0, %2, %cst_16 {dimension_numbers = #tpu.dot_dimension_numbers<[1], [0], [0], [1], [0, 0, 1, 1], [], []>} : vector<2x4xf32>, vector<4x64xf32>, vector<2x64xf32> -> vector<2x64xf32>
    %23 = arith.addf %22, %20 : vector<2x64xf32>
    %24 = vector.extract_strided_slice %23 {offsets = [0, 0], sizes = [2, 32], strides = [1, 1]} : vector<2x64xf32> to vector<2x32xf32>
    %25 = math.tanh %24 : vector<2x32xf32>
    %cst_17 = arith.constant dense<0.000000e+00> : vector<2x32xf32>
    %26 = tpu.matmul %25, %5, %cst_17 {dimension_numbers = #tpu.dot_dimension_numbers<[1], [0], [0], [1], [0, 0, 1, 1], [], []>} : vector<2x32xf32>, vector<32x32xf32>, vector<2x32xf32> -> vector<2x32xf32>
    %27 = arith.addf %26, %11 : vector<2x32xf32>
    %28 = math.tanh %27 : vector<2x32xf32>
    %cst_18 = arith.constant dense<0.000000e+00> : vector<2x2xf32>
    %29 = tpu.matmul %28, %6, %cst_18 {dimension_numbers = #tpu.dot_dimension_numbers<[1], [0], [0], [1], [0, 0, 1, 1], [], []>} : vector<2x32xf32>, vector<32x2xf32>, vector<2x2xf32> -> vector<2x2xf32>
    %30 = arith.addf %29, %14 : vector<2x2xf32>
    %31 = math.tanh %30 : vector<2x2xf32>
    %c0_19 = arith.constant 0 : index
    %c0_20 = arith.constant 0 : index
    %32 = vector.load %arg4[%c0_19, %c0_20] : memref<2x16xf32, #tpu.memory_space<vmem>>, vector<2x2xf32>
    tpu.vector_store %arg4[%c0_19, %c0_20], %31 {strides = array<i32>} : memref<2x16xf32, #tpu.memory_space<vmem>>, vector<2x2xf32>,
    %33 = vector.extract_strided_slice %23 {offsets = [0, 32], sizes = [2, 32], strides = [1, 1]} : vector<2x64xf32> to vector<2x32xf32>
    %cst_21 = arith.constant dense<0.000000e+00> : vector<2x32xf32>
    %34 = tpu.matmul %31, %7, %cst_21 {dimension_numbers = #tpu.dot_dimension_numbers<[1], [0], [0], [1], [0, 0, 1, 1], [], []>} : vector<2x2xf32>, vector<2x32xf32>, vector<2x32xf32> -> vector<2x32xf32>
    %35 = arith.addf %33, %34 : vector<2x32xf32>
    %36 = math.tanh %35 : vector<2x32xf32>
    %cst_22 = arith.constant dense<0.000000e+00> : vector<2x4xf32>
    %37 = tpu.matmul %36, %8, %cst_22 {dimension_numbers = #tpu.dot_dimension_numbers<[1], [0], [0], [1], [0, 0, 1, 1], [], []>} : vector<2x32xf32>, vector<32x4xf32>, vector<2x4xf32> -> vector<2x4xf32>
    %38 = arith.addf %0, %37 : vector<2x4xf32>
    %39 = arith.addf %38, %17 : vector<2x4xf32>
    %c0_23 = arith.constant 0 : index
    %c4 = arith.constant 4 : index
    %40 = vector.load %arg3[%c0_23, %c4] : memref<2x36xf32, #tpu.memory_space<vmem>>, vector<2x4xf32>
    tpu.vector_store %arg3[%c0_23, %c4], %39 {strides = array<i32>} : memref<2x36xf32, #tpu.memory_space<vmem>>, vector<2x4xf32>,
    %cst_24 = arith.constant dense<0.000000e+00> : vector<2x64xf32>
    %41 = tpu.matmul %39, %2, %cst_24 {dimension_numbers = #tpu.dot_dimension_numbers<[1], [0], [0], [1], [0, 0, 1, 1], [], []>} : vector<2x4xf32>, vector<4x64xf32>, vector<2x64xf32> -> vector<2x64xf32>
    %42 = arith.addf %41, %20 : vector<2x64xf32>
    %43 = vector.extract_strided_slice %42 {offsets = [0, 0], sizes = [2, 32], strides = [1, 1]} : vector<2x64xf32> to vector<2x32xf32>
    %44 = math.tanh %43 : vector<2x32xf32>
    %cst_25 = arith.constant dense<0.000000e+00> : vector<2x32xf32>
    %45 = tpu.matmul %44, %5, %cst_25 {dimension_numbers = #tpu.dot_dimension_numbers<[1], [0], [0], [1], [0, 0, 1, 1], [], []>} : vector<2x32xf32>, vector<32x32xf32>, vector<2x32xf32> -> vector<2x32xf32>
    %46 = arith.addf %45, %11 : vector<2x32xf32>
    %47 = math.tanh %46 : vector<2x32xf32>
    %cst_26 = arith.constant dense<0.000000e+00> : vector<2x2xf32>
    %48 = tpu.matmul %47, %6, %cst_26 {dimension_numbers = #tpu.dot_dimension_numbers<[1], [0], [0], [1], [0, 0, 1, 1], [], []>} : vector<2x32xf32>, vector<32x2xf32>, vector<2x2xf32> -> vector<2x2xf32>
    %49 = arith.addf %48, %14 : vector<2x2xf32>
    %50 = math.tanh %49 : vector<2x2xf32>
    %c0_27 = arith.constant 0 : index
    %c2 = arith.constant 2 : index
    %51 = vector.load %arg4[%c0_27, %c2] : memref<2x16xf32, #tpu.memory_space<vmem>>, vector<2x2xf32>
    tpu.vector_store %arg4[%c0_27, %c2], %50 {strides = array<i32>} : memref<2x16xf32, #tpu.memory_space<vmem>>, vector<2x2xf32>,
    %52 = vector.extract_strided_slice %42 {offsets = [0, 32], sizes = [2, 32], strides = [1, 1]} : vector<2x64xf32> to vector<2x32xf32>
    %cst_28 = arith.constant dense<0.000000e+00> : vector<2x32xf32>
    %53 = tpu.matmul %50, %7, %cst_28 {dimension_numbers = #tpu.dot_dimension_numbers<[1], [0], [0], [1], [0, 0, 1, 1], [], []>} : vector<2x2xf32>, vector<2x32xf32>, vector<2x32xf32> -> vector<2x32xf32>
    %54 = arith.addf %52, %53 : vector<2x32xf32>
    %55 = math.tanh %54 : vector<2x32xf32>
    %cst_29 = arith.constant dense<0.000000e+00> : vector<2x4xf32>
    %56 = tpu.matmul %55, %8, %cst_29 {dimension_numbers = #tpu.dot_dimension_numbers<[1], [0], [0], [1], [0, 0, 1, 1], [], []>} : vector<2x32xf32>, vector<32x4xf32>, vector<2x4xf32> -> vector<2x4xf32>
    %57 = arith.addf %39, %56 : vector<2x4xf32>
    %58 = arith.addf %57, %17 : vector<2x4xf32>
    %c0_30 = arith.constant 0 : index
    %c8_31 = arith.constant 8 : index
    %59 = vector.load %arg3[%c0_30, %c8_31] : memref<2x36xf32, #tpu.memory_space<vmem>>, vector<2x4xf32>
    tpu.vector_store %arg3[%c0_30, %c8_31], %58 {strides = array<i32>} : memref<2x36xf32, #tpu.memory_space<vmem>>, vector<2x4xf32>,
    %cst_32 = arith.constant dense<0.000000e+00> : vector<2x64xf32>
    %60 = tpu.matmul %58, %2, %cst_32 {dimension_numbers = #tpu.dot_dimension_numbers<[1], [0], [0], [1], [0, 0, 1, 1], [], []>} : vector<2x4xf32>, vector<4x64xf32>, vector<2x64xf32> -> vector<2x64xf32>
    %61 = arith.addf %60, %20 : vector<2x64xf32>
    %62 = vector.extract_strided_slice %61 {offsets = [0, 0], sizes = [2, 32], strides = [1, 1]} : vector<2x64xf32> to vector<2x32xf32>
    %63 = math.tanh %62 : vector<2x32xf32>
    %cst_33 = arith.constant dense<0.000000e+00> : vector<2x32xf32>
    %64 = tpu.matmul %63, %5, %cst_33 {dimension_numbers = #tpu.dot_dimension_numbers<[1], [0], [0], [1], [0, 0, 1, 1], [], []>} : vector<2x32xf32>, vector<32x32xf32>, vector<2x32xf32> -> vector<2x32xf32>
    %65 = arith.addf %64, %11 : vector<2x32xf32>
    %66 = math.tanh %65 : vector<2x32xf32>
    %cst_34 = arith.constant dense<0.000000e+00> : vector<2x2xf32>
    %67 = tpu.matmul %66, %6, %cst_34 {dimension_numbers = #tpu.dot_dimension_numbers<[1], [0], [0], [1], [0, 0, 1, 1], [], []>} : vector<2x32xf32>, vector<32x2xf32>, vector<2x2xf32> -> vector<2x2xf32>
    %68 = arith.addf %67, %14 : vector<2x2xf32>
    %69 = math.tanh %68 : vector<2x2xf32>
    %c0_35 = arith.constant 0 : index
    %c4_36 = arith.constant 4 : index
    %70 = vector.load %arg4[%c0_35, %c4_36] : memref<2x16xf32, #tpu.memory_space<vmem>>, vector<2x2xf32>
    tpu.vector_store %arg4[%c0_35, %c4_36], %69 {strides = array<i32>} : memref<2x16xf32, #tpu.memory_space<vmem>>, vector<2x2xf32>,
    %71 = vector.extract_strided_slice %61 {offsets = [0, 32], sizes = [2, 32], strides = [1, 1]} : vector<2x64xf32> to vector<2x32xf32>
    %cst_37 = arith.constant dense<0.000000e+00> : vector<2x32xf32>
    %72 = tpu.matmul %69, %7, %cst_37 {dimension_numbers = #tpu.dot_dimension_numbers<[1], [0], [0], [1], [0, 0, 1, 1], [], []>} : vector<2x2xf32>, vector<2x32xf32>, vector<2x32xf32> -> vector<2x32xf32>
    %73 = arith.addf %71, %72 : vector<2x32xf32>
    %74 = math.tanh %73 : vector<2x32xf32>
    %cst_38 = arith.constant dense<0.000000e+00> : vector<2x4xf32>
    %75 = tpu.matmul %74, %8, %cst_38 {dimension_numbers = #tpu.dot_dimension_numbers<[1], [0], [0], [1], [0, 0, 1, 1], [], []>} : vector<2x32xf32>, vector<32x4xf32>, vector<2x4xf32> -> vector<2x4xf32>
    %76 = arith.addf %58, %75 : vector<2x4xf32>
    %77 = arith.addf %76, %17 : vector<2x4xf32>
    %c0_39 = arith.constant 0 : index
    %c12 = arith.constant 12 : index
    %78 = vector.load %arg3[%c0_39, %c12] : memref<2x36xf32, #tpu.memory_space<vmem>>, vector<2x4xf32>
    tpu.vector_store %arg3[%c0_39, %c12], %77 {strides = array<i32>} : memref<2x36xf32, #tpu.memory_space<vmem>>, vector<2x4xf32>,
    %cst_40 = arith.constant dense<0.000000e+00> : vector<2x64xf32>
    %79 = tpu.matmul %77, %2, %cst_40 {dimension_numbers = #tpu.dot_dimension_numbers<[1], [0], [0], [1], [0, 0, 1, 1], [], []>} : vector<2x4xf32>, vector<4x64xf32>, vector<2x64xf32> -> vector<2x64xf32>
    %80 = arith.addf %79, %20 : vector<2x64xf32>
    %81 = vector.extract_strided_slice %80 {offsets = [0, 0], sizes = [2, 32], strides = [1, 1]} : vector<2x64xf32> to vector<2x32xf32>
    %82 = math.tanh %81 : vector<2x32xf32>
    %cst_41 = arith.constant dense<0.000000e+00> : vector<2x32xf32>
    %83 = tpu.matmul %82, %5, %cst_41 {dimension_numbers = #tpu.dot_dimension_numbers<[1], [0], [0], [1], [0, 0, 1, 1], [], []>} : vector<2x32xf32>, vector<32x32xf32>, vector<2x32xf32> -> vector<2x32xf32>
    %84 = arith.addf %83, %11 : vector<2x32xf32>
    %85 = math.tanh %84 : vector<2x32xf32>
    %cst_42 = arith.constant dense<0.000000e+00> : vector<2x2xf32>
    %86 = tpu.matmul %85, %6, %cst_42 {dimension_numbers = #tpu.dot_dimension_numbers<[1], [0], [0], [1], [0, 0, 1, 1], [], []>} : vector<2x32xf32>, vector<32x2xf32>, vector<2x2xf32> -> vector<2x2xf32>
    %87 = arith.addf %86, %14 : vector<2x2xf32>
    %88 = math.tanh %87 : vector<2x2xf32>
    %c0_43 = arith.constant 0 : index
    %c6 = arith.constant 6 : index
    %89 = vector.load %arg4[%c0_43, %c6] : memref<2x16xf32, #tpu.memory_space<vmem>>, vector<2x2xf32>
    tpu.vector_store %arg4[%c0_43, %c6], %88 {strides = array<i32>} : memref<2x16xf32, #tpu.memory_space<vmem>>, vector<2x2xf32>,
    %90 = vector.extract_strided_slice %80 {offsets = [0, 32], sizes = [2, 32], strides = [1, 1]} : vector<2x64xf32> to vector<2x32xf32>
    %cst_44 = arith.constant dense<0.000000e+00> : vector<2x32xf32>
    %91 = tpu.matmul %88, %7, %cst_44 {dimension_numbers = #tpu.dot_dimension_numbers<[1], [0], [0], [1], [0, 0, 1, 1], [], []>} : vector<2x2xf32>, vector<2x32xf32>, vector<2x32xf32> -> vector<2x32xf32>
    %92 = arith.addf %90, %91 : vector<2x32xf32>
    %93 = math.tanh %92 : vector<2x32xf32>
    %cst_45 = arith.constant dense<0.000000e+00> : vector<2x4xf32>
    %94 = tpu.matmul %93, %8, %cst_45 {dimension_numbers = #tpu.dot_dimension_numbers<[1], [0], [0], [1], [0, 0, 1, 1], [], []>} : vector<2x32xf32>, vector<32x4xf32>, vector<2x4xf32> -> vector<2x4xf32>
    %95 = arith.addf %77, %94 : vector<2x4xf32>
    %96 = arith.addf %95, %17 : vector<2x4xf32>
    %c0_46 = arith.constant 0 : index
    %c16_47 = arith.constant 16 : index
    %97 = vector.load %arg3[%c0_46, %c16_47] : memref<2x36xf32, #tpu.memory_space<vmem>>, vector<2x4xf32>
    tpu.vector_store %arg3[%c0_46, %c16_47], %96 {strides = array<i32>} : memref<2x36xf32, #tpu.memory_space<vmem>>, vector<2x4xf32>,
    %cst_48 = arith.constant dense<0.000000e+00> : vector<2x64xf32>
    %98 = tpu.matmul %96, %2, %cst_48 {dimension_numbers = #tpu.dot_dimension_numbers<[1], [0], [0], [1], [0, 0, 1, 1], [], []>} : vector<2x4xf32>, vector<4x64xf32>, vector<2x64xf32> -> vector<2x64xf32>
    %99 = arith.addf %98, %20 : vector<2x64xf32>
    %100 = vector.extract_strided_slice %99 {offsets = [0, 0], sizes = [2, 32], strides = [1, 1]} : vector<2x64xf32> to vector<2x32xf32>
    %101 = math.tanh %100 : vector<2x32xf32>
    %cst_49 = arith.constant dense<0.000000e+00> : vector<2x32xf32>
    %102 = tpu.matmul %101, %5, %cst_49 {dimension_numbers = #tpu.dot_dimension_numbers<[1], [0], [0], [1], [0, 0, 1, 1], [], []>} : vector<2x32xf32>, vector<32x32xf32>, vector<2x32xf32> -> vector<2x32xf32>
    %103 = arith.addf %102, %11 : vector<2x32xf32>
    %104 = math.tanh %103 : vector<2x32xf32>
    %cst_50 = arith.constant dense<0.000000e+00> : vector<2x2xf32>
    %105 = tpu.matmul %104, %6, %cst_50 {dimension_numbers = #tpu.dot_dimension_numbers<[1], [0], [0], [1], [0, 0, 1, 1], [], []>} : vector<2x32xf32>, vector<32x2xf32>, vector<2x2xf32> -> vector<2x2xf32>
    %106 = arith.addf %105, %14 : vector<2x2xf32>
    %107 = math.tanh %106 : vector<2x2xf32>
    %c0_51 = arith.constant 0 : index
    %c8_52 = arith.constant 8 : index
    %108 = vector.load %arg4[%c0_51, %c8_52] : memref<2x16xf32, #tpu.memory_space<vmem>>, vector<2x2xf32>
    tpu.vector_store %arg4[%c0_51, %c8_52], %107 {strides = array<i32>} : memref<2x16xf32, #tpu.memory_space<vmem>>, vector<2x2xf32>,
    %109 = vector.extract_strided_slice %99 {offsets = [0, 32], sizes = [2, 32], strides = [1, 1]} : vector<2x64xf32> to vector<2x32xf32>
    %cst_53 = arith.constant dense<0.000000e+00> : vector<2x32xf32>
    %110 = tpu.matmul %107, %7, %cst_53 {dimension_numbers = #tpu.dot_dimension_numbers<[1], [0], [0], [1], [0, 0, 1, 1], [], []>} : vector<2x2xf32>, vector<2x32xf32>, vector<2x32xf32> -> vector<2x32xf32>
    %111 = arith.addf %109, %110 : vector<2x32xf32>
    %112 = math.tanh %111 : vector<2x32xf32>
    %cst_54 = arith.constant dense<0.000000e+00> : vector<2x4xf32>
    %113 = tpu.matmul %112, %8, %cst_54 {dimension_numbers = #tpu.dot_dimension_numbers<[1], [0], [0], [1], [0, 0, 1, 1], [], []>} : vector<2x32xf32>, vector<32x4xf32>, vector<2x4xf32> -> vector<2x4xf32>
    %114 = arith.addf %96, %113 : vector<2x4xf32>
    %115 = arith.addf %114, %17 : vector<2x4xf32>
    %c0_55 = arith.constant 0 : index
    %c20 = arith.constant 20 : index
    %116 = vector.load %arg3[%c0_55, %c20] : memref<2x36xf32, #tpu.memory_space<vmem>>, vector<2x4xf32>
    tpu.vector_store %arg3[%c0_55, %c20], %115 {strides = array<i32>} : memref<2x36xf32, #tpu.memory_space<vmem>>, vector<2x4xf32>,
    %cst_56 = arith.constant dense<0.000000e+00> : vector<2x64xf32>
    %117 = tpu.matmul %115, %2, %cst_56 {dimension_numbers = #tpu.dot_dimension_numbers<[1], [0], [0], [1], [0, 0, 1, 1], [], []>} : vector<2x4xf32>, vector<4x64xf32>, vector<2x64xf32> -> vector<2x64xf32>
    %118 = arith.addf %117, %20 : vector<2x64xf32>
    %119 = vector.extract_strided_slice %118 {offsets = [0, 0], sizes = [2, 32], strides = [1, 1]} : vector<2x64xf32> to vector<2x32xf32>
    %120 = math.tanh %119 : vector<2x32xf32>
    %cst_57 = arith.constant dense<0.000000e+00> : vector<2x32xf32>
    %121 = tpu.matmul %120, %5, %cst_57 {dimension_numbers = #tpu.dot_dimension_numbers<[1], [0], [0], [1], [0, 0, 1, 1], [], []>} : vector<2x32xf32>, vector<32x32xf32>, vector<2x32xf32> -> vector<2x32xf32>
    %122 = arith.addf %121, %11 : vector<2x32xf32>
    %123 = math.tanh %122 : vector<2x32xf32>
    %cst_58 = arith.constant dense<0.000000e+00> : vector<2x2xf32>
    %124 = tpu.matmul %123, %6, %cst_58 {dimension_numbers = #tpu.dot_dimension_numbers<[1], [0], [0], [1], [0, 0, 1, 1], [], []>} : vector<2x32xf32>, vector<32x2xf32>, vector<2x2xf32> -> vector<2x2xf32>
    %125 = arith.addf %124, %14 : vector<2x2xf32>
    %126 = math.tanh %125 : vector<2x2xf32>
    %c0_59 = arith.constant 0 : index
    %c10 = arith.constant 10 : index
    %127 = vector.load %arg4[%c0_59, %c10] : memref<2x16xf32, #tpu.memory_space<vmem>>, vector<2x2xf32>
    tpu.vector_store %arg4[%c0_59, %c10], %126 {strides = array<i32>} : memref<2x16xf32, #tpu.memory_space<vmem>>, vector<2x2xf32>,
    %128 = vector.extract_strided_slice %118 {offsets = [0, 32], sizes = [2, 32], strides = [1, 1]} : vector<2x64xf32> to vector<2x32xf32>
    %cst_60 = arith.constant dense<0.000000e+00> : vector<2x32xf32>
    %129 = tpu.matmul %126, %7, %cst_60 {dimension_numbers = #tpu.dot_dimension_numbers<[1], [0], [0], [1], [0, 0, 1, 1], [], []>} : vector<2x2xf32>, vector<2x32xf32>, vector<2x32xf32> -> vector<2x32xf32>
    %130 = arith.addf %128, %129 : vector<2x32xf32>
    %131 = math.tanh %130 : vector<2x32xf32>
    %cst_61 = arith.constant dense<0.000000e+00> : vector<2x4xf32>
    %132 = tpu.matmul %131, %8, %cst_61 {dimension_numbers = #tpu.dot_dimension_numbers<[1], [0], [0], [1], [0, 0, 1, 1], [], []>} : vector<2x32xf32>, vector<32x4xf32>, vector<2x4xf32> -> vector<2x4xf32>
    %133 = arith.addf %115, %132 : vector<2x4xf32>
    %134 = arith.addf %133, %17 : vector<2x4xf32>
    %c0_62 = arith.constant 0 : index
    %c24_63 = arith.constant 24 : index
    %135 = vector.load %arg3[%c0_62, %c24_63] : memref<2x36xf32, #tpu.memory_space<vmem>>, vector<2x4xf32>
    tpu.vector_store %arg3[%c0_62, %c24_63], %134 {strides = array<i32>} : memref<2x36xf32, #tpu.memory_space<vmem>>, vector<2x4xf32>,
    %cst_64 = arith.constant dense<0.000000e+00> : vector<2x64xf32>
    %136 = tpu.matmul %134, %2, %cst_64 {dimension_numbers = #tpu.dot_dimension_numbers<[1], [0], [0], [1], [0, 0, 1, 1], [], []>} : vector<2x4xf32>, vector<4x64xf32>, vector<2x64xf32> -> vector<2x64xf32>
    %137 = arith.addf %136, %20 : vector<2x64xf32>
    %138 = vector.extract_strided_slice %137 {offsets = [0, 0], sizes = [2, 32], strides = [1, 1]} : vector<2x64xf32> to vector<2x32xf32>
    %139 = math.tanh %138 : vector<2x32xf32>
    %cst_65 = arith.constant dense<0.000000e+00> : vector<2x32xf32>
    %140 = tpu.matmul %139, %5, %cst_65 {dimension_numbers = #tpu.dot_dimension_numbers<[1], [0], [0], [1], [0, 0, 1, 1], [], []>} : vector<2x32xf32>, vector<32x32xf32>, vector<2x32xf32> -> vector<2x32xf32>
    %141 = arith.addf %140, %11 : vector<2x32xf32>
    %142 = math.tanh %141 : vector<2x32xf32>
    %cst_66 = arith.constant dense<0.000000e+00> : vector<2x2xf32>
    %143 = tpu.matmul %142, %6, %cst_66 {dimension_numbers = #tpu.dot_dimension_numbers<[1], [0], [0], [1], [0, 0, 1, 1], [], []>} : vector<2x32xf32>, vector<32x2xf32>, vector<2x2xf32> -> vector<2x2xf32>
    %144 = arith.addf %143, %14 : vector<2x2xf32>
    %145 = math.tanh %144 : vector<2x2xf32>
    %c0_67 = arith.constant 0 : index
    %c12_68 = arith.constant 12 : index
    %146 = vector.load %arg4[%c0_67, %c12_68] : memref<2x16xf32, #tpu.memory_space<vmem>>, vector<2x2xf32>
    tpu.vector_store %arg4[%c0_67, %c12_68], %145 {strides = array<i32>} : memref<2x16xf32, #tpu.memory_space<vmem>>, vector<2x2xf32>,
    %147 = vector.extract_strided_slice %137 {offsets = [0, 32], sizes = [2, 32], strides = [1, 1]} : vector<2x64xf32> to vector<2x32xf32>
    %cst_69 = arith.constant dense<0.000000e+00> : vector<2x32xf32>
    %148 = tpu.matmul %145, %7, %cst_69 {dimension_numbers = #tpu.dot_dimension_numbers<[1], [0], [0], [1], [0, 0, 1, 1], [], []>} : vector<2x2xf32>, vector<2x32xf32>, vector<2x32xf32> -> vector<2x32xf32>
    %149 = arith.addf %147, %148 : vector<2x32xf32>
    %150 = math.tanh %149 : vector<2x32xf32>
    %cst_70 = arith.constant dense<0.000000e+00> : vector<2x4xf32>
    %151 = tpu.matmul %150, %8, %cst_70 {dimension_numbers = #tpu.dot_dimension_numbers<[1], [0], [0], [1], [0, 0, 1, 1], [], []>} : vector<2x32xf32>, vector<32x4xf32>, vector<2x4xf32> -> vector<2x4xf32>
    %152 = arith.addf %134, %151 : vector<2x4xf32>
    %153 = arith.addf %152, %17 : vector<2x4xf32>
    %c0_71 = arith.constant 0 : index
    %c28 = arith.constant 28 : index
    %154 = vector.load %arg3[%c0_71, %c28] : memref<2x36xf32, #tpu.memory_space<vmem>>, vector<2x4xf32>
    tpu.vector_store %arg3[%c0_71, %c28], %153 {strides = array<i32>} : memref<2x36xf32, #tpu.memory_space<vmem>>, vector<2x4xf32>,
    %cst_72 = arith.constant dense<0.000000e+00> : vector<2x64xf32>
    %155 = tpu.matmul %153, %2, %cst_72 {dimension_numbers = #tpu.dot_dimension_numbers<[1], [0], [0], [1], [0, 0, 1, 1], [], []>} : vector<2x4xf32>, vector<4x64xf32>, vector<2x64xf32> -> vector<2x64xf32>
    %156 = arith.addf %155, %20 : vector<2x64xf32>
    %157 = vector.extract_strided_slice %156 {offsets = [0, 0], sizes = [2, 32], strides = [1, 1]} : vector<2x64xf32> to vector<2x32xf32>
    %158 = math.tanh %157 : vector<2x32xf32>
    %cst_73 = arith.constant dense<0.000000e+00> : vector<2x32xf32>
    %159 = tpu.matmul %158, %5, %cst_73 {dimension_numbers = #tpu.dot_dimension_numbers<[1], [0], [0], [1], [0, 0, 1, 1], [], []>} : vector<2x32xf32>, vector<32x32xf32>, vector<2x32xf32> -> vector<2x32xf32>
    %160 = arith.addf %159, %11 : vector<2x32xf32>
    %161 = math.tanh %160 : vector<2x32xf32>
    %cst_74 = arith.constant dense<0.000000e+00> : vector<2x2xf32>
    %162 = tpu.matmul %161, %6, %cst_74 {dimension_numbers = #tpu.dot_dimension_numbers<[1], [0], [0], [1], [0, 0, 1, 1], [], []>} : vector<2x32xf32>, vector<32x2xf32>, vector<2x2xf32> -> vector<2x2xf32>
    %163 = arith.addf %162, %14 : vector<2x2xf32>
    %164 = math.tanh %163 : vector<2x2xf32>
    %c0_75 = arith.constant 0 : index
    %c14 = arith.constant 14 : index
    %165 = vector.load %arg4[%c0_75, %c14] : memref<2x16xf32, #tpu.memory_space<vmem>>, vector<2x2xf32>
    tpu.vector_store %arg4[%c0_75, %c14], %164 {strides = array<i32>} : memref<2x16xf32, #tpu.memory_space<vmem>>, vector<2x2xf32>,
    %166 = vector.extract_strided_slice %156 {offsets = [0, 32], sizes = [2, 32], strides = [1, 1]} : vector<2x64xf32> to vector<2x32xf32>
    %cst_76 = arith.constant dense<0.000000e+00> : vector<2x32xf32>
    %167 = tpu.matmul %164, %7, %cst_76 {dimension_numbers = #tpu.dot_dimension_numbers<[1], [0], [0], [1], [0, 0, 1, 1], [], []>} : vector<2x2xf32>, vector<2x32xf32>, vector<2x32xf32> -> vector<2x32xf32>
    %168 = arith.addf %166, %167 : vector<2x32xf32>
    %169 = math.tanh %168 : vector<2x32xf32>
    %cst_77 = arith.constant dense<0.000000e+00> : vector<2x4xf32>
    %170 = tpu.matmul %169, %8, %cst_77 {dimension_numbers = #tpu.dot_dimension_numbers<[1], [0], [0], [1], [0, 0, 1, 1], [], []>} : vector<2x32xf32>, vector<32x4xf32>, vector<2x4xf32> -> vector<2x4xf32>
    %171 = arith.addf %153, %170 : vector<2x4xf32>
    %172 = arith.addf %171, %17 : vector<2x4xf32>
    %c0_78 = arith.constant 0 : index
    %c32 = arith.constant 32 : index
    %173 = vector.load %arg3[%c0_78, %c32] : memref<2x36xf32, #tpu.memory_space<vmem>>, vector<2x4xf32>
    tpu.vector_store %arg3[%c0_78, %c32], %172 {strides = array<i32>} : memref<2x36xf32, #tpu.memory_space<vmem>>, vector<2x4xf32>,
    return
  }
}

</mosaic_0001>

<llo_original>
// kernel: _lambda_.1
$region0: #{_lambda_.1}
  #allocation0 [shape = 'u32[]', space=smem, size = 0x4, offset = 0x4, fixed_abs, tag = 'smem constant byte address 0x4 - core index']
  #allocation1 [shape = 'u32[144,128]{1,0:T(1,128)}', space=vmem, size = 0x12000, scoped, tag = 'internal scratch']
  %s0 = inlined_call_operand.vmem [shape: f32[2,4], index: 0, kind: input, shape index: {}]
  %s1 = inlined_call_operand.vmem [shape: f32[2,4], index: 1, kind: input, shape index: {}]
  %s2 = inlined_call_operand.hbm [shape: f32[152,128], index: 2, kind: input, shape index: {}]
  %s3 = inlined_call_operand.vmem [shape: f32[2,36], index: 3, kind: output, shape index: {0}]
  %s4 = inlined_call_operand.vmem [shape: f32[2,16], index: 4, kind: output, shape index: {1}]
  %5 = xla_tuple %s3, %s4
  %s6 = sld [smem:[#allocation0]]
  $region34: #{_lambda_.1} parent=0
    _
  %s8 = ssub.s32 1, %s6
  %s9 = scalar_select 0, %s8, %s6
  $region1: #{_lambda_.1} parent=0
    #allocation2 [shape = 'u8[77824]{0}', space=vmem, size = 0x13000, scoped, tag = 'input window, operand 2, single buffered']
    #allocation3 [shape = 's32[1]{0}', space=sflag, size = 0x4, scoped, tag = 'scoped memory for _lambda_.1']
    %10 = vsyncpa [#allocation3], 0
    // Predicated region
    $region2: #{_lambda_.1} parent=1 // pred_check
      _
    $region3: #{_lambda_.1} parent=1 // pred_check_branch
      %12 = sbr.rel (0) target = $region5
    $region4: #{_lambda_.1} parent=1 // pred_region
      _
    $region5: #{_lambda_.1} parent=1 // pred_fallthru
      _
    // Predicated region
    $region6: #{_lambda_.1} parent=1 // pred_check
      _
    $region7: #{_lambda_.1} parent=1 // pred_check_branch
      %14 = sbr.rel (0) target = $region9
    $region8: #{_lambda_.1} parent=1 // pred_region
      _
    $region9: #{_lambda_.1} parent=1 // pred_fallthru
      _
    // Predicated region
    $region10: #{_lambda_.1} parent=1 // pred_check
      _
    $region11: #{_lambda_.1} parent=1 // pred_check_branch
      %16 = sbr.rel (0) target = $region13
    $region12: #{_lambda_.1} parent=1 // pred_region
      %s18 = ssub.s32 2432, 2432
      %19 = vsyncadd [#allocation3], %s18
      %s20 = sshll.u32 [#allocation2], 4
      %s21 = int_to_ptr.vmem [resolvable:$true] %s20
      %26 = dma.hbm_to_vmem [thread:$0]  %s2, 2432, %s21, [#allocation3], 128, 128, 8
    $region13: #{_lambda_.1} parent=1 // pred_fallthru
      _
    // Predicated region
    $region14: #{_lambda_.1} parent=1 // pred_check
      _
    $region15: #{_lambda_.1} parent=1 // pred_check_branch
      %28 = sbr.rel (0) target = $region17
    $region16: #{_lambda_.1} parent=1 // pred_region
      %29 = dma.done [#allocation3], 2432
    $region17: #{_lambda_.1} parent=1 // pred_fallthru
      _
    %v30 = vld [vmem:[%s0] sm:$0x3]
    %v31 = vld [vmem:[%s1] sm:$0x3]
    %v32 = vld [vmem:[#allocation2] sm:$0xf]
    %v33 = vld [vmem:[#allocation2 + $0x8] sm:$0xf]
    %v34 = vld [vmem:[#allocation2 + $0x10] sm:$0x1]
    %v35 = vld [vmem:[#allocation2 + $0x18] sm:$0xff]
    %v36 = vld [vmem:[#allocation2 + $0x20] sm:$0xff]
    %v37 = vld [vmem:[#allocation2 + $0x28] sm:$0xff]
    %v38 = vld [vmem:[#allocation2 + $0x30] sm:$0xff]
    %v39 = vld [vmem:[#allocation2 + $0x40] sm:$0xff]
    %v40 = vld [vmem:[#allocation2 + $0x48] sm:$0xff]
    %v41 = vld [vmem:[#allocation2 + $0x50] sm:$0xff]
    %v42 = vld [vmem:[#allocation2 + $0x58] sm:$0xff]
    %v43 = vld [vmem:[#allocation2 + $0x68] sm:$0x3]
    %v44 = vld [vmem:[#allocation2 + $0x70] sm:$0xff]
    %v45 = vld [vmem:[#allocation2 + $0x78] sm:$0xff]
    %v46 = vld [vmem:[#allocation2 + $0x80] sm:$0xff]
    %v47 = vld [vmem:[#allocation2 + $0x88] sm:$0xff]
    %v48 = vld [vmem:[#allocation2 + $0x38] sm:$0x1]
    %v49 = vlaneseq
    %v50 = vshrl.u32 %v49, 7
    %v51 = vsub.s32 0, %v50
    %v52 = vrot.slane %v48, %v51
    %v53 = vld [vmem:[#allocation2 + $0x60] sm:$0x1]
    %v54 = vlaneseq
    %v55 = vshrl.u32 %v54, 7
    %v56 = vsub.s32 0, %v55
    %v57 = vrot.slane %v53, %v56
    %v58 = vld [vmem:[#allocation2 + $0x90] sm:$0x1]
    %v59 = vlaneseq
    %v60 = vshrl.u32 %v59, 7
    %v61 = vsub.s32 0, %v60
    %v62 = vrot.slane %v58, %v61
    %v63 = vlaneseq
    %v64 = vshrl.u32 %v63, 7
    %v65 = vsub.s32 0, %v64
    %v66 = vrot.slane %v34, %v65
    %vm67 = vcmask 31744
    %v69 = vsel %vm67, %v31, 0
    %vm71 = vcmask 1043456
    %v73 = vsel %vm71, %v33, 0
    %75 = vmatprep.subr.mxu0 0.0
    %76 = vmatpush1.msra.mxu0 %v73
    %77 = vmatprep.subr.mxu0 0.0
    %78 = vmatpush1.msra.mxu0 0.0
    %79 = vmatprep.subr.mxu0 0.0
    %80 = vmatpush1.msra.mxu0 0.0
    %81 = vmatprep.subr.mxu0 0.0
    %82 = vmatpush1.msra.mxu0 0.0
    %83 = vmatprep.subr.mxu0 0.0
    %84 = vmatpush1.msra.mxu0 0.0
    %85 = vmatprep.subr.mxu0 0.0
    %86 = vmatpush1.msra.mxu0 0.0
    %87 = vmatprep.subr.mxu0 0.0
    %88 = vmatpush1.msra.mxu0 0.0
    %89 = vmatprep.subr.mxu0 0.0
    %90 = vmatpush1.msra.mxu0 0.0
    %91 = vmatprep.subr.mxu0 0.0
    %92 = vmatpush1.msra.mxu0 0.0
    %93 = vmatprep.subr.mxu0 0.0
    %94 = vmatpush1.msra.mxu0 0.0
    %95 = vmatprep.subr.mxu0 0.0
    %96 = vmatpush1.msra.mxu0 0.0
    %97 = vmatprep.subr.mxu0 0.0
    %98 = vmatpush1.msra.mxu0 0.0
    %99 = vmatprep.subr.mxu0 0.0
    %100 = vmatpush1.msra.mxu0 0.0
    %101 = vmatprep.subr.mxu0 0.0
    %102 = vmatpush1.msra.mxu0 0.0
    %103 = vmatprep.subr.mxu0 0.0
    %104 = vmatpush1.msra.mxu0 0.0
    %105 = vmatprep.subr.mxu0 0.0
    %106 = vmatpush1.msra.mxu0 0.0
    %107 = vmatprep.subr.mxu0 0.0
    %108 = vmatpush1.msra.mxu0 0.0
    %109 = vmatprep.subr.mxu0 0.0
    %110 = vmatpush1.msra.mxu0 0.0
    %111 = vmatprep.subr.mxu0 0.0
    %112 = vmatpush1.msra.mxu0 0.0
    %113 = vmatprep.subr.mxu0 0.0
    %114 = vmatpush1.msra.mxu0 0.0
    %115 = vmatprep.subr.mxu0 0.0
    %116 = vmatpush1.msra.mxu0 0.0
    %117 = vmatprep.subr.mxu0 0.0
    %118 = vmatpush1.msra.mxu0 0.0
    %119 = vmatprep.subr.mxu0 0.0
    %120 = vmatpush1.msra.mxu0 0.0
    %121 = vmatprep.subr.mxu0 0.0
    %122 = vmatpush1.msra.mxu0 0.0
    %123 = vmatprep.subr.mxu0 0.0
    %124 = vmatpush1.msra.mxu0 0.0
    %125 = vmatprep.subr.mxu0 0.0
    %126 = vmatpush1.msra.mxu0 0.0
    %127 = vmatprep.subr.mxu0 0.0
    %128 = vmatpush1.msra.mxu0 0.0
    %129 = vmatprep.subr.mxu0 0.0
    %130 = vmatpush1.msra.mxu0 0.0
    %131 = vmatprep.subr.mxu0 0.0
    %132 = vmatpush1.msra.mxu0 0.0
    %133 = vmatprep.subr.mxu0 0.0
    %134 = vmatpush1.msra.mxu0 0.0
    %135 = vmatprep.subr.mxu0 0.0
    %136 = vmatpush1.msra.mxu0 0.0
    %137 = vmatprep.subr.mxu0 0.0
    %138 = vmatpush1.msra.mxu0 0.0
    %139 = vmatprep.mubr.f32.mxu0 0.0
    %140 = vmatmul.mubr.f32.gmra.mrb[0].mxu0 %v69
    %v141 = vpop.f32.mrb[0].mxu0
    %v142 = vadd.f32 %v66, %v141
    %v143 = vpop.f32.mrb[0].mxu0
    %144 = vdwg.mxu0
    %vm145 = vcmask 25600
    %146 = vst.msk [vmem:[%s3] sm:$0x3] %vm145, %v30
    %v148 = vsel %vm67, %v30, 0
    %v151 = vsel %vm71, %v32, 0
    %153 = vmatprep.subr.mxu0 0.0
    %154 = vmatpush1.msra.mxu0 %v151
    %155 = vmatprep.subr.mxu0 0.0
    %156 = vmatpush1.msra.mxu0 0.0
    %157 = vmatprep.subr.mxu0 0.0
    %158 = vmatpush1.msra.mxu0 0.0
    %159 = vmatprep.subr.mxu0 0.0
    %160 = vmatpush1.msra.mxu0 0.0
    %161 = vmatprep.subr.mxu0 0.0
    %162 = vmatpush1.msra.mxu0 0.0
    %163 = vmatprep.subr.mxu0 0.0
    %164 = vmatpush1.msra.mxu0 0.0
    %165 = vmatprep.subr.mxu0 0.0
    %166 = vmatpush1.msra.mxu0 0.0
    %167 = vmatprep.subr.mxu0 0.0
    %168 = vmatpush1.msra.mxu0 0.0
    %169 = vmatprep.subr.mxu0 0.0
    %170 = vmatpush1.msra.mxu0 0.0
    %171 = vmatprep.subr.mxu0 0.0
    %172 = vmatpush1.msra.mxu0 0.0
    %173 = vmatprep.subr.mxu0 0.0
    %174 = vmatpush1.msra.mxu0 0.0
    %175 = vmatprep.subr.mxu0 0.0
    %176 = vmatpush1.msra.mxu0 0.0
    %177 = vmatprep.subr.mxu0 0.0
    %178 = vmatpush1.msra.mxu0 0.0
    %179 = vmatprep.subr.mxu0 0.0
    %180 = vmatpush1.msra.mxu0 0.0
    %181 = vmatprep.subr.mxu0 0.0
    %182 = vmatpush1.msra.mxu0 0.0
    %183 = vmatprep.subr.mxu0 0.0
    %184 = vmatpush1.msra.mxu0 0.0
    %185 = vmatprep.subr.mxu0 0.0
    %186 = vmatpush1.msra.mxu0 0.0
    %187 = vmatprep.subr.mxu0 0.0
    %188 = vmatpush1.msra.mxu0 0.0
    %189 = vmatprep.subr.mxu0 0.0
    %190 = vmatpush1.msra.mxu0 0.0
    %191 = vmatprep.subr.mxu0 0.0
    %192 = vmatpush1.msra.mxu0 0.0
    %193 = vmatprep.subr.mxu0 0.0
    %194 = vmatpush1.msra.mxu0 0.0
    %195 = vmatprep.subr.mxu0 0.0
    %196 = vmatpush1.msra.mxu0 0.0
    %197 = vmatprep.subr.mxu0 0.0
    %198 = vmatpush1.msra.mxu0 0.0
    %199 = vmatprep.subr.mxu0 0.0
    %200 = vmatpush1.msra.mxu0 0.0
    %201 = vmatprep.subr.mxu0 0.0
    %202 = vmatpush1.msra.mxu0 0.0
    %203 = vmatprep.subr.mxu0 0.0
    %204 = vmatpush1.msra.mxu0 0.0
    %205 = vmatprep.subr.mxu0 0.0
    %206 = vmatpush1.msra.mxu0 0.0
    %207 = vmatprep.subr.mxu0 0.0
    %208 = vmatpush1.msra.mxu0 0.0
    %209 = vmatprep.subr.mxu0 0.0
    %210 = vmatpush1.msra.mxu0 0.0
    %211 = vmatprep.subr.mxu0 0.0
    %212 = vmatpush1.msra.mxu0 0.0
    %213 = vmatprep.subr.mxu0 0.0
    %214 = vmatpush1.msra.mxu0 0.0
    %215 = vmatprep.subr.mxu0 0.0
    %216 = vmatpush1.msra.mxu0 0.0
    %217 = vmatprep.mubr.f32.mxu0 0.0
    %218 = vmatmul.mubr.f32.gmra.mrb[0].mxu0 %v148
    %v219 = vpop.f32.mrb[0].mxu0
    %v220 = vadd.f32 %v142, %v219
    %v221 = vpop.f32.mrb[0].mxu0
    %222 = vdwg.mxu0
    %v223 = vtanh.pop %v220
    %vm224 = vcmask 261120
    %v226 = vsel %vm224, %v223, 0
    %228 = vmatprep.subr.mxu0 0.0
    %229 = vmatpush1.msra.mxu0 %v35
    %230 = vmatprep.subr.mxu0 0.0
    %231 = vmatpush1.msra.mxu0 %v36
    %232 = vmatprep.subr.mxu0 0.0
    %233 = vmatpush1.msra.mxu0 %v37
    %234 = vmatprep.subr.mxu0 0.0
    %235 = vmatpush1.msra.mxu0 %v38
    %236 = vmatprep.subr.mxu0 0.0
    %237 = vmatpush1.msra.mxu0 0.0
    %238 = vmatprep.subr.mxu0 0.0
    %239 = vmatpush1.msra.mxu0 0.0
    %240 = vmatprep.subr.mxu0 0.0
    %241 = vmatpush1.msra.mxu0 0.0
    %242 = vmatprep.subr.mxu0 0.0
    %243 = vmatpush1.msra.mxu0 0.0
    %244 = vmatprep.subr.mxu0 0.0
    %245 = vmatpush1.msra.mxu0 0.0
    %246 = vmatprep.subr.mxu0 0.0
    %247 = vmatpush1.msra.mxu0 0.0
    %248 = vmatprep.subr.mxu0 0.0
    %249 = vmatpush1.msra.mxu0 0.0
    %250 = vmatprep.subr.mxu0 0.0
    %251 = vmatpush1.msra.mxu0 0.0
    %252 = vmatprep.subr.mxu0 0.0
    %253 = vmatpush1.msra.mxu0 0.0
    %254 = vmatprep.subr.mxu0 0.0
    %255 = vmatpush1.msra.mxu0 0.0
    %256 = vmatprep.subr.mxu0 0.0
    %257 = vmatpush1.msra.mxu0 0.0
    %258 = vmatprep.subr.mxu0 0.0
    %259 = vmatpush1.msra.mxu0 0.0
    %260 = vmatprep.subr.mxu0 0.0
    %261 = vmatpush1.msra.mxu0 0.0
    %262 = vmatprep.subr.mxu0 0.0
    %263 = vmatpush1.msra.mxu0 0.0
    %264 = vmatprep.subr.mxu0 0.0
    %265 = vmatpush1.msra.mxu0 0.0
    %266 = vmatprep.subr.mxu0 0.0
    %267 = vmatpush1.msra.mxu0 0.0
    %268 = vmatprep.subr.mxu0 0.0
    %269 = vmatpush1.msra.mxu0 0.0
    %270 = vmatprep.subr.mxu0 0.0
    %271 = vmatpush1.msra.mxu0 0.0
    %272 = vmatprep.subr.mxu0 0.0
    %273 = vmatpush1.msra.mxu0 0.0
    %274 = vmatprep.subr.mxu0 0.0
    %275 = vmatpush1.msra.mxu0 0.0
    %276 = vmatprep.subr.mxu0 0.0
    %277 = vmatpush1.msra.mxu0 0.0
    %278 = vmatprep.subr.mxu0 0.0
    %279 = vmatpush1.msra.mxu0 0.0
    %280 = vmatprep.subr.mxu0 0.0
    %281 = vmatpush1.msra.mxu0 0.0
    %282 = vmatprep.subr.mxu0 0.0
    %283 = vmatpush1.msra.mxu0 0.0
    %284 = vmatprep.subr.mxu0 0.0
    %285 = vmatpush1.msra.mxu0 0.0
    %286 = vmatprep.subr.mxu0 0.0
    %287 = vmatpush1.msra.mxu0 0.0
    %288 = vmatprep.subr.mxu0 0.0
    %289 = vmatpush1.msra.mxu0 0.0
    %290 = vmatprep.subr.mxu0 0.0
    %291 = vmatpush1.msra.mxu0 0.0
    %292 = vmatprep.mubr.f32.mxu0 0.0
    %293 = vmatmul.mubr.f32.gmra.mrb[0].mxu0 %v226
    %v294 = vpop.f32.mrb[0].mxu0
    %v295 = vadd.f32 %v52, %v294
    %v296 = vpop.f32.mrb[0].mxu0
    %297 = vdwg.mxu0
    %v298 = vtanh.pop %v295
    %v300 = vsel %vm224, %v298, 0
    %302 = vmatprep.subr.mxu0 0.0
    %303 = vmatpush1.msra.mxu0 %v39
    %304 = vmatprep.subr.mxu0 0.0
    %305 = vmatpush1.msra.mxu0 %v40
    %306 = vmatprep.subr.mxu0 0.0
    %307 = vmatpush1.msra.mxu0 %v41
    %308 = vmatprep.subr.mxu0 0.0
    %309 = vmatpush1.msra.mxu0 %v42
    %310 = vmatprep.subr.mxu0 0.0
    %311 = vmatpush1.msra.mxu0 0.0
    %312 = vmatprep.subr.mxu0 0.0
    %313 = vmatpush1.msra.mxu0 0.0
    %314 = vmatprep.subr.mxu0 0.0
    %315 = vmatpush1.msra.mxu0 0.0
    %316 = vmatprep.subr.mxu0 0.0
    %317 = vmatpush1.msra.mxu0 0.0
    %318 = vmatprep.subr.mxu0 0.0
    %319 = vmatpush1.msra.mxu0 0.0
    %320 = vmatprep.subr.mxu0 0.0
    %321 = vmatpush1.msra.mxu0 0.0
    %322 = vmatprep.subr.mxu0 0.0
    %323 = vmatpush1.msra.mxu0 0.0
    %324 = vmatprep.subr.mxu0 0.0
    %325 = vmatpush1.msra.mxu0 0.0
    %326 = vmatprep.subr.mxu0 0.0
    %327 = vmatpush1.msra.mxu0 0.0
    %328 = vmatprep.subr.mxu0 0.0
    %329 = vmatpush1.msra.mxu0 0.0
    %330 = vmatprep.subr.mxu0 0.0
    %331 = vmatpush1.msra.mxu0 0.0
    %332 = vmatprep.subr.mxu0 0.0
    %333 = vmatpush1.msra.mxu0 0.0
    %334 = vmatprep.subr.mxu0 0.0
    %335 = vmatpush1.msra.mxu0 0.0
    %336 = vmatprep.subr.mxu0 0.0
    %337 = vmatpush1.msra.mxu0 0.0
    %338 = vmatprep.subr.mxu0 0.0
    %339 = vmatpush1.msra.mxu0 0.0
    %340 = vmatprep.subr.mxu0 0.0
    %341 = vmatpush1.msra.mxu0 0.0
    %342 = vmatprep.subr.mxu0 0.0
    %343 = vmatpush1.msra.mxu0 0.0
    %344 = vmatprep.subr.mxu0 0.0
    %345 = vmatpush1.msra.mxu0 0.0
    %346 = vmatprep.subr.mxu0 0.0
    %347 = vmatpush1.msra.mxu0 0.0
    %348 = vmatprep.subr.mxu0 0.0
    %349 = vmatpush1.msra.mxu0 0.0
    %350 = vmatprep.subr.mxu0 0.0
    %351 = vmatpush1.msra.mxu0 0.0
    %352 = vmatprep.subr.mxu0 0.0
    %353 = vmatpush1.msra.mxu0 0.0
    %354 = vmatprep.subr.mxu0 0.0
    %355 = vmatpush1.msra.mxu0 0.0
    %356 = vmatprep.subr.mxu0 0.0
    %357 = vmatpush1.msra.mxu0 0.0
    %358 = vmatprep.subr.mxu0 0.0
    %359 = vmatpush1.msra.mxu0 0.0
    %360 = vmatprep.subr.mxu0 0.0
    %361 = vmatpush1.msra.mxu0 0.0
    %362 = vmatprep.subr.mxu0 0.0
    %363 = vmatpush1.msra.mxu0 0.0
    %364 = vmatprep.subr.mxu0 0.0
    %365 = vmatpush1.msra.mxu0 0.0
    %366 = vmatprep.mubr.f32.mxu0 0.0
    %367 = vmatmul.mubr.f32.gmra.mrb[0].mxu0 %v300
    %v368 = vpop.f32.mrb[0].mxu0
    %v369 = vadd.f32 %v57, %v368
    %v370 = vpop.f32.mrb[0].mxu0
    %371 = vdwg.mxu0
    %v372 = vtanh.pop %v369
    %vm373 = vcmask 9216
    %374 = vst.msk [vmem:[%s4] sm:$0x3] %vm373, %v372
    %vm375 = vcmask 15360
    %v377 = vsel %vm375, %v372, 0
    %vm379 = vcmask 1041408
    %v381 = vsel %vm379, %v43, 0
    %383 = vmatprep.subr.mxu0 0.0
    %384 = vmatpush1.msra.mxu0 %v381
    %385 = vmatprep.subr.mxu0 0.0
    %386 = vmatpush1.msra.mxu0 0.0
    %387 = vmatprep.subr.mxu0 0.0
    %388 = vmatpush1.msra.mxu0 0.0
    %389 = vmatprep.subr.mxu0 0.0
    %390 = vmatpush1.msra.mxu0 0.0
    %391 = vmatprep.subr.mxu0 0.0
    %392 = vmatpush1.msra.mxu0 0.0
    %393 = vmatprep.subr.mxu0 0.0
    %394 = vmatpush1.msra.mxu0 0.0
    %395 = vmatprep.subr.mxu0 0.0
    %396 = vmatpush1.msra.mxu0 0.0
    %397 = vmatprep.subr.mxu0 0.0
    %398 = vmatpush1.msra.mxu0 0.0
    %399 = vmatprep.subr.mxu0 0.0
    %400 = vmatpush1.msra.mxu0 0.0
    %401 = vmatprep.subr.mxu0 0.0
    %402 = vmatpush1.msra.mxu0 0.0
    %403 = vmatprep.subr.mxu0 0.0
    %404 = vmatpush1.msra.mxu0 0.0
    %405 = vmatprep.subr.mxu0 0.0
    %406 = vmatpush1.msra.mxu0 0.0
    %407 = vmatprep.subr.mxu0 0.0
    %408 = vmatpush1.msra.mxu0 0.0
    %409 = vmatprep.subr.mxu0 0.0
    %410 = vmatpush1.msra.mxu0 0.0
    %411 = vmatprep.subr.mxu0 0.0
    %412 = vmatpush1.msra.mxu0 0.0
    %413 = vmatprep.subr.mxu0 0.0
    %414 = vmatpush1.msra.mxu0 0.0
    %415 = vmatprep.subr.mxu0 0.0
    %416 = vmatpush1.msra.mxu0 0.0
    %417 = vmatprep.subr.mxu0 0.0
    %418 = vmatpush1.msra.mxu0 0.0
    %419 = vmatprep.subr.mxu0 0.0
    %420 = vmatpush1.msra.mxu0 0.0
    %421 = vmatprep.subr.mxu0 0.0
    %422 = vmatpush1.msra.mxu0 0.0
    %423 = vmatprep.subr.mxu0 0.0
    %424 = vmatpush1.msra.mxu0 0.0
    %425 = vmatprep.subr.mxu0 0.0
    %426 = vmatpush1.msra.mxu0 0.0
    %427 = vmatprep.subr.mxu0 0.0
    %428 = vmatpush1.msra.mxu0 0.0
    %429 = vmatprep.subr.mxu0 0.0
    %430 = vmatpush1.msra.mxu0 0.0
    %431 = vmatprep.subr.mxu0 0.0
    %432 = vmatpush1.msra.mxu0 0.0
    %433 = vmatprep.subr.mxu0 0.0
    %434 = vmatpush1.msra.mxu0 0.0
    %435 = vmatprep.subr.mxu0 0.0
    %436 = vmatpush1.msra.mxu0 0.0
    %437 = vmatprep.subr.mxu0 0.0
    %438 = vmatpush1.msra.mxu0 0.0
    %439 = vmatprep.subr.mxu0 0.0
    %440 = vmatpush1.msra.mxu0 0.0
    %441 = vmatprep.subr.mxu0 0.0
    %442 = vmatpush1.msra.mxu0 0.0
    %443 = vmatprep.subr.mxu0 0.0
    %444 = vmatpush1.msra.mxu0 0.0
    %445 = vmatprep.subr.mxu0 0.0
    %446 = vmatpush1.msra.mxu0 0.0
    %447 = vmatprep.mubr.f32.mxu0 0.0
    %448 = vmatmul.mubr.f32.gmra.mrb[0].mxu0 %v377
    %v449 = vpop.f32.mrb[0].mxu0
    %v450 = vadd.f32 0.0, %v449
    %v451 = vpop.f32.mrb[0].mxu0
    %452 = vdwg.mxu0
    %454 = vrot.lane.b32.xlu0 %v450, 32
    %v455 = vpop.permute.xlu0 %454
    %v457 = vadd.f32 %v220, %v455
    %v458 = vtanh.pop %v457
    %460 = vrot.lane.b32.xlu0 %v458, 96
    %v461 = vpop.permute.xlu0 %460
    %v462 = vsel %vm224, %v461, 0
    %464 = vmatprep.subr.mxu0 0.0
    %465 = vmatpush1.msra.mxu0 %v44
    %466 = vmatprep.subr.mxu0 0.0
    %467 = vmatpush1.msra.mxu0 %v45
    %468 = vmatprep.subr.mxu0 0.0
    %469 = vmatpush1.msra.mxu0 %v46
    %470 = vmatprep.subr.mxu0 0.0
    %471 = vmatpush1.msra.mxu0 %v47
    %472 = vmatprep.subr.mxu0 0.0
    %473 = vmatpush1.msra.mxu0 0.0
    %474 = vmatprep.subr.mxu0 0.0
    %475 = vmatpush1.msra.mxu0 0.0
    %476 = vmatprep.subr.mxu0 0.0
    %477 = vmatpush1.msra.mxu0 0.0
    %478 = vmatprep.subr.mxu0 0.0
    %479 = vmatpush1.msra.mxu0 0.0
    %480 = vmatprep.subr.mxu0 0.0
    %481 = vmatpush1.msra.mxu0 0.0
    %482 = vmatprep.subr.mxu0 0.0
    %483 = vmatpush1.msra.mxu0 0.0
    %484 = vmatprep.subr.mxu0 0.0
    %485 = vmatpush1.msra.mxu0 0.0
    %486 = vmatprep.subr.mxu0 0.0
    %487 = vmatpush1.msra.mxu0 0.0
    %488 = vmatprep.subr.mxu0 0.0
    %489 = vmatpush1.msra.mxu0 0.0
    %490 = vmatprep.subr.mxu0 0.0
    %491 = vmatpush1.msra.mxu0 0.0
    %492 = vmatprep.subr.mxu0 0.0
    %493 = vmatpush1.msra.mxu0 0.0
    %494 = vmatprep.subr.mxu0 0.0
    %495 = vmatpush1.msra.mxu0 0.0
    %496 = vmatprep.subr.mxu0 0.0
    %497 = vmatpush1.msra.mxu0 0.0
    %498 = vmatprep.subr.mxu0 0.0
    %499 = vmatpush1.msra.mxu0 0.0
    %500 = vmatprep.subr.mxu0 0.0
    %501 = vmatpush1.msra.mxu0 0.0
    %502 = vmatprep.subr.mxu0 0.0
    %503 = vmatpush1.msra.mxu0 0.0
    %504 = vmatprep.subr.mxu0 0.0
    %505 = vmatpush1.msra.mxu0 0.0
    %506 = vmatprep.subr.mxu0 0.0
    %507 = vmatpush1.msra.mxu0 0.0
    %508 = vmatprep.subr.mxu0 0.0
    %509 = vmatpush1.msra.mxu0 0.0
    %510 = vmatprep.subr.mxu0 0.0
    %511 = vmatpush1.msra.mxu0 0.0
    %512 = vmatprep.subr.mxu0 0.0
    %513 = vmatpush1.msra.mxu0 0.0
    %514 = vmatprep.subr.mxu0 0.0
    %515 = vmatpush1.msra.mxu0 0.0
    %516 = vmatprep.subr.mxu0 0.0
    %517 = vmatpush1.msra.mxu0 0.0
    %518 = vmatprep.subr.mxu0 0.0
    %519 = vmatpush1.msra.mxu0 0.0
    %520 = vmatprep.subr.mxu0 0.0
    %521 = vmatpush1.msra.mxu0 0.0
    %522 = vmatprep.subr.mxu0 0.0
    %523 = vmatpush1.msra.mxu0 0.0
    %524 = vmatprep.subr.mxu0 0.0
    %525 = vmatpush1.msra.mxu0 0.0
    %526 = vmatprep.subr.mxu0 0.0
    %527 = vmatpush1.msra.mxu0 0.0
    %528 = vmatprep.mubr.f32.mxu0 0.0
    %529 = vmatmul.mubr.f32.gmra.mrb[0].mxu0 %v462
    %v530 = vpop.f32.mrb[0].mxu0
    %v531 = vadd.f32 0.0, %v530
    %v532 = vpop.f32.mrb[0].mxu0
    %533 = vdwg.mxu0
    %v534 = vadd.f32 %v30, %v531
    %v535 = vadd.f32 %v534, %v62
    %537 = vrot.lane.b32.xlu0 %v535, 4
    %v538 = vpop.permute.xlu0 %537
    %vm540 = vcmask 58400
    %541 = vst.msk [vmem:[%s3] sm:$0x3] %vm540, %v538
    %v542 = vsel %vm67, %v535, 0
    %544 = vmatprep.subr.mxu0 0.0
    %545 = vmatpush1.msra.mxu0 %v151
    %546 = vmatprep.subr.mxu0 0.0
    %547 = vmatpush1.msra.mxu0 0.0
    %548 = vmatprep.subr.mxu0 0.0
    %549 = vmatpush1.msra.mxu0 0.0
    %550 = vmatprep.subr.mxu0 0.0
    %551 = vmatpush1.msra.mxu0 0.0
    %552 = vmatprep.subr.mxu0 0.0
    %553 = vmatpush1.msra.mxu0 0.0
    %554 = vmatprep.subr.mxu0 0.0
    %555 = vmatpush1.msra.mxu0 0.0
    %556 = vmatprep.subr.mxu0 0.0
    %557 = vmatpush1.msra.mxu0 0.0
    %558 = vmatprep.subr.mxu0 0.0
    %559 = vmatpush1.msra.mxu0 0.0
    %560 = vmatprep.subr.mxu0 0.0
    %561 = vmatpush1.msra.mxu0 0.0
    %562 = vmatprep.subr.mxu0 0.0
    %563 = vmatpush1.msra.mxu0 0.0
    %564 = vmatprep.subr.mxu0 0.0
    %565 = vmatpush1.msra.mxu0 0.0
    %566 = vmatprep.subr.mxu0 0.0
    %567 = vmatpush1.msra.mxu0 0.0
    %568 = vmatprep.subr.mxu0 0.0
    %569 = vmatpush1.msra.mxu0 0.0
    %570 = vmatprep.subr.mxu0 0.0
    %571 = vmatpush1.msra.mxu0 0.0
    %572 = vmatprep.subr.mxu0 0.0
    %573 = vmatpush1.msra.mxu0 0.0
    %574 = vmatprep.subr.mxu0 0.0
    %575 = vmatpush1.msra.mxu0 0.0
    %576 = vmatprep.subr.mxu0 0.0
    %577 = vmatpush1.msra.mxu0 0.0
    %578 = vmatprep.subr.mxu0 0.0
    %579 = vmatpush1.msra.mxu0 0.0
    %580 = vmatprep.subr.mxu0 0.0
    %581 = vmatpush1.msra.mxu0 0.0
    %582 = vmatprep.subr.mxu0 0.0
    %583 = vmatpush1.msra.mxu0 0.0
    %584 = vmatprep.subr.mxu0 0.0
    %585 = vmatpush1.msra.mxu0 0.0
    %586 = vmatprep.subr.mxu0 0.0
    %587 = vmatpush1.msra.mxu0 0.0
    %588 = vmatprep.subr.mxu0 0.0
    %589 = vmatpush1.msra.mxu0 0.0
    %590 = vmatprep.subr.mxu0 0.0
    %591 = vmatpush1.msra.mxu0 0.0
    %592 = vmatprep.subr.mxu0 0.0
    %593 = vmatpush1.msra.mxu0 0.0
    %594 = vmatprep.subr.mxu0 0.0
    %595 = vmatpush1.msra.mxu0 0.0
    %596 = vmatprep.subr.mxu0 0.0
    %597 = vmatpush1.msra.mxu0 0.0
    %598 = vmatprep.subr.mxu0 0.0
    %599 = vmatpush1.msra.mxu0 0.0
    %600 = vmatprep.subr.mxu0 0.0
    %601 = vmatpush1.msra.mxu0 0.0
    %602 = vmatprep.subr.mxu0 0.0
    %603 = vmatpush1.msra.mxu0 0.0
    %604 = vmatprep.subr.mxu0 0.0
    %605 = vmatpush1.msra.mxu0 0.0
    %606 = vmatprep.subr.mxu0 0.0
    %607 = vmatpush1.msra.mxu0 0.0
    %608 = vmatprep.mubr.f32.mxu0 0.0
    %609 = vmatmul.mubr.f32.gmra.mrb[0].mxu0 %v542
    %v610 = vpop.f32.mrb[0].mxu0
    %v611 = vadd.f32 %v142, %v610
    %v612 = vpop.f32.mrb[0].mxu0
    %613 = vdwg.mxu0
    %v614 = vtanh.pop %v611
    %v616 = vsel %vm224, %v614, 0
    %618 = vmatprep.subr.mxu0 0.0
    %619 = vmatpush1.msra.mxu0 %v35
    %620 = vmatprep.subr.mxu0 0.0
    %621 = vmatpush1.msra.mxu0 %v36
    %622 = vmatprep.subr.mxu0 0.0
    %623 = vmatpush1.msra.mxu0 %v37
    %624 = vmatprep.subr.mxu0 0.0
    %625 = vmatpush1.msra.mxu0 %v38
    %626 = vmatprep.subr.mxu0 0.0
    %627 = vmatpush1.msra.mxu0 0.0
    %628 = vmatprep.subr.mxu0 0.0
    %629 = vmatpush1.msra.mxu0 0.0
    %630 = vmatprep.subr.mxu0 0.0
    %631 = vmatpush1.msra.mxu0 0.0
    %632 = vmatprep.subr.mxu0 0.0
    %633 = vmatpush1.msra.mxu0 0.0
    %634 = vmatprep.subr.mxu0 0.0
    %635 = vmatpush1.msra.mxu0 0.0
    %636 = vmatprep.subr.mxu0 0.0
    %637 = vmatpush1.msra.mxu0 0.0
    %638 = vmatprep.subr.mxu0 0.0
    %639 = vmatpush1.msra.mxu0 0.0
    %640 = vmatprep.subr.mxu0 0.0
    %641 = vmatpush1.msra.mxu0 0.0
    %642 = vmatprep.subr.mxu0 0.0
    %643 = vmatpush1.msra.mxu0 0.0
    %644 = vmatprep.subr.mxu0 0.0
    %645 = vmatpush1.msra.mxu0 0.0
    %646 = vmatprep.subr.mxu0 0.0
    %647 = vmatpush1.msra.mxu0 0.0
    %648 = vmatprep.subr.mxu0 0.0
    %649 = vmatpush1.msra.mxu0 0.0
    %650 = vmatprep.subr.mxu0 0.0
    %651 = vmatpush1.msra.mxu0 0.0
    %652 = vmatprep.subr.mxu0 0.0
    %653 = vmatpush1.msra.mxu0 0.0
    %654 = vmatprep.subr.mxu0 0.0
    %655 = vmatpush1.msra.mxu0 0.0
    %656 = vmatprep.subr.mxu0 0.0
    %657 = vmatpush1.msra.mxu0 0.0
    %658 = vmatprep.subr.mxu0 0.0
    %659 = vmatpush1.msra.mxu0 0.0
    %660 = vmatprep.subr.mxu0 0.0
    %661 = vmatpush1.msra.mxu0 0.0
    %662 = vmatprep.subr.mxu0 0.0
    %663 = vmatpush1.msra.mxu0 0.0
    %664 = vmatprep.subr.mxu0 0.0
    %665 = vmatpush1.msra.mxu0 0.0
    %666 = vmatprep.subr.mxu0 0.0
    %667 = vmatpush1.msra.mxu0 0.0
    %668 = vmatprep.subr.mxu0 0.0
    %669 = vmatpush1.msra.mxu0 0.0
    %670 = vmatprep.subr.mxu0 0.0
    %671 = vmatpush1.msra.mxu0 0.0
    %672 = vmatprep.subr.mxu0 0.0
    %673 = vmatpush1.msra.mxu0 0.0
    %674 = vmatprep.subr.mxu0 0.0
    %675 = vmatpush1.msra.mxu0 0.0
    %676 = vmatprep.subr.mxu0 0.0
    %677 = vmatpush1.msra.mxu0 0.0
    %678 = vmatprep.subr.mxu0 0.0
    %679 = vmatpush1.msra.mxu0 0.0
    %680 = vmatprep.subr.mxu0 0.0
    %681 = vmatpush1.msra.mxu0 0.0
    %682 = vmatprep.mubr.f32.mxu0 0.0
    %683 = vmatmul.mubr.f32.gmra.mrb[0].mxu0 %v616
    %v684 = vpop.f32.mrb[0].mxu0
    %v685 = vadd.f32 %v52, %v684
    %v686 = vpop.f32.mrb[0].mxu0
    %687 = vdwg.mxu0
    %v688 = vtanh.pop %v685
    %v690 = vsel %vm224, %v688, 0
    %692 = vmatprep.subr.mxu0 0.0
    %693 = vmatpush1.msra.mxu0 %v39
    %694 = vmatprep.subr.mxu0 0.0
    %695 = vmatpush1.msra.mxu0 %v40
    %696 = vmatprep.subr.mxu0 0.0
    %697 = vmatpush1.msra.mxu0 %v41
    %698 = vmatprep.subr.mxu0 0.0
    %699 = vmatpush1.msra.mxu0 %v42
    %700 = vmatprep.subr.mxu0 0.0
    %701 = vmatpush1.msra.mxu0 0.0
    %702 = vmatprep.subr.mxu0 0.0
    %703 = vmatpush1.msra.mxu0 0.0
    %704 = vmatprep.subr.mxu0 0.0
    %705 = vmatpush1.msra.mxu0 0.0
    %706 = vmatprep.subr.mxu0 0.0
    %707 = vmatpush1.msra.mxu0 0.0
    %708 = vmatprep.subr.mxu0 0.0
    %709 = vmatpush1.msra.mxu0 0.0
    %710 = vmatprep.subr.mxu0 0.0
    %711 = vmatpush1.msra.mxu0 0.0
    %712 = vmatprep.subr.mxu0 0.0
    %713 = vmatpush1.msra.mxu0 0.0
    %714 = vmatprep.subr.mxu0 0.0
    %715 = vmatpush1.msra.mxu0 0.0
    %716 = vmatprep.subr.mxu0 0.0
    %717 = vmatpush1.msra.mxu0 0.0
    %718 = vmatprep.subr.mxu0 0.0
    %719 = vmatpush1.msra.mxu0 0.0
    %720 = vmatprep.subr.mxu0 0.0
    %721 = vmatpush1.msra.mxu0 0.0
    %722 = vmatprep.subr.mxu0 0.0
    %723 = vmatpush1.msra.mxu0 0.0
    %724 = vmatprep.subr.mxu0 0.0
    %725 = vmatpush1.msra.mxu0 0.0
    %726 = vmatprep.subr.mxu0 0.0
    %727 = vmatpush1.msra.mxu0 0.0
    %728 = vmatprep.subr.mxu0 0.0
    %729 = vmatpush1.msra.mxu0 0.0
    %730 = vmatprep.subr.mxu0 0.0
    %731 = vmatpush1.msra.mxu0 0.0
    %732 = vmatprep.subr.mxu0 0.0
    %733 = vmatpush1.msra.mxu0 0.0
    %734 = vmatprep.subr.mxu0 0.0
    %735 = vmatpush1.msra.mxu0 0.0
    %736 = vmatprep.subr.mxu0 0.0
    %737 = vmatpush1.msra.mxu0 0.0
    %738 = vmatprep.subr.mxu0 0.0
    %739 = vmatpush1.msra.mxu0 0.0
    %740 = vmatprep.subr.mxu0 0.0
    %741 = vmatpush1.msra.mxu0 0.0
    %742 = vmatprep.subr.mxu0 0.0
    %743 = vmatpush1.msra.mxu0 0.0
    %744 = vmatprep.subr.mxu0 0.0
    %745 = vmatpush1.msra.mxu0 0.0
    %746 = vmatprep.subr.mxu0 0.0
    %747 = vmatpush1.msra.mxu0 0.0
    %748 = vmatprep.subr.mxu0 0.0
    %749 = vmatpush1.msra.mxu0 0.0
    %750 = vmatprep.subr.mxu0 0.0
    %751 = vmatpush1.msra.mxu0 0.0
    %752 = vmatprep.subr.mxu0 0.0
    %753 = vmatpush1.msra.mxu0 0.0
    %754 = vmatprep.subr.mxu0 0.0
    %755 = vmatpush1.msra.mxu0 0.0
    %756 = vmatprep.mubr.f32.mxu0 0.0
    %757 = vmatmul.mubr.f32.gmra.mrb[0].mxu0 %v690
    %v758 = vpop.f32.mrb[0].mxu0
    %v759 = vadd.f32 %v57, %v758
    %v760 = vpop.f32.mrb[0].mxu0
    %761 = vdwg.mxu0
    %v762 = vtanh.pop %v759
    %764 = vrot.lane.b32.xlu0 %v762, 2
    %v765 = vpop.permute.xlu0 %764
    %vm767 = vcmask 25616
    %768 = vst.msk [vmem:[%s4] sm:$0x3] %vm767, %v765
    %v769 = vsel %vm375, %v762, 0
    %771 = vmatprep.subr.mxu0 0.0
    %772 = vmatpush1.msra.mxu0 %v381
    %773 = vmatprep.subr.mxu0 0.0
    %774 = vmatpush1.msra.mxu0 0.0
    %775 = vmatprep.subr.mxu0 0.0
    %776 = vmatpush1.msra.mxu0 0.0
    %777 = vmatprep.subr.mxu0 0.0
    %778 = vmatpush1.msra.mxu0 0.0
    %779 = vmatprep.subr.mxu0 0.0
    %780 = vmatpush1.msra.mxu0 0.0
    %781 = vmatprep.subr.mxu0 0.0
    %782 = vmatpush1.msra.mxu0 0.0
    %783 = vmatprep.subr.mxu0 0.0
    %784 = vmatpush1.msra.mxu0 0.0
    %785 = vmatprep.subr.mxu0 0.0
    %786 = vmatpush1.msra.mxu0 0.0
    %787 = vmatprep.subr.mxu0 0.0
    %788 = vmatpush1.msra.mxu0 0.0
    %789 = vmatprep.subr.mxu0 0.0
    %790 = vmatpush1.msra.mxu0 0.0
    %791 = vmatprep.subr.mxu0 0.0
    %792 = vmatpush1.msra.mxu0 0.0
    %793 = vmatprep.subr.mxu0 0.0
    %794 = vmatpush1.msra.mxu0 0.0
    %795 = vmatprep.subr.mxu0 0.0
    %796 = vmatpush1.msra.mxu0 0.0
    %797 = vmatprep.subr.mxu0 0.0
    %798 = vmatpush1.msra.mxu0 0.0
    %799 = vmatprep.subr.mxu0 0.0
    %800 = vmatpush1.msra.mxu0 0.0
    %801 = vmatprep.subr.mxu0 0.0
    %802 = vmatpush1.msra.mxu0 0.0
    %803 = vmatprep.subr.mxu0 0.0
    %804 = vmatpush1.msra.mxu0 0.0
    %805 = vmatprep.subr.mxu0 0.0
    %806 = vmatpush1.msra.mxu0 0.0
    %807 = vmatprep.subr.mxu0 0.0
    %808 = vmatpush1.msra.mxu0 0.0
    %809 = vmatprep.subr.mxu0 0.0
    %810 = vmatpush1.msra.mxu0 0.0
    %811 = vmatprep.subr.mxu0 0.0
    %812 = vmatpush1.msra.mxu0 0.0
    %813 = vmatprep.subr.mxu0 0.0
    %814 = vmatpush1.msra.mxu0 0.0
    %815 = vmatprep.subr.mxu0 0.0
    %816 = vmatpush1.msra.mxu0 0.0
    %817 = vmatprep.subr.mxu0 0.0
    %818 = vmatpush1.msra.mxu0 0.0
    %819 = vmatprep.subr.mxu0 0.0
    %820 = vmatpush1.msra.mxu0 0.0
    %821 = vmatprep.subr.mxu0 0.0
    %822 = vmatpush1.msra.mxu0 0.0
    %823 = vmatprep.subr.mxu0 0.0
    %824 = vmatpush1.msra.mxu0 0.0
    %825 = vmatprep.subr.mxu0 0.0
    %826 = vmatpush1.msra.mxu0 0.0
    %827 = vmatprep.subr.mxu0 0.0
    %828 = vmatpush1.msra.mxu0 0.0
    %829 = vmatprep.subr.mxu0 0.0
    %830 = vmatpush1.msra.mxu0 0.0
    %831 = vmatprep.subr.mxu0 0.0
    %832 = vmatpush1.msra.mxu0 0.0
    %833 = vmatprep.subr.mxu0 0.0
    %834 = vmatpush1.msra.mxu0 0.0
    %835 = vmatprep.mubr.f32.mxu0 0.0
    %836 = vmatmul.mubr.f32.gmra.mrb[0].mxu0 %v769
    %v837 = vpop.f32.mrb[0].mxu0
    %v838 = vadd.f32 0.0, %v837
    %v839 = vpop.f32.mrb[0].mxu0
    %840 = vdwg.mxu0
    %842 = vrot.lane.b32.xlu0 %v838, 32
    %v843 = vpop.permute.xlu0 %842
    %v845 = vadd.f32 %v611, %v843
    %v846 = vtanh.pop %v845
    %848 = vrot.lane.b32.xlu0 %v846, 96
    %v849 = vpop.permute.xlu0 %848
    %v850 = vsel %vm224, %v849, 0
    %852 = vmatprep.subr.mxu0 0.0
    %853 = vmatpush1.msra.mxu0 %v44
    %854 = vmatprep.subr.mxu0 0.0
    %855 = vmatpush1.msra.mxu0 %v45
    %856 = vmatprep.subr.mxu0 0.0
    %857 = vmatpush1.msra.mxu0 %v46
    %858 = vmatprep.subr.mxu0 0.0
    %859 = vmatpush1.msra.mxu0 %v47
    %860 = vmatprep.subr.mxu0 0.0
    %861 = vmatpush1.msra.mxu0 0.0
    %862 = vmatprep.subr.mxu0 0.0
    %863 = vmatpush1.msra.mxu0 0.0
    %864 = vmatprep.subr.mxu0 0.0
    %865 = vmatpush1.msra.mxu0 0.0
    %866 = vmatprep.subr.mxu0 0.0
    %867 = vmatpush1.msra.mxu0 0.0
    %868 = vmatprep.subr.mxu0 0.0
    %869 = vmatpush1.msra.mxu0 0.0
    %870 = vmatprep.subr.mxu0 0.0
    %871 = vmatpush1.msra.mxu0 0.0
    %872 = vmatprep.subr.mxu0 0.0
    %873 = vmatpush1.msra.mxu0 0.0
    %874 = vmatprep.subr.mxu0 0.0
    %875 = vmatpush1.msra.mxu0 0.0
    %876 = vmatprep.subr.mxu0 0.0
    %877 = vmatpush1.msra.mxu0 0.0
    %878 = vmatprep.subr.mxu0 0.0
    %879 = vmatpush1.msra.mxu0 0.0
    %880 = vmatprep.subr.mxu0 0.0
    %881 = vmatpush1.msra.mxu0 0.0
    %882 = vmatprep.subr.mxu0 0.0
    %883 = vmatpush1.msra.mxu0 0.0
    %884 = vmatprep.subr.mxu0 0.0
    %885 = vmatpush1.msra.mxu0 0.0
    %886 = vmatprep.subr.mxu0 0.0
    %887 = vmatpush1.msra.mxu0 0.0
    %888 = vmatprep.subr.mxu0 0.0
    %889 = vmatpush1.msra.mxu0 0.0
    %890 = vmatprep.subr.mxu0 0.0
    %891 = vmatpush1.msra.mxu0 0.0
    %892 = vmatprep.subr.mxu0 0.0
    %893 = vmatpush1.msra.mxu0 0.0
    %894 = vmatprep.subr.mxu0 0.0
    %895 = vmatpush1.msra.mxu0 0.0
    %896 = vmatprep.subr.mxu0 0.0
    %897 = vmatpush1.msra.mxu0 0.0
    %898 = vmatprep.subr.mxu0 0.0
    %899 = vmatpush1.msra.mxu0 0.0
    %900 = vmatprep.subr.mxu0 0.0
    %901 = vmatpush1.msra.mxu0 0.0
    %902 = vmatprep.subr.mxu0 0.0
    %903 = vmatpush1.msra.mxu0 0.0
    %904 = vmatprep.subr.mxu0 0.0
    %905 = vmatpush1.msra.mxu0 0.0
    %906 = vmatprep.subr.mxu0 0.0
    %907 = vmatpush1.msra.mxu0 0.0
    %908 = vmatprep.subr.mxu0 0.0
    %909 = vmatpush1.msra.mxu0 0.0
    %910 = vmatprep.subr.mxu0 0.0
    %911 = vmatpush1.msra.mxu0 0.0
    %912 = vmatprep.subr.mxu0 0.0
    %913 = vmatpush1.msra.mxu0 0.0
    %914 = vmatprep.subr.mxu0 0.0
    %915 = vmatpush1.msra.mxu0 0.0
    %916 = vmatprep.mubr.f32.mxu0 0.0
    %917 = vmatmul.mubr.f32.gmra.mrb[0].mxu0 %v850
    %v918 = vpop.f32.mrb[0].mxu0
    %v919 = vadd.f32 0.0, %v918
    %v920 = vpop.f32.mrb[0].mxu0
    %921 = vdwg.mxu0
    %v922 = vadd.f32 %v535, %v919
    %v923 = vadd.f32 %v922, %v62
    %925 = vrot.lane.b32.xlu0 %v923, 8
    %v926 = vpop.permute.xlu0 %925
    %vm928 = vcmask 91200
    %929 = vst.msk [vmem:[%s3] sm:$0x3] %vm928, %v926
    %v930 = vsel %vm67, %v923, 0
    %932 = vmatprep.subr.mxu0 0.0
    %933 = vmatpush1.msra.mxu0 %v151
    %934 = vmatprep.subr.mxu0 0.0
    %935 = vmatpush1.msra.mxu0 0.0
    %936 = vmatprep.subr.mxu0 0.0
    %937 = vmatpush1.msra.mxu0 0.0
    %938 = vmatprep.subr.mxu0 0.0
    %939 = vmatpush1.msra.mxu0 0.0
    %940 = vmatprep.subr.mxu0 0.0
    %941 = vmatpush1.msra.mxu0 0.0
    %942 = vmatprep.subr.mxu0 0.0
    %943 = vmatpush1.msra.mxu0 0.0
    %944 = vmatprep.subr.mxu0 0.0
    %945 = vmatpush1.msra.mxu0 0.0
    %946 = vmatprep.subr.mxu0 0.0
    %947 = vmatpush1.msra.mxu0 0.0
    %948 = vmatprep.subr.mxu0 0.0
    %949 = vmatpush1.msra.mxu0 0.0
    %950 = vmatprep.subr.mxu0 0.0
    %951 = vmatpush1.msra.mxu0 0.0
    %952 = vmatprep.subr.mxu0 0.0
    %953 = vmatpush1.msra.mxu0 0.0
    %954 = vmatprep.subr.mxu0 0.0
    %955 = vmatpush1.msra.mxu0 0.0
    %956 = vmatprep.subr.mxu0 0.0
    %957 = vmatpush1.msra.mxu0 0.0
    %958 = vmatprep.subr.mxu0 0.0
    %959 = vmatpush1.msra.mxu0 0.0
    %960 = vmatprep.subr.mxu0 0.0
    %961 = vmatpush1.msra.mxu0 0.0
    %962 = vmatprep.subr.mxu0 0.0
    %963 = vmatpush1.msra.mxu0 0.0
    %964 = vmatprep.subr.mxu0 0.0
    %965 = vmatpush1.msra.mxu0 0.0
    %966 = vmatprep.subr.mxu0 0.0
    %967 = vmatpush1.msra.mxu0 0.0
    %968 = vmatprep.subr.mxu0 0.0
    %969 = vmatpush1.msra.mxu0 0.0
    %970 = vmatprep.subr.mxu0 0.0
    %971 = vmatpush1.msra.mxu0 0.0
    %972 = vmatprep.subr.mxu0 0.0
    %973 = vmatpush1.msra.mxu0 0.0
    %974 = vmatprep.subr.mxu0 0.0
    %975 = vmatpush1.msra.mxu0 0.0
    %976 = vmatprep.subr.mxu0 0.0
    %977 = vmatpush1.msra.mxu0 0.0
    %978 = vmatprep.subr.mxu0 0.0
    %979 = vmatpush1.msra.mxu0 0.0
    %980 = vmatprep.subr.mxu0 0.0
    %981 = vmatpush1.msra.mxu0 0.0
    %982 = vmatprep.subr.mxu0 0.0
    %983 = vmatpush1.msra.mxu0 0.0
    %984 = vmatprep.subr.mxu0 0.0
    %985 = vmatpush1.msra.mxu0 0.0
    %986 = vmatprep.subr.mxu0 0.0
    %987 = vmatpush1.msra.mxu0 0.0
    %988 = vmatprep.subr.mxu0 0.0
    %989 = vmatpush1.msra.mxu0 0.0
    %990 = vmatprep.subr.mxu0 0.0
    %991 = vmatpush1.msra.mxu0 0.0
    %992 = vmatprep.subr.mxu0 0.0
    %993 = vmatpush1.msra.mxu0 0.0
    %994 = vmatprep.subr.mxu0 0.0
    %995 = vmatpush1.msra.mxu0 0.0
    %996 = vmatprep.mubr.f32.mxu0 0.0
    %997 = vmatmul.mubr.f32.gmra.mrb[0].mxu0 %v930
    %v998 = vpop.f32.mrb[0].mxu0
    %v999 = vadd.f32 %v142, %v998
    %v1000 = vpop.f32.mrb[0].mxu0
    %1001 = vdwg.mxu0
    %v1002 = vtanh.pop %v999
    %v1004 = vsel %vm224, %v1002, 0
    %1006 = vmatprep.subr.mxu0 0.0
    %1007 = vmatpush1.msra.mxu0 %v35
    %1008 = vmatprep.subr.mxu0 0.0
    %1009 = vmatpush1.msra.mxu0 %v36
    %1010 = vmatprep.subr.mxu0 0.0
    %1011 = vmatpush1.msra.mxu0 %v37
    %1012 = vmatprep.subr.mxu0 0.0
    %1013 = vmatpush1.msra.mxu0 %v38
    %1014 = vmatprep.subr.mxu0 0.0
    %1015 = vmatpush1.msra.mxu0 0.0
    %1016 = vmatprep.subr.mxu0 0.0
    %1017 = vmatpush1.msra.mxu0 0.0
    %1018 = vmatprep.subr.mxu0 0.0
    %1019 = vmatpush1.msra.mxu0 0.0
    %1020 = vmatprep.subr.mxu0 0.0
    %1021 = vmatpush1.msra.mxu0 0.0
    %1022 = vmatprep.subr.mxu0 0.0
    %1023 = vmatpush1.msra.mxu0 0.0
    %1024 = vmatprep.subr.mxu0 0.0
    %1025 = vmatpush1.msra.mxu0 0.0
    %1026 = vmatprep.subr.mxu0 0.0
    %1027 = vmatpush1.msra.mxu0 0.0
    %1028 = vmatprep.subr.mxu0 0.0
    %1029 = vmatpush1.msra.mxu0 0.0
    %1030 = vmatprep.subr.mxu0 0.0
    %1031 = vmatpush1.msra.mxu0 0.0
    %1032 = vmatprep.subr.mxu0 0.0
    %1033 = vmatpush1.msra.mxu0 0.0
    %1034 = vmatprep.subr.mxu0 0.0
    %1035 = vmatpush1.msra.mxu0 0.0
    %1036 = vmatprep.subr.mxu0 0.0
    %1037 = vmatpush1.msra.mxu0 0.0
    %1038 = vmatprep.subr.mxu0 0.0
    %1039 = vmatpush1.msra.mxu0 0.0
    %1040 = vmatprep.subr.mxu0 0.0
    %1041 = vmatpush1.msra.mxu0 0.0
    %1042 = vmatprep.subr.mxu0 0.0
    %1043 = vmatpush1.msra.mxu0 0.0
    %1044 = vmatprep.subr.mxu0 0.0
    %1045 = vmatpush1.msra.mxu0 0.0
    %1046 = vmatprep.subr.mxu0 0.0
    %1047 = vmatpush1.msra.mxu0 0.0
    %1048 = vmatprep.subr.mxu0 0.0
    %1049 = vmatpush1.msra.mxu0 0.0
    %1050 = vmatprep.subr.mxu0 0.0
    %1051 = vmatpush1.msra.mxu0 0.0
    %1052 = vmatprep.subr.mxu0 0.0
    %1053 = vmatpush1.msra.mxu0 0.0
    %1054 = vmatprep.subr.mxu0 0.0
    %1055 = vmatpush1.msra.mxu0 0.0
    %1056 = vmatprep.subr.mxu0 0.0
    %1057 = vmatpush1.msra.mxu0 0.0
    %1058 = vmatprep.subr.mxu0 0.0
    %1059 = vmatpush1.msra.mxu0 0.0
    %1060 = vmatprep.subr.mxu0 0.0
    %1061 = vmatpush1.msra.mxu0 0.0
    %1062 = vmatprep.subr.mxu0 0.0
    %1063 = vmatpush1.msra.mxu0 0.0
    %1064 = vmatprep.subr.mxu0 0.0
    %1065 = vmatpush1.msra.mxu0 0.0
    %1066 = vmatprep.subr.mxu0 0.0
    %1067 = vmatpush1.msra.mxu0 0.0
    %1068 = vmatprep.subr.mxu0 0.0
    %1069 = vmatpush1.msra.mxu0 0.0
    %1070 = vmatprep.mubr.f32.mxu0 0.0
    %1071 = vmatmul.mubr.f32.gmra.mrb[0].mxu0 %v1004
    %v1072 = vpop.f32.mrb[0].mxu0
    %v1073 = vadd.f32 %v52, %v1072
    %v1074 = vpop.f32.mrb[0].mxu0
    %1075 = vdwg.mxu0
    %v1076 = vtanh.pop %v1073
    %v1078 = vsel %vm224, %v1076, 0
    %1080 = vmatprep.subr.mxu0 0.0
    %1081 = vmatpush1.msra.mxu0 %v39
    %1082 = vmatprep.subr.mxu0 0.0
    %1083 = vmatpush1.msra.mxu0 %v40
    %1084 = vmatprep.subr.mxu0 0.0
    %1085 = vmatpush1.msra.mxu0 %v41
    %1086 = vmatprep.subr.mxu0 0.0
    %1087 = vmatpush1.msra.mxu0 %v42
    %1088 = vmatprep.subr.mxu0 0.0
    %1089 = vmatpush1.msra.mxu0 0.0
    %1090 = vmatprep.subr.mxu0 0.0
    %1091 = vmatpush1.msra.mxu0 0.0
    %1092 = vmatprep.subr.mxu0 0.0
    %1093 = vmatpush1.msra.mxu0 0.0
    %1094 = vmatprep.subr.mxu0 0.0
    %1095 = vmatpush1.msra.mxu0 0.0
    %1096 = vmatprep.subr.mxu0 0.0
    %1097 = vmatpush1.msra.mxu0 0.0
    %1098 = vmatprep.subr.mxu0 0.0
    %1099 = vmatpush1.msra.mxu0 0.0
    %1100 = vmatprep.subr.mxu0 0.0
    %1101 = vmatpush1.msra.mxu0 0.0
    %1102 = vmatprep.subr.mxu0 0.0
    %1103 = vmatpush1.msra.mxu0 0.0
    %1104 = vmatprep.subr.mxu0 0.0
    %1105 = vmatpush1.msra.mxu0 0.0
    %1106 = vmatprep.subr.mxu0 0.0
    %1107 = vmatpush1.msra.mxu0 0.0
    %1108 = vmatprep.subr.mxu0 0.0
    %1109 = vmatpush1.msra.mxu0 0.0
    %1110 = vmatprep.subr.mxu0 0.0
    %1111 = vmatpush1.msra.mxu0 0.0
    %1112 = vmatprep.subr.mxu0 0.0
    %1113 = vmatpush1.msra.mxu0 0.0
    %1114 = vmatprep.subr.mxu0 0.0
    %1115 = vmatpush1.msra.mxu0 0.0
    %1116 = vmatprep.subr.mxu0 0.0
    %1117 = vmatpush1.msra.mxu0 0.0
    %1118 = vmatprep.subr.mxu0 0.0
    %1119 = vmatpush1.msra.mxu0 0.0
    %1120 = vmatprep.subr.mxu0 0.0
    %1121 = vmatpush1.msra.mxu0 0.0
    %1122 = vmatprep.subr.mxu0 0.0
    %1123 = vmatpush1.msra.mxu0 0.0
    %1124 = vmatprep.subr.mxu0 0.0
    %1125 = vmatpush1.msra.mxu0 0.0
    %1126 = vmatprep.subr.mxu0 0.0
    %1127 = vmatpush1.msra.mxu0 0.0
    %1128 = vmatprep.subr.mxu0 0.0
    %1129 = vmatpush1.msra.mxu0 0.0
    %1130 = vmatprep.subr.mxu0 0.0
    %1131 = vmatpush1.msra.mxu0 0.0
    %1132 = vmatprep.subr.mxu0 0.0
    %1133 = vmatpush1.msra.mxu0 0.0
    %1134 = vmatprep.subr.mxu0 0.0
    %1135 = vmatpush1.msra.mxu0 0.0
    %1136 = vmatprep.subr.mxu0 0.0
    %1137 = vmatpush1.msra.mxu0 0.0
    %1138 = vmatprep.subr.mxu0 0.0
    %1139 = vmatpush1.msra.mxu0 0.0
    %1140 = vmatprep.subr.mxu0 0.0
    %1141 = vmatpush1.msra.mxu0 0.0
    %1142 = vmatprep.subr.mxu0 0.0
    %1143 = vmatpush1.msra.mxu0 0.0
    %1144 = vmatprep.mubr.f32.mxu0 0.0
    %1145 = vmatmul.mubr.f32.gmra.mrb[0].mxu0 %v1078
    %v1146 = vpop.f32.mrb[0].mxu0
    %v1147 = vadd.f32 %v57, %v1146
    %v1148 = vpop.f32.mrb[0].mxu0
    %1149 = vdwg.mxu0
    %v1150 = vtanh.pop %v1147
    %1152 = vrot.lane.b32.xlu0 %v1150, 4
    %v1153 = vpop.permute.xlu0 %1152
    %vm1155 = vcmask 42016
    %1156 = vst.msk [vmem:[%s4] sm:$0x3] %vm1155, %v1153
    %v1157 = vsel %vm375, %v1150, 0
    %1159 = vmatprep.subr.mxu0 0.0
    %1160 = vmatpush1.msra.mxu0 %v381
    %1161 = vmatprep.subr.mxu0 0.0
    %1162 = vmatpush1.msra.mxu0 0.0
    %1163 = vmatprep.subr.mxu0 0.0
    %1164 = vmatpush1.msra.mxu0 0.0
    %1165 = vmatprep.subr.mxu0 0.0
    %1166 = vmatpush1.msra.mxu0 0.0
    %1167 = vmatprep.subr.mxu0 0.0
    %1168 = vmatpush1.msra.mxu0 0.0
    %1169 = vmatprep.subr.mxu0 0.0
    %1170 = vmatpush1.msra.mxu0 0.0
    %1171 = vmatprep.subr.mxu0 0.0
    %1172 = vmatpush1.msra.mxu0 0.0
    %1173 = vmatprep.subr.mxu0 0.0
    %1174 = vmatpush1.msra.mxu0 0.0
    %1175 = vmatprep.subr.mxu0 0.0
    %1176 = vmatpush1.msra.mxu0 0.0
    %1177 = vmatprep.subr.mxu0 0.0
    %1178 = vmatpush1.msra.mxu0 0.0
    %1179 = vmatprep.subr.mxu0 0.0
    %1180 = vmatpush1.msra.mxu0 0.0
    %1181 = vmatprep.subr.mxu0 0.0
    %1182 = vmatpush1.msra.mxu0 0.0
    %1183 = vmatprep.subr.mxu0 0.0
    %1184 = vmatpush1.msra.mxu0 0.0
    %1185 = vmatprep.subr.mxu0 0.0
    %1186 = vmatpush1.msra.mxu0 0.0
    %1187 = vmatprep.subr.mxu0 0.0
    %1188 = vmatpush1.msra.mxu0 0.0
    %1189 = vmatprep.subr.mxu0 0.0
    %1190 = vmatpush1.msra.mxu0 0.0
    %1191 = vmatprep.subr.mxu0 0.0
    %1192 = vmatpush1.msra.mxu0 0.0
    %1193 = vmatprep.subr.mxu0 0.0
    %1194 = vmatpush1.msra.mxu0 0.0
    %1195 = vmatprep.subr.mxu0 0.0
    %1196 = vmatpush1.msra.mxu0 0.0
    %1197 = vmatprep.subr.mxu0 0.0
    %1198 = vmatpush1.msra.mxu0 0.0
    %1199 = vmatprep.subr.mxu0 0.0
    %1200 = vmatpush1.msra.mxu0 0.0
    %1201 = vmatprep.subr.mxu0 0.0
    %1202 = vmatpush1.msra.mxu0 0.0
    %1203 = vmatprep.subr.mxu0 0.0
    %1204 = vmatpush1.msra.mxu0 0.0
    %1205 = vmatprep.subr.mxu0 0.0
    %1206 = vmatpush1.msra.mxu0 0.0
    %1207 = vmatprep.subr.mxu0 0.0
    %1208 = vmatpush1.msra.mxu0 0.0
    %1209 = vmatprep.subr.mxu0 0.0
    %1210 = vmatpush1.msra.mxu0 0.0
    %1211 = vmatprep.subr.mxu0 0.0
    %1212 = vmatpush1.msra.mxu0 0.0
    %1213 = vmatprep.subr.mxu0 0.0
    %1214 = vmatpush1.msra.mxu0 0.0
    %1215 = vmatprep.subr.mxu0 0.0
    %1216 = vmatpush1.msra.mxu0 0.0
    %1217 = vmatprep.subr.mxu0 0.0
    %1218 = vmatpush1.msra.mxu0 0.0
    %1219 = vmatprep.subr.mxu0 0.0
    %1220 = vmatpush1.msra.mxu0 0.0
    %1221 = vmatprep.subr.mxu0 0.0
    %1222 = vmatpush1.msra.mxu0 0.0
    %1223 = vmatprep.mubr.f32.mxu0 0.0
    %1224 = vmatmul.mubr.f32.gmra.mrb[0].mxu0 %v1157
    %v1225 = vpop.f32.mrb[0].mxu0
    %v1226 = vadd.f32 0.0, %v1225
    %v1227 = vpop.f32.mrb[0].mxu0
    %1228 = vdwg.mxu0
    %1230 = vrot.lane.b32.xlu0 %v1226, 32
    %v1231 = vpop.permute.xlu0 %1230
    %v1233 = vadd.f32 %v999, %v1231
    %v1234 = vtanh.pop %v1233
    %1236 = vrot.lane.b32.xlu0 %v1234, 96
    %v1237 = vpop.permute.xlu0 %1236
    %v1238 = vsel %vm224, %v1237, 0
    %1240 = vmatprep.subr.mxu0 0.0
    %1241 = vmatpush1.msra.mxu0 %v44
    %1242 = vmatprep.subr.mxu0 0.0
    %1243 = vmatpush1.msra.mxu0 %v45
    %1244 = vmatprep.subr.mxu0 0.0
    %1245 = vmatpush1.msra.mxu0 %v46
    %1246 = vmatprep.subr.mxu0 0.0
    %1247 = vmatpush1.msra.mxu0 %v47
    %1248 = vmatprep.subr.mxu0 0.0
    %1249 = vmatpush1.msra.mxu0 0.0
    %1250 = vmatprep.subr.mxu0 0.0
    %1251 = vmatpush1.msra.mxu0 0.0
    %1252 = vmatprep.subr.mxu0 0.0
    %1253 = vmatpush1.msra.mxu0 0.0
    %1254 = vmatprep.subr.mxu0 0.0
    %1255 = vmatpush1.msra.mxu0 0.0
    %1256 = vmatprep.subr.mxu0 0.0
    %1257 = vmatpush1.msra.mxu0 0.0
    %1258 = vmatprep.subr.mxu0 0.0
    %1259 = vmatpush1.msra.mxu0 0.0
    %1260 = vmatprep.subr.mxu0 0.0
    %1261 = vmatpush1.msra.mxu0 0.0
    %1262 = vmatprep.subr.mxu0 0.0
    %1263 = vmatpush1.msra.mxu0 0.0
    %1264 = vmatprep.subr.mxu0 0.0
    %1265 = vmatpush1.msra.mxu0 0.0
    %1266 = vmatprep.subr.mxu0 0.0
    %1267 = vmatpush1.msra.mxu0 0.0
    %1268 = vmatprep.subr.mxu0 0.0
    %1269 = vmatpush1.msra.mxu0 0.0
    %1270 = vmatprep.subr.mxu0 0.0
    %1271 = vmatpush1.msra.mxu0 0.0
    %1272 = vmatprep.subr.mxu0 0.0
    %1273 = vmatpush1.msra.mxu0 0.0
    %1274 = vmatprep.subr.mxu0 0.0
    %1275 = vmatpush1.msra.mxu0 0.0
    %1276 = vmatprep.subr.mxu0 0.0
    %1277 = vmatpush1.msra.mxu0 0.0
    %1278 = vmatprep.subr.mxu0 0.0
    %1279 = vmatpush1.msra.mxu0 0.0
    %1280 = vmatprep.subr.mxu0 0.0
    %1281 = vmatpush1.msra.mxu0 0.0
    %1282 = vmatprep.subr.mxu0 0.0
    %1283 = vmatpush1.msra.mxu0 0.0
    %1284 = vmatprep.subr.mxu0 0.0
    %1285 = vmatpush1.msra.mxu0 0.0
    %1286 = vmatprep.subr.mxu0 0.0
    %1287 = vmatpush1.msra.mxu0 0.0
    %1288 = vmatprep.subr.mxu0 0.0
    %1289 = vmatpush1.msra.mxu0 0.0
    %1290 = vmatprep.subr.mxu0 0.0
    %1291 = vmatpush1.msra.mxu0 0.0
    %1292 = vmatprep.subr.mxu0 0.0
    %1293 = vmatpush1.msra.mxu0 0.0
    %1294 = vmatprep.subr.mxu0 0.0
    %1295 = vmatpush1.msra.mxu0 0.0
    %1296 = vmatprep.subr.mxu0 0.0
    %1297 = vmatpush1.msra.mxu0 0.0
    %1298 = vmatprep.subr.mxu0 0.0
    %1299 = vmatpush1.msra.mxu0 0.0
    %1300 = vmatprep.subr.mxu0 0.0
    %1301 = vmatpush1.msra.mxu0 0.0
    %1302 = vmatprep.subr.mxu0 0.0
    %1303 = vmatpush1.msra.mxu0 0.0
    %1304 = vmatprep.mubr.f32.mxu0 0.0
    %1305 = vmatmul.mubr.f32.gmra.mrb[0].mxu0 %v1238
    %v1306 = vpop.f32.mrb[0].mxu0
    %v1307 = vadd.f32 0.0, %v1306
    %v1308 = vpop.f32.mrb[0].mxu0
    %1309 = vdwg.mxu0
    %v1310 = vadd.f32 %v923, %v1307
    %v1311 = vadd.f32 %v1310, %v62
    %1313 = vrot.lane.b32.xlu0 %v1311, 12
    %v1314 = vpop.permute.xlu0 %1313
    %vm1316 = vcmask 124000
    %1317 = vst.msk [vmem:[%s3] sm:$0x3] %vm1316, %v1314
    %v1318 = vsel %vm67, %v1311, 0
    %1320 = vmatprep.subr.mxu0 0.0
    %1321 = vmatpush1.msra.mxu0 %v151
    %1322 = vmatprep.subr.mxu0 0.0
    %1323 = vmatpush1.msra.mxu0 0.0
    %1324 = vmatprep.subr.mxu0 0.0
    %1325 = vmatpush1.msra.mxu0 0.0
    %1326 = vmatprep.subr.mxu0 0.0
    %1327 = vmatpush1.msra.mxu0 0.0
    %1328 = vmatprep.subr.mxu0 0.0
    %1329 = vmatpush1.msra.mxu0 0.0
    %1330 = vmatprep.subr.mxu0 0.0
    %1331 = vmatpush1.msra.mxu0 0.0
    %1332 = vmatprep.subr.mxu0 0.0
    %1333 = vmatpush1.msra.mxu0 0.0
    %1334 = vmatprep.subr.mxu0 0.0
    %1335 = vmatpush1.msra.mxu0 0.0
    %1336 = vmatprep.subr.mxu0 0.0
    %1337 = vmatpush1.msra.mxu0 0.0
    %1338 = vmatprep.subr.mxu0 0.0
    %1339 = vmatpush1.msra.mxu0 0.0
    %1340 = vmatprep.subr.mxu0 0.0
    %1341 = vmatpush1.msra.mxu0 0.0
    %1342 = vmatprep.subr.mxu0 0.0
    %1343 = vmatpush1.msra.mxu0 0.0
    %1344 = vmatprep.subr.mxu0 0.0
    %1345 = vmatpush1.msra.mxu0 0.0
    %1346 = vmatprep.subr.mxu0 0.0
    %1347 = vmatpush1.msra.mxu0 0.0
    %1348 = vmatprep.subr.mxu0 0.0
    %1349 = vmatpush1.msra.mxu0 0.0
    %1350 = vmatprep.subr.mxu0 0.0
    %1351 = vmatpush1.msra.mxu0 0.0
    %1352 = vmatprep.subr.mxu0 0.0
    %1353 = vmatpush1.msra.mxu0 0.0
    %1354 = vmatprep.subr.mxu0 0.0
    %1355 = vmatpush1.msra.mxu0 0.0
    %1356 = vmatprep.subr.mxu0 0.0
    %1357 = vmatpush1.msra.mxu0 0.0
    %1358 = vmatprep.subr.mxu0 0.0
    %1359 = vmatpush1.msra.mxu0 0.0
    %1360 = vmatprep.subr.mxu0 0.0
    %1361 = vmatpush1.msra.mxu0 0.0
    %1362 = vmatprep.subr.mxu0 0.0
    %1363 = vmatpush1.msra.mxu0 0.0
    %1364 = vmatprep.subr.mxu0 0.0
    %1365 = vmatpush1.msra.mxu0 0.0
    %1366 = vmatprep.subr.mxu0 0.0
    %1367 = vmatpush1.msra.mxu0 0.0
    %1368 = vmatprep.subr.mxu0 0.0
    %1369 = vmatpush1.msra.mxu0 0.0
    %1370 = vmatprep.subr.mxu0 0.0
    %1371 = vmatpush1.msra.mxu0 0.0
    %1372 = vmatprep.subr.mxu0 0.0
    %1373 = vmatpush1.msra.mxu0 0.0
    %1374 = vmatprep.subr.mxu0 0.0
    %1375 = vmatpush1.msra.mxu0 0.0
    %1376 = vmatprep.subr.mxu0 0.0
    %1377 = vmatpush1.msra.mxu0 0.0
    %1378 = vmatprep.subr.mxu0 0.0
    %1379 = vmatpush1.msra.mxu0 0.0
    %1380 = vmatprep.subr.mxu0 0.0
    %1381 = vmatpush1.msra.mxu0 0.0
    %1382 = vmatprep.subr.mxu0 0.0
    %1383 = vmatpush1.msra.mxu0 0.0
    %1384 = vmatprep.mubr.f32.mxu0 0.0
    %1385 = vmatmul.mubr.f32.gmra.mrb[0].mxu0 %v1318
    %v1386 = vpop.f32.mrb[0].mxu0
    %v1387 = vadd.f32 %v142, %v1386
    %v1388 = vpop.f32.mrb[0].mxu0
    %1389 = vdwg.mxu0
    %v1390 = vtanh.pop %v1387
    %v1392 = vsel %vm224, %v1390, 0
    %1394 = vmatprep.subr.mxu0 0.0
    %1395 = vmatpush1.msra.mxu0 %v35
    %1396 = vmatprep.subr.mxu0 0.0
    %1397 = vmatpush1.msra.mxu0 %v36
    %1398 = vmatprep.subr.mxu0 0.0
    %1399 = vmatpush1.msra.mxu0 %v37
    %1400 = vmatprep.subr.mxu0 0.0
    %1401 = vmatpush1.msra.mxu0 %v38
    %1402 = vmatprep.subr.mxu0 0.0
    %1403 = vmatpush1.msra.mxu0 0.0
    %1404 = vmatprep.subr.mxu0 0.0
    %1405 = vmatpush1.msra.mxu0 0.0
    %1406 = vmatprep.subr.mxu0 0.0
    %1407 = vmatpush1.msra.mxu0 0.0
    %1408 = vmatprep.subr.mxu0 0.0
    %1409 = vmatpush1.msra.mxu0 0.0
    %1410 = vmatprep.subr.mxu0 0.0
    %1411 = vmatpush1.msra.mxu0 0.0
    %1412 = vmatprep.subr.mxu0 0.0
    %1413 = vmatpush1.msra.mxu0 0.0
    %1414 = vmatprep.subr.mxu0 0.0
    %1415 = vmatpush1.msra.mxu0 0.0
    %1416 = vmatprep.subr.mxu0 0.0
    %1417 = vmatpush1.msra.mxu0 0.0
    %1418 = vmatprep.subr.mxu0 0.0
    %1419 = vmatpush1.msra.mxu0 0.0
    %1420 = vmatprep.subr.mxu0 0.0
    %1421 = vmatpush1.msra.mxu0 0.0
    %1422 = vmatprep.subr.mxu0 0.0
    %1423 = vmatpush1.msra.mxu0 0.0
    %1424 = vmatprep.subr.mxu0 0.0
    %1425 = vmatpush1.msra.mxu0 0.0
    %1426 = vmatprep.subr.mxu0 0.0
    %1427 = vmatpush1.msra.mxu0 0.0
    %1428 = vmatprep.subr.mxu0 0.0
    %1429 = vmatpush1.msra.mxu0 0.0
    %1430 = vmatprep.subr.mxu0 0.0
    %1431 = vmatpush1.msra.mxu0 0.0
    %1432 = vmatprep.subr.mxu0 0.0
    %1433 = vmatpush1.msra.mxu0 0.0
    %1434 = vmatprep.subr.mxu0 0.0
    %1435 = vmatpush1.msra.mxu0 0.0
    %1436 = vmatprep.subr.mxu0 0.0
    %1437 = vmatpush1.msra.mxu0 0.0
    %1438 = vmatprep.subr.mxu0 0.0
    %1439 = vmatpush1.msra.mxu0 0.0
    %1440 = vmatprep.subr.mxu0 0.0
    %1441 = vmatpush1.msra.mxu0 0.0
    %1442 = vmatprep.subr.mxu0 0.0
    %1443 = vmatpush1.msra.mxu0 0.0
    %1444 = vmatprep.subr.mxu0 0.0
    %1445 = vmatpush1.msra.mxu0 0.0
    %1446 = vmatprep.subr.mxu0 0.0
    %1447 = vmatpush1.msra.mxu0 0.0
    %1448 = vmatprep.subr.mxu0 0.0
    %1449 = vmatpush1.msra.mxu0 0.0
    %1450 = vmatprep.subr.mxu0 0.0
    %1451 = vmatpush1.msra.mxu0 0.0
    %1452 = vmatprep.subr.mxu0 0.0
    %1453 = vmatpush1.msra.mxu0 0.0
    %1454 = vmatprep.subr.mxu0 0.0
    %1455 = vmatpush1.msra.mxu0 0.0
    %1456 = vmatprep.subr.mxu0 0.0
    %1457 = vmatpush1.msra.mxu0 0.0
    %1458 = vmatprep.mubr.f32.mxu0 0.0
    %1459 = vmatmul.mubr.f32.gmra.mrb[0].mxu0 %v1392
    %v1460 = vpop.f32.mrb[0].mxu0
    %v1461 = vadd.f32 %v52, %v1460
    %v1462 = vpop.f32.mrb[0].mxu0
    %1463 = vdwg.mxu0
    %v1464 = vtanh.pop %v1461
    %v1466 = vsel %vm224, %v1464, 0
    %1468 = vmatprep.subr.mxu0 0.0
    %1469 = vmatpush1.msra.mxu0 %v39
    %1470 = vmatprep.subr.mxu0 0.0
    %1471 = vmatpush1.msra.mxu0 %v40
    %1472 = vmatprep.subr.mxu0 0.0
    %1473 = vmatpush1.msra.mxu0 %v41
    %1474 = vmatprep.subr.mxu0 0.0
    %1475 = vmatpush1.msra.mxu0 %v42
    %1476 = vmatprep.subr.mxu0 0.0
    %1477 = vmatpush1.msra.mxu0 0.0
    %1478 = vmatprep.subr.mxu0 0.0
    %1479 = vmatpush1.msra.mxu0 0.0
    %1480 = vmatprep.subr.mxu0 0.0
    %1481 = vmatpush1.msra.mxu0 0.0
    %1482 = vmatprep.subr.mxu0 0.0
    %1483 = vmatpush1.msra.mxu0 0.0
    %1484 = vmatprep.subr.mxu0 0.0
    %1485 = vmatpush1.msra.mxu0 0.0
    %1486 = vmatprep.subr.mxu0 0.0
    %1487 = vmatpush1.msra.mxu0 0.0
    %1488 = vmatprep.subr.mxu0 0.0
    %1489 = vmatpush1.msra.mxu0 0.0
    %1490 = vmatprep.subr.mxu0 0.0
    %1491 = vmatpush1.msra.mxu0 0.0
    %1492 = vmatprep.subr.mxu0 0.0
    %1493 = vmatpush1.msra.mxu0 0.0
    %1494 = vmatprep.subr.mxu0 0.0
    %1495 = vmatpush1.msra.mxu0 0.0
    %1496 = vmatprep.subr.mxu0 0.0
    %1497 = vmatpush1.msra.mxu0 0.0
    %1498 = vmatprep.subr.mxu0 0.0
    %1499 = vmatpush1.msra.mxu0 0.0
    %1500 = vmatprep.subr.mxu0 0.0
    %1501 = vmatpush1.msra.mxu0 0.0
    %1502 = vmatprep.subr.mxu0 0.0
    %1503 = vmatpush1.msra.mxu0 0.0
    %1504 = vmatprep.subr.mxu0 0.0
    %1505 = vmatpush1.msra.mxu0 0.0
    %1506 = vmatprep.subr.mxu0 0.0
    %1507 = vmatpush1.msra.mxu0 0.0
    %1508 = vmatprep.subr.mxu0 0.0
    %1509 = vmatpush1.msra.mxu0 0.0
    %1510 = vmatprep.subr.mxu0 0.0
    %1511 = vmatpush1.msra.mxu0 0.0
    %1512 = vmatprep.subr.mxu0 0.0
    %1513 = vmatpush1.msra.mxu0 0.0
    %1514 = vmatprep.subr.mxu0 0.0
    %1515 = vmatpush1.msra.mxu0 0.0
    %1516 = vmatprep.subr.mxu0 0.0
    %1517 = vmatpush1.msra.mxu0 0.0
    %1518 = vmatprep.subr.mxu0 0.0
    %1519 = vmatpush1.msra.mxu0 0.0
    %1520 = vmatprep.subr.mxu0 0.0
    %1521 = vmatpush1.msra.mxu0 0.0
    %1522 = vmatprep.subr.mxu0 0.0
    %1523 = vmatpush1.msra.mxu0 0.0
    %1524 = vmatprep.subr.mxu0 0.0
    %1525 = vmatpush1.msra.mxu0 0.0
    %1526 = vmatprep.subr.mxu0 0.0
    %1527 = vmatpush1.msra.mxu0 0.0
    %1528 = vmatprep.subr.mxu0 0.0
    %1529 = vmatpush1.msra.mxu0 0.0
    %1530 = vmatprep.subr.mxu0 0.0
    %1531 = vmatpush1.msra.mxu0 0.0
    %1532 = vmatprep.mubr.f32.mxu0 0.0
    %1533 = vmatmul.mubr.f32.gmra.mrb[0].mxu0 %v1466
    %v1534 = vpop.f32.mrb[0].mxu0
    %v1535 = vadd.f32 %v57, %v1534
    %v1536 = vpop.f32.mrb[0].mxu0
    %1537 = vdwg.mxu0
    %v1538 = vtanh.pop %v1535
    %1540 = vrot.lane.b32.xlu0 %v1538, 6
    %v1541 = vpop.permute.xlu0 %1540
    %vm1543 = vcmask 58416
    %1544 = vst.msk [vmem:[%s4] sm:$0x3] %vm1543, %v1541
    %v1545 = vsel %vm375, %v1538, 0
    %1547 = vmatprep.subr.mxu0 0.0
    %1548 = vmatpush1.msra.mxu0 %v381
    %1549 = vmatprep.subr.mxu0 0.0
    %1550 = vmatpush1.msra.mxu0 0.0
    %1551 = vmatprep.subr.mxu0 0.0
    %1552 = vmatpush1.msra.mxu0 0.0
    %1553 = vmatprep.subr.mxu0 0.0
    %1554 = vmatpush1.msra.mxu0 0.0
    %1555 = vmatprep.subr.mxu0 0.0
    %1556 = vmatpush1.msra.mxu0 0.0
    %1557 = vmatprep.subr.mxu0 0.0
    %1558 = vmatpush1.msra.mxu0 0.0
    %1559 = vmatprep.subr.mxu0 0.0
    %1560 = vmatpush1.msra.mxu0 0.0
    %1561 = vmatprep.subr.mxu0 0.0
    %1562 = vmatpush1.msra.mxu0 0.0
    %1563 = vmatprep.subr.mxu0 0.0
    %1564 = vmatpush1.msra.mxu0 0.0
    %1565 = vmatprep.subr.mxu0 0.0
    %1566 = vmatpush1.msra.mxu0 0.0
    %1567 = vmatprep.subr.mxu0 0.0
    %1568 = vmatpush1.msra.mxu0 0.0
    %1569 = vmatprep.subr.mxu0 0.0
    %1570 = vmatpush1.msra.mxu0 0.0
    %1571 = vmatprep.subr.mxu0 0.0
    %1572 = vmatpush1.msra.mxu0 0.0
    %1573 = vmatprep.subr.mxu0 0.0
    %1574 = vmatpush1.msra.mxu0 0.0
    %1575 = vmatprep.subr.mxu0 0.0
    %1576 = vmatpush1.msra.mxu0 0.0
    %1577 = vmatprep.subr.mxu0 0.0
    %1578 = vmatpush1.msra.mxu0 0.0
    %1579 = vmatprep.subr.mxu0 0.0
    %1580 = vmatpush1.msra.mxu0 0.0
    %1581 = vmatprep.subr.mxu0 0.0
    %1582 = vmatpush1.msra.mxu0 0.0
    %1583 = vmatprep.subr.mxu0 0.0
    %1584 = vmatpush1.msra.mxu0 0.0
    %1585 = vmatprep.subr.mxu0 0.0
    %1586 = vmatpush1.msra.mxu0 0.0
    %1587 = vmatprep.subr.mxu0 0.0
    %1588 = vmatpush1.msra.mxu0 0.0
    %1589 = vmatprep.subr.mxu0 0.0
    %1590 = vmatpush1.msra.mxu0 0.0
    %1591 = vmatprep.subr.mxu0 0.0
    %1592 = vmatpush1.msra.mxu0 0.0
    %1593 = vmatprep.subr.mxu0 0.0
    %1594 = vmatpush1.msra.mxu0 0.0
    %1595 = vmatprep.subr.mxu0 0.0
    %1596 = vmatpush1.msra.mxu0 0.0
    %1597 = vmatprep.subr.mxu0 0.0
    %1598 = vmatpush1.msra.mxu0 0.0
    %1599 = vmatprep.subr.mxu0 0.0
    %1600 = vmatpush1.msra.mxu0 0.0
    %1601 = vmatprep.subr.mxu0 0.0
    %1602 = vmatpush1.msra.mxu0 0.0
    %1603 = vmatprep.subr.mxu0 0.0
    %1604 = vmatpush1.msra.mxu0 0.0
    %1605 = vmatprep.subr.mxu0 0.0
    %1606 = vmatpush1.msra.mxu0 0.0
    %1607 = vmatprep.subr.mxu0 0.0
    %1608 = vmatpush1.msra.mxu0 0.0
    %1609 = vmatprep.subr.mxu0 0.0
    %1610 = vmatpush1.msra.mxu0 0.0
    %1611 = vmatprep.mubr.f32.mxu0 0.0
    %1612 = vmatmul.mubr.f32.gmra.mrb[0].mxu0 %v1545
    %v1613 = vpop.f32.mrb[0].mxu0
    %v1614 = vadd.f32 0.0, %v1613
    %v1615 = vpop.f32.mrb[0].mxu0
    %1616 = vdwg.mxu0
    %1618 = vrot.lane.b32.xlu0 %v1614, 32
    %v1619 = vpop.permute.xlu0 %1618
    %v1621 = vadd.f32 %v1387, %v1619
    %v1622 = vtanh.pop %v1621
    %1624 = vrot.lane.b32.xlu0 %v1622, 96
    %v1625 = vpop.permute.xlu0 %1624
    %v1626 = vsel %vm224, %v1625, 0
    %1628 = vmatprep.subr.mxu0 0.0
    %1629 = vmatpush1.msra.mxu0 %v44
    %1630 = vmatprep.subr.mxu0 0.0
    %1631 = vmatpush1.msra.mxu0 %v45
    %1632 = vmatprep.subr.mxu0 0.0
    %1633 = vmatpush1.msra.mxu0 %v46
    %1634 = vmatprep.subr.mxu0 0.0
    %1635 = vmatpush1.msra.mxu0 %v47
    %1636 = vmatprep.subr.mxu0 0.0
    %1637 = vmatpush1.msra.mxu0 0.0
    %1638 = vmatprep.subr.mxu0 0.0
    %1639 = vmatpush1.msra.mxu0 0.0
    %1640 = vmatprep.subr.mxu0 0.0
    %1641 = vmatpush1.msra.mxu0 0.0
    %1642 = vmatprep.subr.mxu0 0.0
    %1643 = vmatpush1.msra.mxu0 0.0
    %1644 = vmatprep.subr.mxu0 0.0
    %1645 = vmatpush1.msra.mxu0 0.0
    %1646 = vmatprep.subr.mxu0 0.0
    %1647 = vmatpush1.msra.mxu0 0.0
    %1648 = vmatprep.subr.mxu0 0.0
    %1649 = vmatpush1.msra.mxu0 0.0
    %1650 = vmatprep.subr.mxu0 0.0
    %1651 = vmatpush1.msra.mxu0 0.0
    %1652 = vmatprep.subr.mxu0 0.0
    %1653 = vmatpush1.msra.mxu0 0.0
    %1654 = vmatprep.subr.mxu0 0.0
    %1655 = vmatpush1.msra.mxu0 0.0
    %1656 = vmatprep.subr.mxu0 0.0
    %1657 = vmatpush1.msra.mxu0 0.0
    %1658 = vmatprep.subr.mxu0 0.0
    %1659 = vmatpush1.msra.mxu0 0.0
    %1660 = vmatprep.subr.mxu0 0.0
    %1661 = vmatpush1.msra.mxu0 0.0
    %1662 = vmatprep.subr.mxu0 0.0
    %1663 = vmatpush1.msra.mxu0 0.0
    %1664 = vmatprep.subr.mxu0 0.0
    %1665 = vmatpush1.msra.mxu0 0.0
    %1666 = vmatprep.subr.mxu0 0.0
    %1667 = vmatpush1.msra.mxu0 0.0
    %1668 = vmatprep.subr.mxu0 0.0
    %1669 = vmatpush1.msra.mxu0 0.0
    %1670 = vmatprep.subr.mxu0 0.0
    %1671 = vmatpush1.msra.mxu0 0.0
    %1672 = vmatprep.subr.mxu0 0.0
    %1673 = vmatpush1.msra.mxu0 0.0
    %1674 = vmatprep.subr.mxu0 0.0
    %1675 = vmatpush1.msra.mxu0 0.0
    %1676 = vmatprep.subr.mxu0 0.0
    %1677 = vmatpush1.msra.mxu0 0.0
    %1678 = vmatprep.subr.mxu0 0.0
    %1679 = vmatpush1.msra.mxu0 0.0
    %1680 = vmatprep.subr.mxu0 0.0
    %1681 = vmatpush1.msra.mxu0 0.0
    %1682 = vmatprep.subr.mxu0 0.0
    %1683 = vmatpush1.msra.mxu0 0.0
    %1684 = vmatprep.subr.mxu0 0.0
    %1685 = vmatpush1.msra.mxu0 0.0
    %1686 = vmatprep.subr.mxu0 0.0
    %1687 = vmatpush1.msra.mxu0 0.0
    %1688 = vmatprep.subr.mxu0 0.0
    %1689 = vmatpush1.msra.mxu0 0.0
    %1690 = vmatprep.subr.mxu0 0.0
    %1691 = vmatpush1.msra.mxu0 0.0
    %1692 = vmatprep.mubr.f32.mxu0 0.0
    %1693 = vmatmul.mubr.f32.gmra.mrb[0].mxu0 %v1626
    %v1694 = vpop.f32.mrb[0].mxu0
    %v1695 = vadd.f32 0.0, %v1694
    %v1696 = vpop.f32.mrb[0].mxu0
    %1697 = vdwg.mxu0
    %v1698 = vadd.f32 %v1311, %v1695
    %v1699 = vadd.f32 %v1698, %v62
    %1701 = vrot.lane.b32.xlu0 %v1699, 16
    %v1702 = vpop.permute.xlu0 %1701
    %vm1704 = vcmask 156800
    %1705 = vst.msk [vmem:[%s3] sm:$0x3] %vm1704, %v1702
    %v1706 = vsel %vm67, %v1699, 0
    %1708 = vmatprep.subr.mxu0 0.0
    %1709 = vmatpush1.msra.mxu0 %v151
    %1710 = vmatprep.subr.mxu0 0.0
    %1711 = vmatpush1.msra.mxu0 0.0
    %1712 = vmatprep.subr.mxu0 0.0
    %1713 = vmatpush1.msra.mxu0 0.0
    %1714 = vmatprep.subr.mxu0 0.0
    %1715 = vmatpush1.msra.mxu0 0.0
    %1716 = vmatprep.subr.mxu0 0.0
    %1717 = vmatpush1.msra.mxu0 0.0
    %1718 = vmatprep.subr.mxu0 0.0
    %1719 = vmatpush1.msra.mxu0 0.0
    %1720 = vmatprep.subr.mxu0 0.0
    %1721 = vmatpush1.msra.mxu0 0.0
    %1722 = vmatprep.subr.mxu0 0.0
    %1723 = vmatpush1.msra.mxu0 0.0
    %1724 = vmatprep.subr.mxu0 0.0
    %1725 = vmatpush1.msra.mxu0 0.0
    %1726 = vmatprep.subr.mxu0 0.0
    %1727 = vmatpush1.msra.mxu0 0.0
    %1728 = vmatprep.subr.mxu0 0.0
    %1729 = vmatpush1.msra.mxu0 0.0
    %1730 = vmatprep.subr.mxu0 0.0
    %1731 = vmatpush1.msra.mxu0 0.0
    %1732 = vmatprep.subr.mxu0 0.0
    %1733 = vmatpush1.msra.mxu0 0.0
    %1734 = vmatprep.subr.mxu0 0.0
    %1735 = vmatpush1.msra.mxu0 0.0
    %1736 = vmatprep.subr.mxu0 0.0
    %1737 = vmatpush1.msra.mxu0 0.0
    %1738 = vmatprep.subr.mxu0 0.0
    %1739 = vmatpush1.msra.mxu0 0.0
    %1740 = vmatprep.subr.mxu0 0.0
    %1741 = vmatpush1.msra.mxu0 0.0
    %1742 = vmatprep.subr.mxu0 0.0
    %1743 = vmatpush1.msra.mxu0 0.0
    %1744 = vmatprep.subr.mxu0 0.0
    %1745 = vmatpush1.msra.mxu0 0.0
    %1746 = vmatprep.subr.mxu0 0.0
    %1747 = vmatpush1.msra.mxu0 0.0
    %1748 = vmatprep.subr.mxu0 0.0
    %1749 = vmatpush1.msra.mxu0 0.0
    %1750 = vmatprep.subr.mxu0 0.0
    %1751 = vmatpush1.msra.mxu0 0.0
    %1752 = vmatprep.subr.mxu0 0.0
    %1753 = vmatpush1.msra.mxu0 0.0
    %1754 = vmatprep.subr.mxu0 0.0
    %1755 = vmatpush1.msra.mxu0 0.0
    %1756 = vmatprep.subr.mxu0 0.0
    %1757 = vmatpush1.msra.mxu0 0.0
    %1758 = vmatprep.subr.mxu0 0.0
    %1759 = vmatpush1.msra.mxu0 0.0
    %1760 = vmatprep.subr.mxu0 0.0
    %1761 = vmatpush1.msra.mxu0 0.0
    %1762 = vmatprep.subr.mxu0 0.0
    %1763 = vmatpush1.msra.mxu0 0.0
    %1764 = vmatprep.subr.mxu0 0.0
    %1765 = vmatpush1.msra.mxu0 0.0
    %1766 = vmatprep.subr.mxu0 0.0
    %1767 = vmatpush1.msra.mxu0 0.0
    %1768 = vmatprep.subr.mxu0 0.0
    %1769 = vmatpush1.msra.mxu0 0.0
    %1770 = vmatprep.subr.mxu0 0.0
    %1771 = vmatpush1.msra.mxu0 0.0
    %1772 = vmatprep.mubr.f32.mxu0 0.0
    %1773 = vmatmul.mubr.f32.gmra.mrb[0].mxu0 %v1706
    %v1774 = vpop.f32.mrb[0].mxu0
    %v1775 = vadd.f32 %v142, %v1774
    %v1776 = vpop.f32.mrb[0].mxu0
    %1777 = vdwg.mxu0
    %v1778 = vtanh.pop %v1775
    %v1780 = vsel %vm224, %v1778, 0
    %1782 = vmatprep.subr.mxu0 0.0
    %1783 = vmatpush1.msra.mxu0 %v35
    %1784 = vmatprep.subr.mxu0 0.0
    %1785 = vmatpush1.msra.mxu0 %v36
    %1786 = vmatprep.subr.mxu0 0.0
    %1787 = vmatpush1.msra.mxu0 %v37
    %1788 = vmatprep.subr.mxu0 0.0
    %1789 = vmatpush1.msra.mxu0 %v38
    %1790 = vmatprep.subr.mxu0 0.0
    %1791 = vmatpush1.msra.mxu0 0.0
    %1792 = vmatprep.subr.mxu0 0.0
    %1793 = vmatpush1.msra.mxu0 0.0
    %1794 = vmatprep.subr.mxu0 0.0
    %1795 = vmatpush1.msra.mxu0 0.0
    %1796 = vmatprep.subr.mxu0 0.0
    %1797 = vmatpush1.msra.mxu0 0.0
    %1798 = vmatprep.subr.mxu0 0.0
    %1799 = vmatpush1.msra.mxu0 0.0
    %1800 = vmatprep.subr.mxu0 0.0
    %1801 = vmatpush1.msra.mxu0 0.0
    %1802 = vmatprep.subr.mxu0 0.0
    %1803 = vmatpush1.msra.mxu0 0.0
    %1804 = vmatprep.subr.mxu0 0.0
    %1805 = vmatpush1.msra.mxu0 0.0
    %1806 = vmatprep.subr.mxu0 0.0
    %1807 = vmatpush1.msra.mxu0 0.0
    %1808 = vmatprep.subr.mxu0 0.0
    %1809 = vmatpush1.msra.mxu0 0.0
    %1810 = vmatprep.subr.mxu0 0.0
    %1811 = vmatpush1.msra.mxu0 0.0
    %1812 = vmatprep.subr.mxu0 0.0
    %1813 = vmatpush1.msra.mxu0 0.0
    %1814 = vmatprep.subr.mxu0 0.0
    %1815 = vmatpush1.msra.mxu0 0.0
    %1816 = vmatprep.subr.mxu0 0.0
    %1817 = vmatpush1.msra.mxu0 0.0
    %1818 = vmatprep.subr.mxu0 0.0
    %1819 = vmatpush1.msra.mxu0 0.0
    %1820 = vmatprep.subr.mxu0 0.0
    %1821 = vmatpush1.msra.mxu0 0.0
    %1822 = vmatprep.subr.mxu0 0.0
    %1823 = vmatpush1.msra.mxu0 0.0
    %1824 = vmatprep.subr.mxu0 0.0
    %1825 = vmatpush1.msra.mxu0 0.0
    %1826 = vmatprep.subr.mxu0 0.0
    %1827 = vmatpush1.msra.mxu0 0.0
    %1828 = vmatprep.subr.mxu0 0.0
    %1829 = vmatpush1.msra.mxu0 0.0
    %1830 = vmatprep.subr.mxu0 0.0
    %1831 = vmatpush1.msra.mxu0 0.0
    %1832 = vmatprep.subr.mxu0 0.0
    %1833 = vmatpush1.msra.mxu0 0.0
    %1834 = vmatprep.subr.mxu0 0.0
    %1835 = vmatpush1.msra.mxu0 0.0
    %1836 = vmatprep.subr.mxu0 0.0
    %1837 = vmatpush1.msra.mxu0 0.0
    %1838 = vmatprep.subr.mxu0 0.0
    %1839 = vmatpush1.msra.mxu0 0.0
    %1840 = vmatprep.subr.mxu0 0.0
    %1841 = vmatpush1.msra.mxu0 0.0
    %1842 = vmatprep.subr.mxu0 0.0
    %1843 = vmatpush1.msra.mxu0 0.0
    %1844 = vmatprep.subr.mxu0 0.0
    %1845 = vmatpush1.msra.mxu0 0.0
    %1846 = vmatprep.mubr.f32.mxu0 0.0
    %1847 = vmatmul.mubr.f32.gmra.mrb[0].mxu0 %v1780
    %v1848 = vpop.f32.mrb[0].mxu0
    %v1849 = vadd.f32 %v52, %v1848
    %v1850 = vpop.f32.mrb[0].mxu0
    %1851 = vdwg.mxu0
    %v1852 = vtanh.pop %v1849
    %v1854 = vsel %vm224, %v1852, 0
    %1856 = vmatprep.subr.mxu0 0.0
    %1857 = vmatpush1.msra.mxu0 %v39
    %1858 = vmatprep.subr.mxu0 0.0
    %1859 = vmatpush1.msra.mxu0 %v40
    %1860 = vmatprep.subr.mxu0 0.0
    %1861 = vmatpush1.msra.mxu0 %v41
    %1862 = vmatprep.subr.mxu0 0.0
    %1863 = vmatpush1.msra.mxu0 %v42
    %1864 = vmatprep.subr.mxu0 0.0
    %1865 = vmatpush1.msra.mxu0 0.0
    %1866 = vmatprep.subr.mxu0 0.0
    %1867 = vmatpush1.msra.mxu0 0.0
    %1868 = vmatprep.subr.mxu0 0.0
    %1869 = vmatpush1.msra.mxu0 0.0
    %1870 = vmatprep.subr.mxu0 0.0
    %1871 = vmatpush1.msra.mxu0 0.0
    %1872 = vmatprep.subr.mxu0 0.0
    %1873 = vmatpush1.msra.mxu0 0.0
    %1874 = vmatprep.subr.mxu0 0.0
    %1875 = vmatpush1.msra.mxu0 0.0
    %1876 = vmatprep.subr.mxu0 0.0
    %1877 = vmatpush1.msra.mxu0 0.0
    %1878 = vmatprep.subr.mxu0 0.0
    %1879 = vmatpush1.msra.mxu0 0.0
    %1880 = vmatprep.subr.mxu0 0.0
    %1881 = vmatpush1.msra.mxu0 0.0
    %1882 = vmatprep.subr.mxu0 0.0
    %1883 = vmatpush1.msra.mxu0 0.0
    %1884 = vmatprep.subr.mxu0 0.0
    %1885 = vmatpush1.msra.mxu0 0.0
    %1886 = vmatprep.subr.mxu0 0.0
    %1887 = vmatpush1.msra.mxu0 0.0
    %1888 = vmatprep.subr.mxu0 0.0
    %1889 = vmatpush1.msra.mxu0 0.0
    %1890 = vmatprep.subr.mxu0 0.0
    %1891 = vmatpush1.msra.mxu0 0.0
    %1892 = vmatprep.subr.mxu0 0.0
    %1893 = vmatpush1.msra.mxu0 0.0
    %1894 = vmatprep.subr.mxu0 0.0
    %1895 = vmatpush1.msra.mxu0 0.0
    %1896 = vmatprep.subr.mxu0 0.0
    %1897 = vmatpush1.msra.mxu0 0.0
    %1898 = vmatprep.subr.mxu0 0.0
    %1899 = vmatpush1.msra.mxu0 0.0
    %1900 = vmatprep.subr.mxu0 0.0
    %1901 = vmatpush1.msra.mxu0 0.0
    %1902 = vmatprep.subr.mxu0 0.0
    %1903 = vmatpush1.msra.mxu0 0.0
    %1904 = vmatprep.subr.mxu0 0.0
    %1905 = vmatpush1.msra.mxu0 0.0
    %1906 = vmatprep.subr.mxu0 0.0
    %1907 = vmatpush1.msra.mxu0 0.0
    %1908 = vmatprep.subr.mxu0 0.0
    %1909 = vmatpush1.msra.mxu0 0.0
    %1910 = vmatprep.subr.mxu0 0.0
    %1911 = vmatpush1.msra.mxu0 0.0
    %1912 = vmatprep.subr.mxu0 0.0
    %1913 = vmatpush1.msra.mxu0 0.0
    %1914 = vmatprep.subr.mxu0 0.0
    %1915 = vmatpush1.msra.mxu0 0.0
    %1916 = vmatprep.subr.mxu0 0.0
    %1917 = vmatpush1.msra.mxu0 0.0
    %1918 = vmatprep.subr.mxu0 0.0
    %1919 = vmatpush1.msra.mxu0 0.0
    %1920 = vmatprep.mubr.f32.mxu0 0.0
    %1921 = vmatmul.mubr.f32.gmra.mrb[0].mxu0 %v1854
    %v1922 = vpop.f32.mrb[0].mxu0
    %v1923 = vadd.f32 %v57, %v1922
    %v1924 = vpop.f32.mrb[0].mxu0
    %1925 = vdwg.mxu0
    %v1926 = vtanh.pop %v1923
    %1928 = vrot.lane.b32.xlu0 %v1926, 8
    %v1929 = vpop.permute.xlu0 %1928
    %vm1931 = vcmask 74816
    %1932 = vst.msk [vmem:[%s4] sm:$0x3] %vm1931, %v1929
    %v1933 = vsel %vm375, %v1926, 0
    %1935 = vmatprep.subr.mxu0 0.0
    %1936 = vmatpush1.msra.mxu0 %v381
    %1937 = vmatprep.subr.mxu0 0.0
    %1938 = vmatpush1.msra.mxu0 0.0
    %1939 = vmatprep.subr.mxu0 0.0
    %1940 = vmatpush1.msra.mxu0 0.0
    %1941 = vmatprep.subr.mxu0 0.0
    %1942 = vmatpush1.msra.mxu0 0.0
    %1943 = vmatprep.subr.mxu0 0.0
    %1944 = vmatpush1.msra.mxu0 0.0
    %1945 = vmatprep.subr.mxu0 0.0
    %1946 = vmatpush1.msra.mxu0 0.0
    %1947 = vmatprep.subr.mxu0 0.0
    %1948 = vmatpush1.msra.mxu0 0.0
    %1949 = vmatprep.subr.mxu0 0.0
    %1950 = vmatpush1.msra.mxu0 0.0
    %1951 = vmatprep.subr.mxu0 0.0
    %1952 = vmatpush1.msra.mxu0 0.0
    %1953 = vmatprep.subr.mxu0 0.0
    %1954 = vmatpush1.msra.mxu0 0.0
    %1955 = vmatprep.subr.mxu0 0.0
    %1956 = vmatpush1.msra.mxu0 0.0
    %1957 = vmatprep.subr.mxu0 0.0
    %1958 = vmatpush1.msra.mxu0 0.0
    %1959 = vmatprep.subr.mxu0 0.0
    %1960 = vmatpush1.msra.mxu0 0.0
    %1961 = vmatprep.subr.mxu0 0.0
    %1962 = vmatpush1.msra.mxu0 0.0
    %1963 = vmatprep.subr.mxu0 0.0
    %1964 = vmatpush1.msra.mxu0 0.0
    %1965 = vmatprep.subr.mxu0 0.0
    %1966 = vmatpush1.msra.mxu0 0.0
    %1967 = vmatprep.subr.mxu0 0.0
    %1968 = vmatpush1.msra.mxu0 0.0
    %1969 = vmatprep.subr.mxu0 0.0
    %1970 = vmatpush1.msra.mxu0 0.0
    %1971 = vmatprep.subr.mxu0 0.0
    %1972 = vmatpush1.msra.mxu0 0.0
    %1973 = vmatprep.subr.mxu0 0.0
    %1974 = vmatpush1.msra.mxu0 0.0
    %1975 = vmatprep.subr.mxu0 0.0
    %1976 = vmatpush1.msra.mxu0 0.0
    %1977 = vmatprep.subr.mxu0 0.0
    %1978 = vmatpush1.msra.mxu0 0.0
    %1979 = vmatprep.subr.mxu0 0.0
    %1980 = vmatpush1.msra.mxu0 0.0
    %1981 = vmatprep.subr.mxu0 0.0
    %1982 = vmatpush1.msra.mxu0 0.0
    %1983 = vmatprep.subr.mxu0 0.0
    %1984 = vmatpush1.msra.mxu0 0.0
    %1985 = vmatprep.subr.mxu0 0.0
    %1986 = vmatpush1.msra.mxu0 0.0
    %1987 = vmatprep.subr.mxu0 0.0
    %1988 = vmatpush1.msra.mxu0 0.0
    %1989 = vmatprep.subr.mxu0 0.0
    %1990 = vmatpush1.msra.mxu0 0.0
    %1991 = vmatprep.subr.mxu0 0.0
    %1992 = vmatpush1.msra.mxu0 0.0
    %1993 = vmatprep.subr.mxu0 0.0
    %1994 = vmatpush1.msra.mxu0 0.0
    %1995 = vmatprep.subr.mxu0 0.0
    %1996 = vmatpush1.msra.mxu0 0.0
    %1997 = vmatprep.subr.mxu0 0.0
    %1998 = vmatpush1.msra.mxu0 0.0
    %1999 = vmatprep.mubr.f32.mxu0 0.0
    %2000 = vmatmul.mubr.f32.gmra.mrb[0].mxu0 %v1933
    %v2001 = vpop.f32.mrb[0].mxu0
    %v2002 = vadd.f32 0.0, %v2001
    %v2003 = vpop.f32.mrb[0].mxu0
    %2004 = vdwg.mxu0
    %2006 = vrot.lane.b32.xlu0 %v2002, 32
    %v2007 = vpop.permute.xlu0 %2006
    %v2009 = vadd.f32 %v1775, %v2007
    %v2010 = vtanh.pop %v2009
    %2012 = vrot.lane.b32.xlu0 %v2010, 96
    %v2013 = vpop.permute.xlu0 %2012
    %v2014 = vsel %vm224, %v2013, 0
    %2016 = vmatprep.subr.mxu0 0.0
    %2017 = vmatpush1.msra.mxu0 %v44
    %2018 = vmatprep.subr.mxu0 0.0
    %2019 = vmatpush1.msra.mxu0 %v45
    %2020 = vmatprep.subr.mxu0 0.0
    %2021 = vmatpush1.msra.mxu0 %v46
    %2022 = vmatprep.subr.mxu0 0.0
    %2023 = vmatpush1.msra.mxu0 %v47
    %2024 = vmatprep.subr.mxu0 0.0
    %2025 = vmatpush1.msra.mxu0 0.0
    %2026 = vmatprep.subr.mxu0 0.0
    %2027 = vmatpush1.msra.mxu0 0.0
    %2028 = vmatprep.subr.mxu0 0.0
    %2029 = vmatpush1.msra.mxu0 0.0
    %2030 = vmatprep.subr.mxu0 0.0
    %2031 = vmatpush1.msra.mxu0 0.0
    %2032 = vmatprep.subr.mxu0 0.0
    %2033 = vmatpush1.msra.mxu0 0.0
    %2034 = vmatprep.subr.mxu0 0.0
    %2035 = vmatpush1.msra.mxu0 0.0
    %2036 = vmatprep.subr.mxu0 0.0
    %2037 = vmatpush1.msra.mxu0 0.0
    %2038 = vmatprep.subr.mxu0 0.0
    %2039 = vmatpush1.msra.mxu0 0.0
    %2040 = vmatprep.subr.mxu0 0.0
    %2041 = vmatpush1.msra.mxu0 0.0
    %2042 = vmatprep.subr.mxu0 0.0
    %2043 = vmatpush1.msra.mxu0 0.0
    %2044 = vmatprep.subr.mxu0 0.0
    %2045 = vmatpush1.msra.mxu0 0.0
    %2046 = vmatprep.subr.mxu0 0.0
    %2047 = vmatpush1.msra.mxu0 0.0
    %2048 = vmatprep.subr.mxu0 0.0
    %2049 = vmatpush1.msra.mxu0 0.0
    %2050 = vmatprep.subr.mxu0 0.0
    %2051 = vmatpush1.msra.mxu0 0.0
    %2052 = vmatprep.subr.mxu0 0.0
    %2053 = vmatpush1.msra.mxu0 0.0
    %2054 = vmatprep.subr.mxu0 0.0
    %2055 = vmatpush1.msra.mxu0 0.0
    %2056 = vmatprep.subr.mxu0 0.0
    %2057 = vmatpush1.msra.mxu0 0.0
    %2058 = vmatprep.subr.mxu0 0.0
    %2059 = vmatpush1.msra.mxu0 0.0
    %2060 = vmatprep.subr.mxu0 0.0
    %2061 = vmatpush1.msra.mxu0 0.0
    %2062 = vmatprep.subr.mxu0 0.0
    %2063 = vmatpush1.msra.mxu0 0.0
    %2064 = vmatprep.subr.mxu0 0.0
    %2065 = vmatpush1.msra.mxu0 0.0
    %2066 = vmatprep.subr.mxu0 0.0
    %2067 = vmatpush1.msra.mxu0 0.0
    %2068 = vmatprep.subr.mxu0 0.0
    %2069 = vmatpush1.msra.mxu0 0.0
    %2070 = vmatprep.subr.mxu0 0.0
    %2071 = vmatpush1.msra.mxu0 0.0
    %2072 = vmatprep.subr.mxu0 0.0
    %2073 = vmatpush1.msra.mxu0 0.0
    %2074 = vmatprep.subr.mxu0 0.0
    %2075 = vmatpush1.msra.mxu0 0.0
    %2076 = vmatprep.subr.mxu0 0.0
    %2077 = vmatpush1.msra.mxu0 0.0
    %2078 = vmatprep.subr.mxu0 0.0
    %2079 = vmatpush1.msra.mxu0 0.0
    %2080 = vmatprep.mubr.f32.mxu0 0.0
    %2081 = vmatmul.mubr.f32.gmra.mrb[0].mxu0 %v2014
    %v2082 = vpop.f32.mrb[0].mxu0
    %v2083 = vadd.f32 0.0, %v2082
    %v2084 = vpop.f32.mrb[0].mxu0
    %2085 = vdwg.mxu0
    %v2086 = vadd.f32 %v1699, %v2083
    %v2087 = vadd.f32 %v2086, %v62
    %2089 = vrot.lane.b32.xlu0 %v2087, 20
    %v2090 = vpop.permute.xlu0 %2089
    %vm2092 = vcmask 189600
    %2093 = vst.msk [vmem:[%s3] sm:$0x3] %vm2092, %v2090
    %v2094 = vsel %vm67, %v2087, 0
    %2096 = vmatprep.subr.mxu0 0.0
    %2097 = vmatpush1.msra.mxu0 %v151
    %2098 = vmatprep.subr.mxu0 0.0
    %2099 = vmatpush1.msra.mxu0 0.0
    %2100 = vmatprep.subr.mxu0 0.0
    %2101 = vmatpush1.msra.mxu0 0.0
    %2102 = vmatprep.subr.mxu0 0.0
    %2103 = vmatpush1.msra.mxu0 0.0
    %2104 = vmatprep.subr.mxu0 0.0
    %2105 = vmatpush1.msra.mxu0 0.0
    %2106 = vmatprep.subr.mxu0 0.0
    %2107 = vmatpush1.msra.mxu0 0.0
    %2108 = vmatprep.subr.mxu0 0.0
    %2109 = vmatpush1.msra.mxu0 0.0
    %2110 = vmatprep.subr.mxu0 0.0
    %2111 = vmatpush1.msra.mxu0 0.0
    %2112 = vmatprep.subr.mxu0 0.0
    %2113 = vmatpush1.msra.mxu0 0.0
    %2114 = vmatprep.subr.mxu0 0.0
    %2115 = vmatpush1.msra.mxu0 0.0
    %2116 = vmatprep.subr.mxu0 0.0
    %2117 = vmatpush1.msra.mxu0 0.0
    %2118 = vmatprep.subr.mxu0 0.0
    %2119 = vmatpush1.msra.mxu0 0.0
    %2120 = vmatprep.subr.mxu0 0.0
    %2121 = vmatpush1.msra.mxu0 0.0
    %2122 = vmatprep.subr.mxu0 0.0
    %2123 = vmatpush1.msra.mxu0 0.0
    %2124 = vmatprep.subr.mxu0 0.0
    %2125 = vmatpush1.msra.mxu0 0.0
    %2126 = vmatprep.subr.mxu0 0.0
    %2127 = vmatpush1.msra.mxu0 0.0
    %2128 = vmatprep.subr.mxu0 0.0
    %2129 = vmatpush1.msra.mxu0 0.0
    %2130 = vmatprep.subr.mxu0 0.0
    %2131 = vmatpush1.msra.mxu0 0.0
    %2132 = vmatprep.subr.mxu0 0.0
    %2133 = vmatpush1.msra.mxu0 0.0
    %2134 = vmatprep.subr.mxu0 0.0
    %2135 = vmatpush1.msra.mxu0 0.0
    %2136 = vmatprep.subr.mxu0 0.0
    %2137 = vmatpush1.msra.mxu0 0.0
    %2138 = vmatprep.subr.mxu0 0.0
    %2139 = vmatpush1.msra.mxu0 0.0
    %2140 = vmatprep.subr.mxu0 0.0
    %2141 = vmatpush1.msra.mxu0 0.0
    %2142 = vmatprep.subr.mxu0 0.0
    %2143 = vmatpush1.msra.mxu0 0.0
    %2144 = vmatprep.subr.mxu0 0.0
    %2145 = vmatpush1.msra.mxu0 0.0
    %2146 = vmatprep.subr.mxu0 0.0
    %2147 = vmatpush1.msra.mxu0 0.0
    %2148 = vmatprep.subr.mxu0 0.0
    %2149 = vmatpush1.msra.mxu0 0.0
    %2150 = vmatprep.subr.mxu0 0.0
    %2151 = vmatpush1.msra.mxu0 0.0
    %2152 = vmatprep.subr.mxu0 0.0
    %2153 = vmatpush1.msra.mxu0 0.0
    %2154 = vmatprep.subr.mxu0 0.0
    %2155 = vmatpush1.msra.mxu0 0.0
    %2156 = vmatprep.subr.mxu0 0.0
    %2157 = vmatpush1.msra.mxu0 0.0
    %2158 = vmatprep.subr.mxu0 0.0
    %2159 = vmatpush1.msra.mxu0 0.0
    %2160 = vmatprep.mubr.f32.mxu0 0.0
    %2161 = vmatmul.mubr.f32.gmra.mrb[0].mxu0 %v2094
    %v2162 = vpop.f32.mrb[0].mxu0
    %v2163 = vadd.f32 %v142, %v2162
    %v2164 = vpop.f32.mrb[0].mxu0
    %2165 = vdwg.mxu0
    %v2166 = vtanh.pop %v2163
    %v2168 = vsel %vm224, %v2166, 0
    %2170 = vmatprep.subr.mxu0 0.0
    %2171 = vmatpush1.msra.mxu0 %v35
    %2172 = vmatprep.subr.mxu0 0.0
    %2173 = vmatpush1.msra.mxu0 %v36
    %2174 = vmatprep.subr.mxu0 0.0
    %2175 = vmatpush1.msra.mxu0 %v37
    %2176 = vmatprep.subr.mxu0 0.0
    %2177 = vmatpush1.msra.mxu0 %v38
    %2178 = vmatprep.subr.mxu0 0.0
    %2179 = vmatpush1.msra.mxu0 0.0
    %2180 = vmatprep.subr.mxu0 0.0
    %2181 = vmatpush1.msra.mxu0 0.0
    %2182 = vmatprep.subr.mxu0 0.0
    %2183 = vmatpush1.msra.mxu0 0.0
    %2184 = vmatprep.subr.mxu0 0.0
    %2185 = vmatpush1.msra.mxu0 0.0
    %2186 = vmatprep.subr.mxu0 0.0
    %2187 = vmatpush1.msra.mxu0 0.0
    %2188 = vmatprep.subr.mxu0 0.0
    %2189 = vmatpush1.msra.mxu0 0.0
    %2190 = vmatprep.subr.mxu0 0.0
    %2191 = vmatpush1.msra.mxu0 0.0
    %2192 = vmatprep.subr.mxu0 0.0
    %2193 = vmatpush1.msra.mxu0 0.0
    %2194 = vmatprep.subr.mxu0 0.0
    %2195 = vmatpush1.msra.mxu0 0.0
    %2196 = vmatprep.subr.mxu0 0.0
    %2197 = vmatpush1.msra.mxu0 0.0
    %2198 = vmatprep.subr.mxu0 0.0
    %2199 = vmatpush1.msra.mxu0 0.0
    %2200 = vmatprep.subr.mxu0 0.0
    %2201 = vmatpush1.msra.mxu0 0.0
    %2202 = vmatprep.subr.mxu0 0.0
    %2203 = vmatpush1.msra.mxu0 0.0
    %2204 = vmatprep.subr.mxu0 0.0
    %2205 = vmatpush1.msra.mxu0 0.0
    %2206 = vmatprep.subr.mxu0 0.0
    %2207 = vmatpush1.msra.mxu0 0.0
    %2208 = vmatprep.subr.mxu0 0.0
    %2209 = vmatpush1.msra.mxu0 0.0
    %2210 = vmatprep.subr.mxu0 0.0
    %2211 = vmatpush1.msra.mxu0 0.0
    %2212 = vmatprep.subr.mxu0 0.0
    %2213 = vmatpush1.msra.mxu0 0.0
    %2214 = vmatprep.subr.mxu0 0.0
    %2215 = vmatpush1.msra.mxu0 0.0
    %2216 = vmatprep.subr.mxu0 0.0
    %2217 = vmatpush1.msra.mxu0 0.0
    %2218 = vmatprep.subr.mxu0 0.0
    %2219 = vmatpush1.msra.mxu0 0.0
    %2220 = vmatprep.subr.mxu0 0.0
    %2221 = vmatpush1.msra.mxu0 0.0
    %2222 = vmatprep.subr.mxu0 0.0
    %2223 = vmatpush1.msra.mxu0 0.0
    %2224 = vmatprep.subr.mxu0 0.0
    %2225 = vmatpush1.msra.mxu0 0.0
    %2226 = vmatprep.subr.mxu0 0.0
    %2227 = vmatpush1.msra.mxu0 0.0
    %2228 = vmatprep.subr.mxu0 0.0
    %2229 = vmatpush1.msra.mxu0 0.0
    %2230 = vmatprep.subr.mxu0 0.0
    %2231 = vmatpush1.msra.mxu0 0.0
    %2232 = vmatprep.subr.mxu0 0.0
    %2233 = vmatpush1.msra.mxu0 0.0
    %2234 = vmatprep.mubr.f32.mxu0 0.0
    %2235 = vmatmul.mubr.f32.gmra.mrb[0].mxu0 %v2168
    %v2236 = vpop.f32.mrb[0].mxu0
    %v2237 = vadd.f32 %v52, %v2236
    %v2238 = vpop.f32.mrb[0].mxu0
    %2239 = vdwg.mxu0
    %v2240 = vtanh.pop %v2237
    %v2242 = vsel %vm224, %v2240, 0
    %2244 = vmatprep.subr.mxu0 0.0
    %2245 = vmatpush1.msra.mxu0 %v39
    %2246 = vmatprep.subr.mxu0 0.0
    %2247 = vmatpush1.msra.mxu0 %v40
    %2248 = vmatprep.subr.mxu0 0.0
    %2249 = vmatpush1.msra.mxu0 %v41
    %2250 = vmatprep.subr.mxu0 0.0
    %2251 = vmatpush1.msra.mxu0 %v42
    %2252 = vmatprep.subr.mxu0 0.0
    %2253 = vmatpush1.msra.mxu0 0.0
    %2254 = vmatprep.subr.mxu0 0.0
    %2255 = vmatpush1.msra.mxu0 0.0
    %2256 = vmatprep.subr.mxu0 0.0
    %2257 = vmatpush1.msra.mxu0 0.0
    %2258 = vmatprep.subr.mxu0 0.0
    %2259 = vmatpush1.msra.mxu0 0.0
    %2260 = vmatprep.subr.mxu0 0.0
    %2261 = vmatpush1.msra.mxu0 0.0
    %2262 = vmatprep.subr.mxu0 0.0
    %2263 = vmatpush1.msra.mxu0 0.0
    %2264 = vmatprep.subr.mxu0 0.0
    %2265 = vmatpush1.msra.mxu0 0.0
    %2266 = vmatprep.subr.mxu0 0.0
    %2267 = vmatpush1.msra.mxu0 0.0
    %2268 = vmatprep.subr.mxu0 0.0
    %2269 = vmatpush1.msra.mxu0 0.0
    %2270 = vmatprep.subr.mxu0 0.0
    %2271 = vmatpush1.msra.mxu0 0.0
    %2272 = vmatprep.subr.mxu0 0.0
    %2273 = vmatpush1.msra.mxu0 0.0
    %2274 = vmatprep.subr.mxu0 0.0
    %2275 = vmatpush1.msra.mxu0 0.0
    %2276 = vmatprep.subr.mxu0 0.0
    %2277 = vmatpush1.msra.mxu0 0.0
    %2278 = vmatprep.subr.mxu0 0.0
    %2279 = vmatpush1.msra.mxu0 0.0
    %2280 = vmatprep.subr.mxu0 0.0
    %2281 = vmatpush1.msra.mxu0 0.0
    %2282 = vmatprep.subr.mxu0 0.0
    %2283 = vmatpush1.msra.mxu0 0.0
    %2284 = vmatprep.subr.mxu0 0.0
    %2285 = vmatpush1.msra.mxu0 0.0
    %2286 = vmatprep.subr.mxu0 0.0
    %2287 = vmatpush1.msra.mxu0 0.0
    %2288 = vmatprep.subr.mxu0 0.0
    %2289 = vmatpush1.msra.mxu0 0.0
    %2290 = vmatprep.subr.mxu0 0.0
    %2291 = vmatpush1.msra.mxu0 0.0
    %2292 = vmatprep.subr.mxu0 0.0
    %2293 = vmatpush1.msra.mxu0 0.0
    %2294 = vmatprep.subr.mxu0 0.0
    %2295 = vmatpush1.msra.mxu0 0.0
    %2296 = vmatprep.subr.mxu0 0.0
    %2297 = vmatpush1.msra.mxu0 0.0
    %2298 = vmatprep.subr.mxu0 0.0
    %2299 = vmatpush1.msra.mxu0 0.0
    %2300 = vmatprep.subr.mxu0 0.0
    %2301 = vmatpush1.msra.mxu0 0.0
    %2302 = vmatprep.subr.mxu0 0.0
    %2303 = vmatpush1.msra.mxu0 0.0
    %2304 = vmatprep.subr.mxu0 0.0
    %2305 = vmatpush1.msra.mxu0 0.0
    %2306 = vmatprep.subr.mxu0 0.0
    %2307 = vmatpush1.msra.mxu0 0.0
    %2308 = vmatprep.mubr.f32.mxu0 0.0
    %2309 = vmatmul.mubr.f32.gmra.mrb[0].mxu0 %v2242
    %v2310 = vpop.f32.mrb[0].mxu0
    %v2311 = vadd.f32 %v57, %v2310
    %v2312 = vpop.f32.mrb[0].mxu0
    %2313 = vdwg.mxu0
    %v2314 = vtanh.pop %v2311
    %2316 = vrot.lane.b32.xlu0 %v2314, 10
    %v2317 = vpop.permute.xlu0 %2316
    %vm2319 = vcmask 91216
    %2320 = vst.msk [vmem:[%s4] sm:$0x3] %vm2319, %v2317
    %v2321 = vsel %vm375, %v2314, 0
    %2323 = vmatprep.subr.mxu0 0.0
    %2324 = vmatpush1.msra.mxu0 %v381
    %2325 = vmatprep.subr.mxu0 0.0
    %2326 = vmatpush1.msra.mxu0 0.0
    %2327 = vmatprep.subr.mxu0 0.0
    %2328 = vmatpush1.msra.mxu0 0.0
    %2329 = vmatprep.subr.mxu0 0.0
    %2330 = vmatpush1.msra.mxu0 0.0
    %2331 = vmatprep.subr.mxu0 0.0
    %2332 = vmatpush1.msra.mxu0 0.0
    %2333 = vmatprep.subr.mxu0 0.0
    %2334 = vmatpush1.msra.mxu0 0.0
    %2335 = vmatprep.subr.mxu0 0.0
    %2336 = vmatpush1.msra.mxu0 0.0
    %2337 = vmatprep.subr.mxu0 0.0
    %2338 = vmatpush1.msra.mxu0 0.0
    %2339 = vmatprep.subr.mxu0 0.0
    %2340 = vmatpush1.msra.mxu0 0.0
    %2341 = vmatprep.subr.mxu0 0.0
    %2342 = vmatpush1.msra.mxu0 0.0
    %2343 = vmatprep.subr.mxu0 0.0
    %2344 = vmatpush1.msra.mxu0 0.0
    %2345 = vmatprep.subr.mxu0 0.0
    %2346 = vmatpush1.msra.mxu0 0.0
    %2347 = vmatprep.subr.mxu0 0.0
    %2348 = vmatpush1.msra.mxu0 0.0
    %2349 = vmatprep.subr.mxu0 0.0
    %2350 = vmatpush1.msra.mxu0 0.0
    %2351 = vmatprep.subr.mxu0 0.0
    %2352 = vmatpush1.msra.mxu0 0.0
    %2353 = vmatprep.subr.mxu0 0.0
    %2354 = vmatpush1.msra.mxu0 0.0
    %2355 = vmatprep.subr.mxu0 0.0
    %2356 = vmatpush1.msra.mxu0 0.0
    %2357 = vmatprep.subr.mxu0 0.0
    %2358 = vmatpush1.msra.mxu0 0.0
    %2359 = vmatprep.subr.mxu0 0.0
    %2360 = vmatpush1.msra.mxu0 0.0
    %2361 = vmatprep.subr.mxu0 0.0
    %2362 = vmatpush1.msra.mxu0 0.0
    %2363 = vmatprep.subr.mxu0 0.0
    %2364 = vmatpush1.msra.mxu0 0.0
    %2365 = vmatprep.subr.mxu0 0.0
    %2366 = vmatpush1.msra.mxu0 0.0
    %2367 = vmatprep.subr.mxu0 0.0
    %2368 = vmatpush1.msra.mxu0 0.0
    %2369 = vmatprep.subr.mxu0 0.0
    %2370 = vmatpush1.msra.mxu0 0.0
    %2371 = vmatprep.subr.mxu0 0.0
    %2372 = vmatpush1.msra.mxu0 0.0
    %2373 = vmatprep.subr.mxu0 0.0
    %2374 = vmatpush1.msra.mxu0 0.0
    %2375 = vmatprep.subr.mxu0 0.0
    %2376 = vmatpush1.msra.mxu0 0.0
    %2377 = vmatprep.subr.mxu0 0.0
    %2378 = vmatpush1.msra.mxu0 0.0
    %2379 = vmatprep.subr.mxu0 0.0
    %2380 = vmatpush1.msra.mxu0 0.0
    %2381 = vmatprep.subr.mxu0 0.0
    %2382 = vmatpush1.msra.mxu0 0.0
    %2383 = vmatprep.subr.mxu0 0.0
    %2384 = vmatpush1.msra.mxu0 0.0
    %2385 = vmatprep.subr.mxu0 0.0
    %2386 = vmatpush1.msra.mxu0 0.0
    %2387 = vmatprep.mubr.f32.mxu0 0.0
    %2388 = vmatmul.mubr.f32.gmra.mrb[0].mxu0 %v2321
    %v2389 = vpop.f32.mrb[0].mxu0
    %v2390 = vadd.f32 0.0, %v2389
    %v2391 = vpop.f32.mrb[0].mxu0
    %2392 = vdwg.mxu0
    %2394 = vrot.lane.b32.xlu0 %v2390, 32
    %v2395 = vpop.permute.xlu0 %2394
    %v2397 = vadd.f32 %v2163, %v2395
    %v2398 = vtanh.pop %v2397
    %2400 = vrot.lane.b32.xlu0 %v2398, 96
    %v2401 = vpop.permute.xlu0 %2400
    %v2402 = vsel %vm224, %v2401, 0
    %2404 = vmatprep.subr.mxu0 0.0
    %2405 = vmatpush1.msra.mxu0 %v44
    %2406 = vmatprep.subr.mxu0 0.0
    %2407 = vmatpush1.msra.mxu0 %v45
    %2408 = vmatprep.subr.mxu0 0.0
    %2409 = vmatpush1.msra.mxu0 %v46
    %2410 = vmatprep.subr.mxu0 0.0
    %2411 = vmatpush1.msra.mxu0 %v47
    %2412 = vmatprep.subr.mxu0 0.0
    %2413 = vmatpush1.msra.mxu0 0.0
    %2414 = vmatprep.subr.mxu0 0.0
    %2415 = vmatpush1.msra.mxu0 0.0
    %2416 = vmatprep.subr.mxu0 0.0
    %2417 = vmatpush1.msra.mxu0 0.0
    %2418 = vmatprep.subr.mxu0 0.0
    %2419 = vmatpush1.msra.mxu0 0.0
    %2420 = vmatprep.subr.mxu0 0.0
    %2421 = vmatpush1.msra.mxu0 0.0
    %2422 = vmatprep.subr.mxu0 0.0
    %2423 = vmatpush1.msra.mxu0 0.0
    %2424 = vmatprep.subr.mxu0 0.0
    %2425 = vmatpush1.msra.mxu0 0.0
    %2426 = vmatprep.subr.mxu0 0.0
    %2427 = vmatpush1.msra.mxu0 0.0
    %2428 = vmatprep.subr.mxu0 0.0
    %2429 = vmatpush1.msra.mxu0 0.0
    %2430 = vmatprep.subr.mxu0 0.0
    %2431 = vmatpush1.msra.mxu0 0.0
    %2432 = vmatprep.subr.mxu0 0.0
    %2433 = vmatpush1.msra.mxu0 0.0
    %2434 = vmatprep.subr.mxu0 0.0
    %2435 = vmatpush1.msra.mxu0 0.0
    %2436 = vmatprep.subr.mxu0 0.0
    %2437 = vmatpush1.msra.mxu0 0.0
    %2438 = vmatprep.subr.mxu0 0.0
    %2439 = vmatpush1.msra.mxu0 0.0
    %2440 = vmatprep.subr.mxu0 0.0
    %2441 = vmatpush1.msra.mxu0 0.0
    %2442 = vmatprep.subr.mxu0 0.0
    %2443 = vmatpush1.msra.mxu0 0.0
    %2444 = vmatprep.subr.mxu0 0.0
    %2445 = vmatpush1.msra.mxu0 0.0
    %2446 = vmatprep.subr.mxu0 0.0
    %2447 = vmatpush1.msra.mxu0 0.0
    %2448 = vmatprep.subr.mxu0 0.0
    %2449 = vmatpush1.msra.mxu0 0.0
    %2450 = vmatprep.subr.mxu0 0.0
    %2451 = vmatpush1.msra.mxu0 0.0
    %2452 = vmatprep.subr.mxu0 0.0
    %2453 = vmatpush1.msra.mxu0 0.0
    %2454 = vmatprep.subr.mxu0 0.0
    %2455 = vmatpush1.msra.mxu0 0.0
    %2456 = vmatprep.subr.mxu0 0.0
    %2457 = vmatpush1.msra.mxu0 0.0
    %2458 = vmatprep.subr.mxu0 0.0
    %2459 = vmatpush1.msra.mxu0 0.0
    %2460 = vmatprep.subr.mxu0 0.0
    %2461 = vmatpush1.msra.mxu0 0.0
    %2462 = vmatprep.subr.mxu0 0.0
    %2463 = vmatpush1.msra.mxu0 0.0
    %2464 = vmatprep.subr.mxu0 0.0
    %2465 = vmatpush1.msra.mxu0 0.0
    %2466 = vmatprep.subr.mxu0 0.0
    %2467 = vmatpush1.msra.mxu0 0.0
    %2468 = vmatprep.mubr.f32.mxu0 0.0
    %2469 = vmatmul.mubr.f32.gmra.mrb[0].mxu0 %v2402
    %v2470 = vpop.f32.mrb[0].mxu0
    %v2471 = vadd.f32 0.0, %v2470
    %v2472 = vpop.f32.mrb[0].mxu0
    %2473 = vdwg.mxu0
    %v2474 = vadd.f32 %v2087, %v2471
    %v2475 = vadd.f32 %v2474, %v62
    %2477 = vrot.lane.b32.xlu0 %v2475, 24
    %v2478 = vpop.permute.xlu0 %2477
    %vm2480 = vcmask 222400
    %2481 = vst.msk [vmem:[%s3] sm:$0x3] %vm2480, %v2478
    %v2482 = vsel %vm67, %v2475, 0
    %2484 = vmatprep.subr.mxu0 0.0
    %2485 = vmatpush1.msra.mxu0 %v151
    %2486 = vmatprep.subr.mxu0 0.0
    %2487 = vmatpush1.msra.mxu0 0.0
    %2488 = vmatprep.subr.mxu0 0.0
    %2489 = vmatpush1.msra.mxu0 0.0
    %2490 = vmatprep.subr.mxu0 0.0
    %2491 = vmatpush1.msra.mxu0 0.0
    %2492 = vmatprep.subr.mxu0 0.0
    %2493 = vmatpush1.msra.mxu0 0.0
    %2494 = vmatprep.subr.mxu0 0.0
    %2495 = vmatpush1.msra.mxu0 0.0
    %2496 = vmatprep.subr.mxu0 0.0
    %2497 = vmatpush1.msra.mxu0 0.0
    %2498 = vmatprep.subr.mxu0 0.0
    %2499 = vmatpush1.msra.mxu0 0.0
    %2500 = vmatprep.subr.mxu0 0.0
    %2501 = vmatpush1.msra.mxu0 0.0
    %2502 = vmatprep.subr.mxu0 0.0
    %2503 = vmatpush1.msra.mxu0 0.0
    %2504 = vmatprep.subr.mxu0 0.0
    %2505 = vmatpush1.msra.mxu0 0.0
    %2506 = vmatprep.subr.mxu0 0.0
    %2507 = vmatpush1.msra.mxu0 0.0
    %2508 = vmatprep.subr.mxu0 0.0
    %2509 = vmatpush1.msra.mxu0 0.0
    %2510 = vmatprep.subr.mxu0 0.0
    %2511 = vmatpush1.msra.mxu0 0.0
    %2512 = vmatprep.subr.mxu0 0.0
    %2513 = vmatpush1.msra.mxu0 0.0
    %2514 = vmatprep.subr.mxu0 0.0
    %2515 = vmatpush1.msra.mxu0 0.0
    %2516 = vmatprep.subr.mxu0 0.0
    %2517 = vmatpush1.msra.mxu0 0.0
    %2518 = vmatprep.subr.mxu0 0.0
    %2519 = vmatpush1.msra.mxu0 0.0
    %2520 = vmatprep.subr.mxu0 0.0
    %2521 = vmatpush1.msra.mxu0 0.0
    %2522 = vmatprep.subr.mxu0 0.0
    %2523 = vmatpush1.msra.mxu0 0.0
    %2524 = vmatprep.subr.mxu0 0.0
    %2525 = vmatpush1.msra.mxu0 0.0
    %2526 = vmatprep.subr.mxu0 0.0
    %2527 = vmatpush1.msra.mxu0 0.0
    %2528 = vmatprep.subr.mxu0 0.0
    %2529 = vmatpush1.msra.mxu0 0.0
    %2530 = vmatprep.subr.mxu0 0.0
    %2531 = vmatpush1.msra.mxu0 0.0
    %2532 = vmatprep.subr.mxu0 0.0
    %2533 = vmatpush1.msra.mxu0 0.0
    %2534 = vmatprep.subr.mxu0 0.0
    %2535 = vmatpush1.msra.mxu0 0.0
    %2536 = vmatprep.subr.mxu0 0.0
    %2537 = vmatpush1.msra.mxu0 0.0
    %2538 = vmatprep.subr.mxu0 0.0
    %2539 = vmatpush1.msra.mxu0 0.0
    %2540 = vmatprep.subr.mxu0 0.0
    %2541 = vmatpush1.msra.mxu0 0.0
    %2542 = vmatprep.subr.mxu0 0.0
    %2543 = vmatpush1.msra.mxu0 0.0
    %2544 = vmatprep.subr.mxu0 0.0
    %2545 = vmatpush1.msra.mxu0 0.0
    %2546 = vmatprep.subr.mxu0 0.0
    %2547 = vmatpush1.msra.mxu0 0.0
    %2548 = vmatprep.mubr.f32.mxu0 0.0
    %2549 = vmatmul.mubr.f32.gmra.mrb[0].mxu0 %v2482
    %v2550 = vpop.f32.mrb[0].mxu0
    %v2551 = vadd.f32 %v142, %v2550
    %v2552 = vpop.f32.mrb[0].mxu0
    %2553 = vdwg.mxu0
    %v2554 = vtanh.pop %v2551
    %v2556 = vsel %vm224, %v2554, 0
    %2558 = vmatprep.subr.mxu0 0.0
    %2559 = vmatpush1.msra.mxu0 %v35
    %2560 = vmatprep.subr.mxu0 0.0
    %2561 = vmatpush1.msra.mxu0 %v36
    %2562 = vmatprep.subr.mxu0 0.0
    %2563 = vmatpush1.msra.mxu0 %v37
    %2564 = vmatprep.subr.mxu0 0.0
    %2565 = vmatpush1.msra.mxu0 %v38
    %2566 = vmatprep.subr.mxu0 0.0
    %2567 = vmatpush1.msra.mxu0 0.0
    %2568 = vmatprep.subr.mxu0 0.0
    %2569 = vmatpush1.msra.mxu0 0.0
    %2570 = vmatprep.subr.mxu0 0.0
    %2571 = vmatpush1.msra.mxu0 0.0
    %2572 = vmatprep.subr.mxu0 0.0
    %2573 = vmatpush1.msra.mxu0 0.0
    %2574 = vmatprep.subr.mxu0 0.0
    %2575 = vmatpush1.msra.mxu0 0.0
    %2576 = vmatprep.subr.mxu0 0.0
    %2577 = vmatpush1.msra.mxu0 0.0
    %2578 = vmatprep.subr.mxu0 0.0
    %2579 = vmatpush1.msra.mxu0 0.0
    %2580 = vmatprep.subr.mxu0 0.0
    %2581 = vmatpush1.msra.mxu0 0.0
    %2582 = vmatprep.subr.mxu0 0.0
    %2583 = vmatpush1.msra.mxu0 0.0
    %2584 = vmatprep.subr.mxu0 0.0
    %2585 = vmatpush1.msra.mxu0 0.0
    %2586 = vmatprep.subr.mxu0 0.0
    %2587 = vmatpush1.msra.mxu0 0.0
    %2588 = vmatprep.subr.mxu0 0.0
    %2589 = vmatpush1.msra.mxu0 0.0
    %2590 = vmatprep.subr.mxu0 0.0
    %2591 = vmatpush1.msra.mxu0 0.0
    %2592 = vmatprep.subr.mxu0 0.0
    %2593 = vmatpush1.msra.mxu0 0.0
    %2594 = vmatprep.subr.mxu0 0.0
    %2595 = vmatpush1.msra.mxu0 0.0
    %2596 = vmatprep.subr.mxu0 0.0
    %2597 = vmatpush1.msra.mxu0 0.0
    %2598 = vmatprep.subr.mxu0 0.0
    %2599 = vmatpush1.msra.mxu0 0.0
    %2600 = vmatprep.subr.mxu0 0.0
    %2601 = vmatpush1.msra.mxu0 0.0
    %2602 = vmatprep.subr.mxu0 0.0
    %2603 = vmatpush1.msra.mxu0 0.0
    %2604 = vmatprep.subr.mxu0 0.0
    %2605 = vmatpush1.msra.mxu0 0.0
    %2606 = vmatprep.subr.mxu0 0.0
    %2607 = vmatpush1.msra.mxu0 0.0
    %2608 = vmatprep.subr.mxu0 0.0
    %2609 = vmatpush1.msra.mxu0 0.0
    %2610 = vmatprep.subr.mxu0 0.0
    %2611 = vmatpush1.msra.mxu0 0.0
    %2612 = vmatprep.subr.mxu0 0.0
    %2613 = vmatpush1.msra.mxu0 0.0
    %2614 = vmatprep.subr.mxu0 0.0
    %2615 = vmatpush1.msra.mxu0 0.0
    %2616 = vmatprep.subr.mxu0 0.0
    %2617 = vmatpush1.msra.mxu0 0.0
    %2618 = vmatprep.subr.mxu0 0.0
    %2619 = vmatpush1.msra.mxu0 0.0
    %2620 = vmatprep.subr.mxu0 0.0
    %2621 = vmatpush1.msra.mxu0 0.0
    %2622 = vmatprep.mubr.f32.mxu0 0.0
    %2623 = vmatmul.mubr.f32.gmra.mrb[0].mxu0 %v2556
    %v2624 = vpop.f32.mrb[0].mxu0
    %v2625 = vadd.f32 %v52, %v2624
    %v2626 = vpop.f32.mrb[0].mxu0
    %2627 = vdwg.mxu0
    %v2628 = vtanh.pop %v2625
    %v2630 = vsel %vm224, %v2628, 0
    %2632 = vmatprep.subr.mxu0 0.0
    %2633 = vmatpush1.msra.mxu0 %v39
    %2634 = vmatprep.subr.mxu0 0.0
    %2635 = vmatpush1.msra.mxu0 %v40
    %2636 = vmatprep.subr.mxu0 0.0
    %2637 = vmatpush1.msra.mxu0 %v41
    %2638 = vmatprep.subr.mxu0 0.0
    %2639 = vmatpush1.msra.mxu0 %v42
    %2640 = vmatprep.subr.mxu0 0.0
    %2641 = vmatpush1.msra.mxu0 0.0
    %2642 = vmatprep.subr.mxu0 0.0
    %2643 = vmatpush1.msra.mxu0 0.0
    %2644 = vmatprep.subr.mxu0 0.0
    %2645 = vmatpush1.msra.mxu0 0.0
    %2646 = vmatprep.subr.mxu0 0.0
    %2647 = vmatpush1.msra.mxu0 0.0
    %2648 = vmatprep.subr.mxu0 0.0
    %2649 = vmatpush1.msra.mxu0 0.0
    %2650 = vmatprep.subr.mxu0 0.0
    %2651 = vmatpush1.msra.mxu0 0.0
    %2652 = vmatprep.subr.mxu0 0.0
    %2653 = vmatpush1.msra.mxu0 0.0
    %2654 = vmatprep.subr.mxu0 0.0
    %2655 = vmatpush1.msra.mxu0 0.0
    %2656 = vmatprep.subr.mxu0 0.0
    %2657 = vmatpush1.msra.mxu0 0.0
    %2658 = vmatprep.subr.mxu0 0.0
    %2659 = vmatpush1.msra.mxu0 0.0
    %2660 = vmatprep.subr.mxu0 0.0
    %2661 = vmatpush1.msra.mxu0 0.0
    %2662 = vmatprep.subr.mxu0 0.0
    %2663 = vmatpush1.msra.mxu0 0.0
    %2664 = vmatprep.subr.mxu0 0.0
    %2665 = vmatpush1.msra.mxu0 0.0
    %2666 = vmatprep.subr.mxu0 0.0
    %2667 = vmatpush1.msra.mxu0 0.0
    %2668 = vmatprep.subr.mxu0 0.0
    %2669 = vmatpush1.msra.mxu0 0.0
    %2670 = vmatprep.subr.mxu0 0.0
    %2671 = vmatpush1.msra.mxu0 0.0
    %2672 = vmatprep.subr.mxu0 0.0
    %2673 = vmatpush1.msra.mxu0 0.0
    %2674 = vmatprep.subr.mxu0 0.0
    %2675 = vmatpush1.msra.mxu0 0.0
    %2676 = vmatprep.subr.mxu0 0.0
    %2677 = vmatpush1.msra.mxu0 0.0
    %2678 = vmatprep.subr.mxu0 0.0
    %2679 = vmatpush1.msra.mxu0 0.0
    %2680 = vmatprep.subr.mxu0 0.0
    %2681 = vmatpush1.msra.mxu0 0.0
    %2682 = vmatprep.subr.mxu0 0.0
    %2683 = vmatpush1.msra.mxu0 0.0
    %2684 = vmatprep.subr.mxu0 0.0
    %2685 = vmatpush1.msra.mxu0 0.0
    %2686 = vmatprep.subr.mxu0 0.0
    %2687 = vmatpush1.msra.mxu0 0.0
    %2688 = vmatprep.subr.mxu0 0.0
    %2689 = vmatpush1.msra.mxu0 0.0
    %2690 = vmatprep.subr.mxu0 0.0
    %2691 = vmatpush1.msra.mxu0 0.0
    %2692 = vmatprep.subr.mxu0 0.0
    %2693 = vmatpush1.msra.mxu0 0.0
    %2694 = vmatprep.subr.mxu0 0.0
    %2695 = vmatpush1.msra.mxu0 0.0
    %2696 = vmatprep.mubr.f32.mxu0 0.0
    %2697 = vmatmul.mubr.f32.gmra.mrb[0].mxu0 %v2630
    %v2698 = vpop.f32.mrb[0].mxu0
    %v2699 = vadd.f32 %v57, %v2698
    %v2700 = vpop.f32.mrb[0].mxu0
    %2701 = vdwg.mxu0
    %v2702 = vtanh.pop %v2699
    %2704 = vrot.lane.b32.xlu0 %v2702, 12
    %v2705 = vpop.permute.xlu0 %2704
    %vm2707 = vcmask 107616
    %2708 = vst.msk [vmem:[%s4] sm:$0x3] %vm2707, %v2705
    %v2709 = vsel %vm375, %v2702, 0
    %2711 = vmatprep.subr.mxu0 0.0
    %2712 = vmatpush1.msra.mxu0 %v381
    %2713 = vmatprep.subr.mxu0 0.0
    %2714 = vmatpush1.msra.mxu0 0.0
    %2715 = vmatprep.subr.mxu0 0.0
    %2716 = vmatpush1.msra.mxu0 0.0
    %2717 = vmatprep.subr.mxu0 0.0
    %2718 = vmatpush1.msra.mxu0 0.0
    %2719 = vmatprep.subr.mxu0 0.0
    %2720 = vmatpush1.msra.mxu0 0.0
    %2721 = vmatprep.subr.mxu0 0.0
    %2722 = vmatpush1.msra.mxu0 0.0
    %2723 = vmatprep.subr.mxu0 0.0
    %2724 = vmatpush1.msra.mxu0 0.0
    %2725 = vmatprep.subr.mxu0 0.0
    %2726 = vmatpush1.msra.mxu0 0.0
    %2727 = vmatprep.subr.mxu0 0.0
    %2728 = vmatpush1.msra.mxu0 0.0
    %2729 = vmatprep.subr.mxu0 0.0
    %2730 = vmatpush1.msra.mxu0 0.0
    %2731 = vmatprep.subr.mxu0 0.0
    %2732 = vmatpush1.msra.mxu0 0.0
    %2733 = vmatprep.subr.mxu0 0.0
    %2734 = vmatpush1.msra.mxu0 0.0
    %2735 = vmatprep.subr.mxu0 0.0
    %2736 = vmatpush1.msra.mxu0 0.0
    %2737 = vmatprep.subr.mxu0 0.0
    %2738 = vmatpush1.msra.mxu0 0.0
    %2739 = vmatprep.subr.mxu0 0.0
    %2740 = vmatpush1.msra.mxu0 0.0
    %2741 = vmatprep.subr.mxu0 0.0
    %2742 = vmatpush1.msra.mxu0 0.0
    %2743 = vmatprep.subr.mxu0 0.0
    %2744 = vmatpush1.msra.mxu0 0.0
    %2745 = vmatprep.subr.mxu0 0.0
    %2746 = vmatpush1.msra.mxu0 0.0
    %2747 = vmatprep.subr.mxu0 0.0
    %2748 = vmatpush1.msra.mxu0 0.0
    %2749 = vmatprep.subr.mxu0 0.0
    %2750 = vmatpush1.msra.mxu0 0.0
    %2751 = vmatprep.subr.mxu0 0.0
    %2752 = vmatpush1.msra.mxu0 0.0
    %2753 = vmatprep.subr.mxu0 0.0
    %2754 = vmatpush1.msra.mxu0 0.0
    %2755 = vmatprep.subr.mxu0 0.0
    %2756 = vmatpush1.msra.mxu0 0.0
    %2757 = vmatprep.subr.mxu0 0.0
    %2758 = vmatpush1.msra.mxu0 0.0
    %2759 = vmatprep.subr.mxu0 0.0
    %2760 = vmatpush1.msra.mxu0 0.0
    %2761 = vmatprep.subr.mxu0 0.0
    %2762 = vmatpush1.msra.mxu0 0.0
    %2763 = vmatprep.subr.mxu0 0.0
    %2764 = vmatpush1.msra.mxu0 0.0
    %2765 = vmatprep.subr.mxu0 0.0
    %2766 = vmatpush1.msra.mxu0 0.0
    %2767 = vmatprep.subr.mxu0 0.0
    %2768 = vmatpush1.msra.mxu0 0.0
    %2769 = vmatprep.subr.mxu0 0.0
    %2770 = vmatpush1.msra.mxu0 0.0
    %2771 = vmatprep.subr.mxu0 0.0
    %2772 = vmatpush1.msra.mxu0 0.0
    %2773 = vmatprep.subr.mxu0 0.0
    %2774 = vmatpush1.msra.mxu0 0.0
    %2775 = vmatprep.mubr.f32.mxu0 0.0
    %2776 = vmatmul.mubr.f32.gmra.mrb[0].mxu0 %v2709
    %v2777 = vpop.f32.mrb[0].mxu0
    %v2778 = vadd.f32 0.0, %v2777
    %v2779 = vpop.f32.mrb[0].mxu0
    %2780 = vdwg.mxu0
    %2782 = vrot.lane.b32.xlu0 %v2778, 32
    %v2783 = vpop.permute.xlu0 %2782
    %v2785 = vadd.f32 %v2551, %v2783
    %v2786 = vtanh.pop %v2785
    %2788 = vrot.lane.b32.xlu0 %v2786, 96
    %v2789 = vpop.permute.xlu0 %2788
    %v2790 = vsel %vm224, %v2789, 0
    %2792 = vmatprep.subr.mxu0 0.0
    %2793 = vmatpush1.msra.mxu0 %v44
    %2794 = vmatprep.subr.mxu0 0.0
    %2795 = vmatpush1.msra.mxu0 %v45
    %2796 = vmatprep.subr.mxu0 0.0
    %2797 = vmatpush1.msra.mxu0 %v46
    %2798 = vmatprep.subr.mxu0 0.0
    %2799 = vmatpush1.msra.mxu0 %v47
    %2800 = vmatprep.subr.mxu0 0.0
    %2801 = vmatpush1.msra.mxu0 0.0
    %2802 = vmatprep.subr.mxu0 0.0
    %2803 = vmatpush1.msra.mxu0 0.0
    %2804 = vmatprep.subr.mxu0 0.0
    %2805 = vmatpush1.msra.mxu0 0.0
    %2806 = vmatprep.subr.mxu0 0.0
    %2807 = vmatpush1.msra.mxu0 0.0
    %2808 = vmatprep.subr.mxu0 0.0
    %2809 = vmatpush1.msra.mxu0 0.0
    %2810 = vmatprep.subr.mxu0 0.0
    %2811 = vmatpush1.msra.mxu0 0.0
    %2812 = vmatprep.subr.mxu0 0.0
    %2813 = vmatpush1.msra.mxu0 0.0
    %2814 = vmatprep.subr.mxu0 0.0
    %2815 = vmatpush1.msra.mxu0 0.0
    %2816 = vmatprep.subr.mxu0 0.0
    %2817 = vmatpush1.msra.mxu0 0.0
    %2818 = vmatprep.subr.mxu0 0.0
    %2819 = vmatpush1.msra.mxu0 0.0
    %2820 = vmatprep.subr.mxu0 0.0
    %2821 = vmatpush1.msra.mxu0 0.0
    %2822 = vmatprep.subr.mxu0 0.0
    %2823 = vmatpush1.msra.mxu0 0.0
    %2824 = vmatprep.subr.mxu0 0.0
    %2825 = vmatpush1.msra.mxu0 0.0
    %2826 = vmatprep.subr.mxu0 0.0
    %2827 = vmatpush1.msra.mxu0 0.0
    %2828 = vmatprep.subr.mxu0 0.0
    %2829 = vmatpush1.msra.mxu0 0.0
    %2830 = vmatprep.subr.mxu0 0.0
    %2831 = vmatpush1.msra.mxu0 0.0
    %2832 = vmatprep.subr.mxu0 0.0
    %2833 = vmatpush1.msra.mxu0 0.0
    %2834 = vmatprep.subr.mxu0 0.0
    %2835 = vmatpush1.msra.mxu0 0.0
    %2836 = vmatprep.subr.mxu0 0.0
    %2837 = vmatpush1.msra.mxu0 0.0
    %2838 = vmatprep.subr.mxu0 0.0
    %2839 = vmatpush1.msra.mxu0 0.0
    %2840 = vmatprep.subr.mxu0 0.0
    %2841 = vmatpush1.msra.mxu0 0.0
    %2842 = vmatprep.subr.mxu0 0.0
    %2843 = vmatpush1.msra.mxu0 0.0
    %2844 = vmatprep.subr.mxu0 0.0
    %2845 = vmatpush1.msra.mxu0 0.0
    %2846 = vmatprep.subr.mxu0 0.0
    %2847 = vmatpush1.msra.mxu0 0.0
    %2848 = vmatprep.subr.mxu0 0.0
    %2849 = vmatpush1.msra.mxu0 0.0
    %2850 = vmatprep.subr.mxu0 0.0
    %2851 = vmatpush1.msra.mxu0 0.0
    %2852 = vmatprep.subr.mxu0 0.0
    %2853 = vmatpush1.msra.mxu0 0.0
    %2854 = vmatprep.subr.mxu0 0.0
    %2855 = vmatpush1.msra.mxu0 0.0
    %2856 = vmatprep.mubr.f32.mxu0 0.0
    %2857 = vmatmul.mubr.f32.gmra.mrb[0].mxu0 %v2790
    %v2858 = vpop.f32.mrb[0].mxu0
    %v2859 = vadd.f32 0.0, %v2858
    %v2860 = vpop.f32.mrb[0].mxu0
    %2861 = vdwg.mxu0
    %v2862 = vadd.f32 %v2475, %v2859
    %v2863 = vadd.f32 %v2862, %v62
    %2865 = vrot.lane.b32.xlu0 %v2863, 28
    %v2866 = vpop.permute.xlu0 %2865
    %vm2868 = vcmask 255200
    %2869 = vst.msk [vmem:[%s3] sm:$0x3] %vm2868, %v2866
    %v2870 = vsel %vm67, %v2863, 0
    %2872 = vmatprep.subr.mxu0 0.0
    %2873 = vmatpush1.msra.mxu0 %v151
    %2874 = vmatprep.subr.mxu0 0.0
    %2875 = vmatpush1.msra.mxu0 0.0
    %2876 = vmatprep.subr.mxu0 0.0
    %2877 = vmatpush1.msra.mxu0 0.0
    %2878 = vmatprep.subr.mxu0 0.0
    %2879 = vmatpush1.msra.mxu0 0.0
    %2880 = vmatprep.subr.mxu0 0.0
    %2881 = vmatpush1.msra.mxu0 0.0
    %2882 = vmatprep.subr.mxu0 0.0
    %2883 = vmatpush1.msra.mxu0 0.0
    %2884 = vmatprep.subr.mxu0 0.0
    %2885 = vmatpush1.msra.mxu0 0.0
    %2886 = vmatprep.subr.mxu0 0.0
    %2887 = vmatpush1.msra.mxu0 0.0
    %2888 = vmatprep.subr.mxu0 0.0
    %2889 = vmatpush1.msra.mxu0 0.0
    %2890 = vmatprep.subr.mxu0 0.0
    %2891 = vmatpush1.msra.mxu0 0.0
    %2892 = vmatprep.subr.mxu0 0.0
    %2893 = vmatpush1.msra.mxu0 0.0
    %2894 = vmatprep.subr.mxu0 0.0
    %2895 = vmatpush1.msra.mxu0 0.0
    %2896 = vmatprep.subr.mxu0 0.0
    %2897 = vmatpush1.msra.mxu0 0.0
    %2898 = vmatprep.subr.mxu0 0.0
    %2899 = vmatpush1.msra.mxu0 0.0
    %2900 = vmatprep.subr.mxu0 0.0
    %2901 = vmatpush1.msra.mxu0 0.0
    %2902 = vmatprep.subr.mxu0 0.0
    %2903 = vmatpush1.msra.mxu0 0.0
    %2904 = vmatprep.subr.mxu0 0.0
    %2905 = vmatpush1.msra.mxu0 0.0
    %2906 = vmatprep.subr.mxu0 0.0
    %2907 = vmatpush1.msra.mxu0 0.0
    %2908 = vmatprep.subr.mxu0 0.0
    %2909 = vmatpush1.msra.mxu0 0.0
    %2910 = vmatprep.subr.mxu0 0.0
    %2911 = vmatpush1.msra.mxu0 0.0
    %2912 = vmatprep.subr.mxu0 0.0
    %2913 = vmatpush1.msra.mxu0 0.0
    %2914 = vmatprep.subr.mxu0 0.0
    %2915 = vmatpush1.msra.mxu0 0.0
    %2916 = vmatprep.subr.mxu0 0.0
    %2917 = vmatpush1.msra.mxu0 0.0
    %2918 = vmatprep.subr.mxu0 0.0
    %2919 = vmatpush1.msra.mxu0 0.0
    %2920 = vmatprep.subr.mxu0 0.0
    %2921 = vmatpush1.msra.mxu0 0.0
    %2922 = vmatprep.subr.mxu0 0.0
    %2923 = vmatpush1.msra.mxu0 0.0
    %2924 = vmatprep.subr.mxu0 0.0
    %2925 = vmatpush1.msra.mxu0 0.0
    %2926 = vmatprep.subr.mxu0 0.0
    %2927 = vmatpush1.msra.mxu0 0.0
    %2928 = vmatprep.subr.mxu0 0.0
    %2929 = vmatpush1.msra.mxu0 0.0
    %2930 = vmatprep.subr.mxu0 0.0
    %2931 = vmatpush1.msra.mxu0 0.0
    %2932 = vmatprep.subr.mxu0 0.0
    %2933 = vmatpush1.msra.mxu0 0.0
    %2934 = vmatprep.subr.mxu0 0.0
    %2935 = vmatpush1.msra.mxu0 0.0
    %2936 = vmatprep.mubr.f32.mxu0 0.0
    %2937 = vmatmul.mubr.f32.gmra.mrb[0].mxu0 %v2870
    %v2938 = vpop.f32.mrb[0].mxu0
    %v2939 = vadd.f32 %v142, %v2938
    %v2940 = vpop.f32.mrb[0].mxu0
    %2941 = vdwg.mxu0
    %v2942 = vtanh.pop %v2939
    %v2944 = vsel %vm224, %v2942, 0
    %2946 = vmatprep.subr.mxu0 0.0
    %2947 = vmatpush1.msra.mxu0 %v35
    %2948 = vmatprep.subr.mxu0 0.0
    %2949 = vmatpush1.msra.mxu0 %v36
    %2950 = vmatprep.subr.mxu0 0.0
    %2951 = vmatpush1.msra.mxu0 %v37
    %2952 = vmatprep.subr.mxu0 0.0
    %2953 = vmatpush1.msra.mxu0 %v38
    %2954 = vmatprep.subr.mxu0 0.0
    %2955 = vmatpush1.msra.mxu0 0.0
    %2956 = vmatprep.subr.mxu0 0.0
    %2957 = vmatpush1.msra.mxu0 0.0
    %2958 = vmatprep.subr.mxu0 0.0
    %2959 = vmatpush1.msra.mxu0 0.0
    %2960 = vmatprep.subr.mxu0 0.0
    %2961 = vmatpush1.msra.mxu0 0.0
    %2962 = vmatprep.subr.mxu0 0.0
    %2963 = vmatpush1.msra.mxu0 0.0
    %2964 = vmatprep.subr.mxu0 0.0
    %2965 = vmatpush1.msra.mxu0 0.0
    %2966 = vmatprep.subr.mxu0 0.0
    %2967 = vmatpush1.msra.mxu0 0.0
    %2968 = vmatprep.subr.mxu0 0.0
    %2969 = vmatpush1.msra.mxu0 0.0
    %2970 = vmatprep.subr.mxu0 0.0
    %2971 = vmatpush1.msra.mxu0 0.0
    %2972 = vmatprep.subr.mxu0 0.0
    %2973 = vmatpush1.msra.mxu0 0.0
    %2974 = vmatprep.subr.mxu0 0.0
    %2975 = vmatpush1.msra.mxu0 0.0
    %2976 = vmatprep.subr.mxu0 0.0
    %2977 = vmatpush1.msra.mxu0 0.0
    %2978 = vmatprep.subr.mxu0 0.0
    %2979 = vmatpush1.msra.mxu0 0.0
    %2980 = vmatprep.subr.mxu0 0.0
    %2981 = vmatpush1.msra.mxu0 0.0
    %2982 = vmatprep.subr.mxu0 0.0
    %2983 = vmatpush1.msra.mxu0 0.0
    %2984 = vmatprep.subr.mxu0 0.0
    %2985 = vmatpush1.msra.mxu0 0.0
    %2986 = vmatprep.subr.mxu0 0.0
    %2987 = vmatpush1.msra.mxu0 0.0
    %2988 = vmatprep.subr.mxu0 0.0
    %2989 = vmatpush1.msra.mxu0 0.0
    %2990 = vmatprep.subr.mxu0 0.0
    %2991 = vmatpush1.msra.mxu0 0.0
    %2992 = vmatprep.subr.mxu0 0.0
    %2993 = vmatpush1.msra.mxu0 0.0
    %2994 = vmatprep.subr.mxu0 0.0
    %2995 = vmatpush1.msra.mxu0 0.0
    %2996 = vmatprep.subr.mxu0 0.0
    %2997 = vmatpush1.msra.mxu0 0.0
    %2998 = vmatprep.subr.mxu0 0.0
    %2999 = vmatpush1.msra.mxu0 0.0
    %3000 = vmatprep.subr.mxu0 0.0
    %3001 = vmatpush1.msra.mxu0 0.0
    %3002 = vmatprep.subr.mxu0 0.0
    %3003 = vmatpush1.msra.mxu0 0.0
    %3004 = vmatprep.subr.mxu0 0.0
    %3005 = vmatpush1.msra.mxu0 0.0
    %3006 = vmatprep.subr.mxu0 0.0
    %3007 = vmatpush1.msra.mxu0 0.0
    %3008 = vmatprep.subr.mxu0 0.0
    %3009 = vmatpush1.msra.mxu0 0.0
    %3010 = vmatprep.mubr.f32.mxu0 0.0
    %3011 = vmatmul.mubr.f32.gmra.mrb[0].mxu0 %v2944
    %v3012 = vpop.f32.mrb[0].mxu0
    %v3013 = vadd.f32 %v52, %v3012
    %v3014 = vpop.f32.mrb[0].mxu0
    %3015 = vdwg.mxu0
    %v3016 = vtanh.pop %v3013
    %v3018 = vsel %vm224, %v3016, 0
    %3020 = vmatprep.subr.mxu0 0.0
    %3021 = vmatpush1.msra.mxu0 %v39
    %3022 = vmatprep.subr.mxu0 0.0
    %3023 = vmatpush1.msra.mxu0 %v40
    %3024 = vmatprep.subr.mxu0 0.0
    %3025 = vmatpush1.msra.mxu0 %v41
    %3026 = vmatprep.subr.mxu0 0.0
    %3027 = vmatpush1.msra.mxu0 %v42
    %3028 = vmatprep.subr.mxu0 0.0
    %3029 = vmatpush1.msra.mxu0 0.0
    %3030 = vmatprep.subr.mxu0 0.0
    %3031 = vmatpush1.msra.mxu0 0.0
    %3032 = vmatprep.subr.mxu0 0.0
    %3033 = vmatpush1.msra.mxu0 0.0
    %3034 = vmatprep.subr.mxu0 0.0
    %3035 = vmatpush1.msra.mxu0 0.0
    %3036 = vmatprep.subr.mxu0 0.0
    %3037 = vmatpush1.msra.mxu0 0.0
    %3038 = vmatprep.subr.mxu0 0.0
    %3039 = vmatpush1.msra.mxu0 0.0
    %3040 = vmatprep.subr.mxu0 0.0
    %3041 = vmatpush1.msra.mxu0 0.0
    %3042 = vmatprep.subr.mxu0 0.0
    %3043 = vmatpush1.msra.mxu0 0.0
    %3044 = vmatprep.subr.mxu0 0.0
    %3045 = vmatpush1.msra.mxu0 0.0
    %3046 = vmatprep.subr.mxu0 0.0
    %3047 = vmatpush1.msra.mxu0 0.0
    %3048 = vmatprep.subr.mxu0 0.0
    %3049 = vmatpush1.msra.mxu0 0.0
    %3050 = vmatprep.subr.mxu0 0.0
    %3051 = vmatpush1.msra.mxu0 0.0
    %3052 = vmatprep.subr.mxu0 0.0
    %3053 = vmatpush1.msra.mxu0 0.0
    %3054 = vmatprep.subr.mxu0 0.0
    %3055 = vmatpush1.msra.mxu0 0.0
    %3056 = vmatprep.subr.mxu0 0.0
    %3057 = vmatpush1.msra.mxu0 0.0
    %3058 = vmatprep.subr.mxu0 0.0
    %3059 = vmatpush1.msra.mxu0 0.0
    %3060 = vmatprep.subr.mxu0 0.0
    %3061 = vmatpush1.msra.mxu0 0.0
    %3062 = vmatprep.subr.mxu0 0.0
    %3063 = vmatpush1.msra.mxu0 0.0
    %3064 = vmatprep.subr.mxu0 0.0
    %3065 = vmatpush1.msra.mxu0 0.0
    %3066 = vmatprep.subr.mxu0 0.0
    %3067 = vmatpush1.msra.mxu0 0.0
    %3068 = vmatprep.subr.mxu0 0.0
    %3069 = vmatpush1.msra.mxu0 0.0
    %3070 = vmatprep.subr.mxu0 0.0
    %3071 = vmatpush1.msra.mxu0 0.0
    %3072 = vmatprep.subr.mxu0 0.0
    %3073 = vmatpush1.msra.mxu0 0.0
    %3074 = vmatprep.subr.mxu0 0.0
    %3075 = vmatpush1.msra.mxu0 0.0
    %3076 = vmatprep.subr.mxu0 0.0
    %3077 = vmatpush1.msra.mxu0 0.0
    %3078 = vmatprep.subr.mxu0 0.0
    %3079 = vmatpush1.msra.mxu0 0.0
    %3080 = vmatprep.subr.mxu0 0.0
    %3081 = vmatpush1.msra.mxu0 0.0
    %3082 = vmatprep.subr.mxu0 0.0
    %3083 = vmatpush1.msra.mxu0 0.0
    %3084 = vmatprep.mubr.f32.mxu0 0.0
    %3085 = vmatmul.mubr.f32.gmra.mrb[0].mxu0 %v3018
    %v3086 = vpop.f32.mrb[0].mxu0
    %v3087 = vadd.f32 %v57, %v3086
    %v3088 = vpop.f32.mrb[0].mxu0
    %3089 = vdwg.mxu0
    %v3090 = vtanh.pop %v3087
    %3092 = vrot.lane.b32.xlu0 %v3090, 14
    %v3093 = vpop.permute.xlu0 %3092
    %vm3095 = vcmask 124016
    %3096 = vst.msk [vmem:[%s4] sm:$0x3] %vm3095, %v3093
    %v3097 = vsel %vm375, %v3090, 0
    %3099 = vmatprep.subr.mxu0 0.0
    %3100 = vmatpush1.msra.mxu0 %v381
    %3101 = vmatprep.subr.mxu0 0.0
    %3102 = vmatpush1.msra.mxu0 0.0
    %3103 = vmatprep.subr.mxu0 0.0
    %3104 = vmatpush1.msra.mxu0 0.0
    %3105 = vmatprep.subr.mxu0 0.0
    %3106 = vmatpush1.msra.mxu0 0.0
    %3107 = vmatprep.subr.mxu0 0.0
    %3108 = vmatpush1.msra.mxu0 0.0
    %3109 = vmatprep.subr.mxu0 0.0
    %3110 = vmatpush1.msra.mxu0 0.0
    %3111 = vmatprep.subr.mxu0 0.0
    %3112 = vmatpush1.msra.mxu0 0.0
    %3113 = vmatprep.subr.mxu0 0.0
    %3114 = vmatpush1.msra.mxu0 0.0
    %3115 = vmatprep.subr.mxu0 0.0
    %3116 = vmatpush1.msra.mxu0 0.0
    %3117 = vmatprep.subr.mxu0 0.0
    %3118 = vmatpush1.msra.mxu0 0.0
    %3119 = vmatprep.subr.mxu0 0.0
    %3120 = vmatpush1.msra.mxu0 0.0
    %3121 = vmatprep.subr.mxu0 0.0
    %3122 = vmatpush1.msra.mxu0 0.0
    %3123 = vmatprep.subr.mxu0 0.0
    %3124 = vmatpush1.msra.mxu0 0.0
    %3125 = vmatprep.subr.mxu0 0.0
    %3126 = vmatpush1.msra.mxu0 0.0
    %3127 = vmatprep.subr.mxu0 0.0
    %3128 = vmatpush1.msra.mxu0 0.0
    %3129 = vmatprep.subr.mxu0 0.0
    %3130 = vmatpush1.msra.mxu0 0.0
    %3131 = vmatprep.subr.mxu0 0.0
    %3132 = vmatpush1.msra.mxu0 0.0
    %3133 = vmatprep.subr.mxu0 0.0
    %3134 = vmatpush1.msra.mxu0 0.0
    %3135 = vmatprep.subr.mxu0 0.0
    %3136 = vmatpush1.msra.mxu0 0.0
    %3137 = vmatprep.subr.mxu0 0.0
    %3138 = vmatpush1.msra.mxu0 0.0
    %3139 = vmatprep.subr.mxu0 0.0
    %3140 = vmatpush1.msra.mxu0 0.0
    %3141 = vmatprep.subr.mxu0 0.0
    %3142 = vmatpush1.msra.mxu0 0.0
    %3143 = vmatprep.subr.mxu0 0.0
    %3144 = vmatpush1.msra.mxu0 0.0
    %3145 = vmatprep.subr.mxu0 0.0
    %3146 = vmatpush1.msra.mxu0 0.0
    %3147 = vmatprep.subr.mxu0 0.0
    %3148 = vmatpush1.msra.mxu0 0.0
    %3149 = vmatprep.subr.mxu0 0.0
    %3150 = vmatpush1.msra.mxu0 0.0
    %3151 = vmatprep.subr.mxu0 0.0
    %3152 = vmatpush1.msra.mxu0 0.0
    %3153 = vmatprep.subr.mxu0 0.0
    %3154 = vmatpush1.msra.mxu0 0.0
    %3155 = vmatprep.subr.mxu0 0.0
    %3156 = vmatpush1.msra.mxu0 0.0
    %3157 = vmatprep.subr.mxu0 0.0
    %3158 = vmatpush1.msra.mxu0 0.0
    %3159 = vmatprep.subr.mxu0 0.0
    %3160 = vmatpush1.msra.mxu0 0.0
    %3161 = vmatprep.subr.mxu0 0.0
    %3162 = vmatpush1.msra.mxu0 0.0
    %3163 = vmatprep.mubr.f32.mxu0 0.0
    %3164 = vmatmul.mubr.f32.gmra.mrb[0].mxu0 %v3097
    %v3165 = vpop.f32.mrb[0].mxu0
    %v3166 = vadd.f32 0.0, %v3165
    %v3167 = vpop.f32.mrb[0].mxu0
    %3168 = vdwg.mxu0
    %3170 = vrot.lane.b32.xlu0 %v3166, 32
    %v3171 = vpop.permute.xlu0 %3170
    %v3173 = vadd.f32 %v2939, %v3171
    %v3174 = vtanh.pop %v3173
    %3176 = vrot.lane.b32.xlu0 %v3174, 96
    %v3177 = vpop.permute.xlu0 %3176
    %v3178 = vsel %vm224, %v3177, 0
    %3180 = vmatprep.subr.mxu0 0.0
    %3181 = vmatpush1.msra.mxu0 %v44
    %3182 = vmatprep.subr.mxu0 0.0
    %3183 = vmatpush1.msra.mxu0 %v45
    %3184 = vmatprep.subr.mxu0 0.0
    %3185 = vmatpush1.msra.mxu0 %v46
    %3186 = vmatprep.subr.mxu0 0.0
    %3187 = vmatpush1.msra.mxu0 %v47
    %3188 = vmatprep.subr.mxu0 0.0
    %3189 = vmatpush1.msra.mxu0 0.0
    %3190 = vmatprep.subr.mxu0 0.0
    %3191 = vmatpush1.msra.mxu0 0.0
    %3192 = vmatprep.subr.mxu0 0.0
    %3193 = vmatpush1.msra.mxu0 0.0
    %3194 = vmatprep.subr.mxu0 0.0
    %3195 = vmatpush1.msra.mxu0 0.0
    %3196 = vmatprep.subr.mxu0 0.0
    %3197 = vmatpush1.msra.mxu0 0.0
    %3198 = vmatprep.subr.mxu0 0.0
    %3199 = vmatpush1.msra.mxu0 0.0
    %3200 = vmatprep.subr.mxu0 0.0
    %3201 = vmatpush1.msra.mxu0 0.0
    %3202 = vmatprep.subr.mxu0 0.0
    %3203 = vmatpush1.msra.mxu0 0.0
    %3204 = vmatprep.subr.mxu0 0.0
    %3205 = vmatpush1.msra.mxu0 0.0
    %3206 = vmatprep.subr.mxu0 0.0
    %3207 = vmatpush1.msra.mxu0 0.0
    %3208 = vmatprep.subr.mxu0 0.0
    %3209 = vmatpush1.msra.mxu0 0.0
    %3210 = vmatprep.subr.mxu0 0.0
    %3211 = vmatpush1.msra.mxu0 0.0
    %3212 = vmatprep.subr.mxu0 0.0
    %3213 = vmatpush1.msra.mxu0 0.0
    %3214 = vmatprep.subr.mxu0 0.0
    %3215 = vmatpush1.msra.mxu0 0.0
    %3216 = vmatprep.subr.mxu0 0.0
    %3217 = vmatpush1.msra.mxu0 0.0
    %3218 = vmatprep.subr.mxu0 0.0
    %3219 = vmatpush1.msra.mxu0 0.0
    %3220 = vmatprep.subr.mxu0 0.0
    %3221 = vmatpush1.msra.mxu0 0.0
    %3222 = vmatprep.subr.mxu0 0.0
    %3223 = vmatpush1.msra.mxu0 0.0
    %3224 = vmatprep.subr.mxu0 0.0
    %3225 = vmatpush1.msra.mxu0 0.0
    %3226 = vmatprep.subr.mxu0 0.0
    %3227 = vmatpush1.msra.mxu0 0.0
    %3228 = vmatprep.subr.mxu0 0.0
    %3229 = vmatpush1.msra.mxu0 0.0
    %3230 = vmatprep.subr.mxu0 0.0
    %3231 = vmatpush1.msra.mxu0 0.0
    %3232 = vmatprep.subr.mxu0 0.0
    %3233 = vmatpush1.msra.mxu0 0.0
    %3234 = vmatprep.subr.mxu0 0.0
    %3235 = vmatpush1.msra.mxu0 0.0
    %3236 = vmatprep.subr.mxu0 0.0
    %3237 = vmatpush1.msra.mxu0 0.0
    %3238 = vmatprep.subr.mxu0 0.0
    %3239 = vmatpush1.msra.mxu0 0.0
    %3240 = vmatprep.subr.mxu0 0.0
    %3241 = vmatpush1.msra.mxu0 0.0
    %3242 = vmatprep.subr.mxu0 0.0
    %3243 = vmatpush1.msra.mxu0 0.0
    %3244 = vmatprep.mubr.f32.mxu0 0.0
    %3245 = vmatmul.mubr.f32.gmra.mrb[0].mxu0 %v3178
    %v3246 = vpop.f32.mrb[0].mxu0
    %v3247 = vadd.f32 0.0, %v3246
    %v3248 = vpop.f32.mrb[0].mxu0
    %3249 = vdwg.mxu0
    %v3250 = vadd.f32 %v2863, %v3247
    %v3251 = vadd.f32 %v3250, %v62
    %3253 = vrot.lane.b32.xlu0 %v3251, 32
    %v3254 = vpop.permute.xlu0 %3253
    %vm3256 = vcmask 288000
    %3257 = vst.msk [vmem:[%s3] sm:$0x3] %vm3256, %v3254
    // Predicated region
    $region18: #{_lambda_.1} parent=1 // pred_check
      _
    $region19: #{_lambda_.1} parent=1 // pred_check_branch
      %3259 = sbr.rel (0) target = $region21
    $region20: #{_lambda_.1} parent=1 // pred_region
      _
    $region21: #{_lambda_.1} parent=1 // pred_fallthru
      _
    // Predicated region
    $region22: #{_lambda_.1} parent=1 // pred_check
      _
    $region23: #{_lambda_.1} parent=1 // pred_check_branch
      %3261 = sbr.rel (0) target = $region25
    $region24: #{_lambda_.1} parent=1 // pred_region
      _
    $region25: #{_lambda_.1} parent=1 // pred_fallthru
      _
    // Predicated region
    $region26: #{_lambda_.1} parent=1 // pred_check
      _
    $region27: #{_lambda_.1} parent=1 // pred_check_branch
      %3263 = sbr.rel (0) target = $region29
    $region28: #{_lambda_.1} parent=1 // pred_region
      _
    $region29: #{_lambda_.1} parent=1 // pred_fallthru
      _
    // Predicated region
    $region30: #{_lambda_.1} parent=1 // pred_check
      _
    $region31: #{_lambda_.1} parent=1 // pred_check_branch
      %3265 = sbr.rel (0) target = $region33
    $region32: #{_lambda_.1} parent=1 // pred_region
      _
    $region33: #{_lambda_.1} parent=1 // pred_fallthru
      _
    %3266 = vsyncpa [#allocation3], 1

</llo_original>
